<compile_context>
chip_gen: v6e
topology: v6e:2x2x1
jax: 0.10.0
libtpu: 0.0.40
codegen_flags: <defaults>
</compile_context>

<pallas_src>
import functools

import jax
import jax.numpy as jnp
from jax.experimental import pallas as pl
from jax.experimental.pallas import tpu as pltpu


_H_IN = 4        # required input spatial size (see note above)
_K = 2           # conv kernel size
_C1 = 144        # conv1 out channels
_C2 = 288        # conv2 out channels
_C3 = 432        # conv3 out channels (real)
_C3P = 512       # conv3 out channels zero-padded to a lane multiple
_FC1 = 512       # fc1 out features


# -----------------------------------------------------------------------------
# Fused forward kernel: conv1 -> conv2 -> conv3 -> fc1 -> (dropout) -> fc2
# -----------------------------------------------------------------------------
def _critic_kernel(
    x_ref,                         # [9B, 4*C_in] f32  host-side im2col rows (p1*B + b)
    w1_ref, b1_ref,                # [4*C_in, 144] bf16, [1, 144] f32
    w2_ref, b2_ref,                # [576, 288] bf16,    [1, 288] f32
    w3_ref, b3_ref,                # [4, 288, 512] bf16, [1, 512] f32 (padded)
    wf1_ref, bf1_ref,              # [512, 512] bf16,    [1, 512] f32 (K padded)
    wf2_ref, bf2_ref,              # [1, 512] f32,       [1, 1] f32
    o_ref,                         # [B, 1] f32
    g2_ref,                        # scratch [4B, 4*144] f32 (conv2 im2col)
    *, batch,
):
    f32 = jnp.float32
    bf16 = jnp.bfloat16

    # ---- conv1 + ReLU: ONE MXU matmul over host-gathered taps -> [9B, 144].
    y1 = jnp.maximum(
        jnp.dot(x_ref[...].astype(bf16), w1_ref[...],
                preferred_element_type=f32) + b1_ref[...], 0.0)

    # ---- conv2 im2col: gather all 4 taps once into one [4B, 576] buffer.
    # y1 rows are (3x3 spatial position)-major, batch-minor, so each
    # (tap, output-row-pair) is a contiguous 2B-row block of the y1 VALUE:
    # 2 block stores per tap, 8 total, instead of per-(b,oh,tap) scatters.
    for kh in range(_K):
        for kw in range(_K):
            tap = kh * _K + kw
            base = kh * 3 + kw
            # output positions (0,0),(0,1)  <- input spatial rows base, base+1
            g2_ref[pl.ds(0, 2 * batch), pl.ds(tap * _C1, _C1)] = \
                y1[base * batch:(base + 2) * batch, :]
            # output positions (1,0),(1,1)  <- input spatial rows base+3, base+4
            g2_ref[pl.ds(2 * batch, 2 * batch), pl.ds(tap * _C1, _C1)] = \
                y1[(base + 3) * batch:(base + 5) * batch, :]

    # ---- conv2 + ReLU: ONE MXU matmul [4B, 576] x [576, 288].
    y2 = jnp.maximum(
        jnp.dot(g2_ref[...].astype(bf16), w2_ref[...],
                preferred_element_type=f32) + b2_ref[...], 0.0)

    # ---- conv3 + ReLU: spatial output is 1x1, so tap t's LHS is exactly the
    # contiguous B-row block t of the y2 VALUE (no scratch bounce).  Output
    # channels zero-padded to 512 -> lane-dense result.
    acc = jnp.zeros((batch, _C3P), f32)
    for t in range(_K * _K):
        acc = acc + jnp.dot(y2[t * batch:(t + 1) * batch, :].astype(bf16),
                            w3_ref[t], preferred_element_type=f32)
    y3 = jnp.maximum(acc + b3_ref[...], 0.0)     # [B, 512]; cols 432.. are 0

    # ---- fc1 + ReLU (K zero-padded 432 -> 512; equals torch x.view(B,-1)@W.T).
    hid = jnp.maximum(
        jnp.dot(y3.astype(bf16), wf1_ref[...],
                preferred_element_type=f32) + bf1_ref[...], 0.0)

    # TODO(synk): nn.Dropout(0.2) after fc1 — identity in eval/inference mode
    # (training parity would need pltpu.prng_seed / prng_random_bits masking).

    # ---- fc2 (out_features = 1): f32 VPU multiply + lane (XLU) reduction.
    val = jnp.sum(hid * wf2_ref[...], axis=1, keepdims=True) + bf2_ref[...]
    o_ref[...] = val.astype(o_ref.dtype)


# -----------------------------------------------------------------------------
# Host-side wrapper
# -----------------------------------------------------------------------------
def critic_forward(params, x_nchw):
    """Fused Critic forward. `params` must come from `prepare_params`."""
    batch, c_in, h, w = x_nchw.shape
    if (h, w) != (_H_IN, _H_IN):
        raise ValueError(
            f"Critic requires {_H_IN}x{_H_IN} spatial input (fc1 expects 432 "
            f"features after three k=2/s=1 convs); got {h}x{w}.")

    # conv1 im2col on the host (input is ~512 B): rows ordered
    # (3x3 spatial position)-major, batch-minor; columns tap-major.
    x_nhwc = jnp.transpose(x_nchw, (0, 2, 3, 1))              # [B, 4, 4, C]
    taps = []
    for kh in range(_K):
        for kw in range(_K):
            taps.append(x_nhwc[:, kh:kh + 3, kw:kw + 3, :]
                        .reshape(batch, 9, 1, c_in))
    x_cols = jnp.concatenate(taps, axis=2)                     # [B, 9, 4, C]
    x_cols = jnp.transpose(x_cols, (1, 0, 2, 3)).reshape(9 * batch, 4 * c_in)

    operands = (
        x_cols,
        params["conv1_w"], params["conv1_b"],
        params["conv2_w"], params["conv2_b"],
        params["conv3_w"], params["conv3_b"],
        params["fc1_w"], params["fc1_b"],
        params["fc2_w"], params["fc2_b"],
    )

    # Advisory cost hint: tiny FLOPs, dominated by the bf16 weight DMA.
    flops = 2 * (9 * batch * 4 * c_in * _C1
                 + 4 * batch * 4 * _C1 * _C2
                 + batch * 4 * _C2 * _C3P
                 + batch * _C3P * _FC1
                 + batch * _FC1)
    bytes_accessed = sum(int(a.size) * a.dtype.itemsize for a in operands) \
        + batch * 4
    cost = pl.CostEstimate(flops=flops, transcendentals=0,
                           bytes_accessed=bytes_accessed)

    return pl.pallas_call(
        functools.partial(_critic_kernel, batch=batch),
        out_shape=jax.ShapeDtypeStruct((batch, 1), jnp.float32),
        scratch_shapes=[
            pltpu.VMEM((4 * batch, 4 * _C1), jnp.float32),  # conv2 im2col LHS
        ],
        cost_estimate=cost,
    )(*operands)


# -----------------------------------------------------------------------------
# Parameters: synthetic init in PyTorch layouts + one-time kernel-layout prep
# -----------------------------------------------------------------------------
def init_params(input_channels, key):
    """Synthetic params in PyTorch layouts: conv [OC,IC,2,2], linear [out,in]."""
    ks = jax.random.split(key, 10)

    def u(k, shape, fan_in):
        bound = 1.0 / jnp.sqrt(fan_in)
        return jax.random.uniform(k, shape, jnp.float32, -bound, bound)

    return {
        "conv1_w": u(ks[0], (_C1, input_channels, 2, 2), input_channels * 4),
        "conv1_b": u(ks[1], (_C1,), input_channels * 4),
        "conv2_w": u(ks[2], (_C2, _C1, 2, 2), _C1 * 4),
        "conv2_b": u(ks[3], (_C2,), _C1 * 4),
        "conv3_w": u(ks[4], (_C3, _C2, 2, 2), _C2 * 4),
        "conv3_b": u(ks[5], (_C3,), _C2 * 4),
        "fc1_w": u(ks[6], (_FC1, _C3), _C3),   # PyTorch nn.Linear: [out, in]
        "fc1_b": u(ks[7], (_FC1,), _C3),
        "fc2_w": u(ks[8], (1, _FC1), _FC1),
        "fc2_b": u(ks[9], (1,), _FC1),
    }


def prepare_params(torch_params):
    """One-time conversion: PyTorch layouts -> fused-kernel layouts.

    Conv weights become concatenated-tap [4*IC, OC] matrices (bf16); conv3's
    OC and fc1's K are zero-padded 432 -> 512; biases stay f32 row vectors.
    """
    bf16 = jnp.bfloat16

    def conv_cat(w):   # [OC, IC, 2, 2] -> [4*IC, OC], row = (kh*2+kw)*IC + ic
        oc, ic, khs, kws = w.shape
        return jnp.transpose(w, (2, 3, 1, 0)).reshape(khs * kws * ic, oc)

    def row(b):        # [N] -> [1, N] f32
        return b.reshape(1, -1).astype(jnp.float32)

    # conv3: concatenated taps kept per-tap ([4, 288, 512]) so the kernel can
    # dot each contiguous B-row block of conv2's output; OC padded to 512.
    w3 = jnp.transpose(torch_params["conv3_w"], (2, 3, 1, 0)).reshape(4, _C2, _C3)
    w3 = jnp.pad(w3, ((0, 0), (0, 0), (0, _C3P - _C3)))
    b3 = jnp.pad(torch_params["conv3_b"], (0, _C3P - _C3))

    # fc1: [out, in] -> [in, out], zero-pad K 432 -> 512 (matches padded y3).
    wf1 = jnp.pad(torch_params["fc1_w"].T, ((0, _C3P - _C3), (0, 0)))

    return {
        "conv1_w": conv_cat(torch_params["conv1_w"]).astype(bf16),
        "conv1_b": row(torch_params["conv1_b"]),
        "conv2_w": conv_cat(torch_params["conv2_w"]).astype(bf16),
        "conv2_b": row(torch_params["conv2_b"]),
        "conv3_w": w3.astype(bf16),
        "conv3_b": row(b3),
        "fc1_w": wf1.astype(bf16),
        "fc1_b": row(torch_params["fc1_b"]),
        "fc2_w": torch_params["fc2_w"].astype(jnp.float32),   # stays f32 (VPU)
        "fc2_b": row(torch_params["fc2_b"]),
    }


# -----------------------------------------------------------------------------
# Pure-JAX reference (PyTorch semantics, eval mode) for correctness checking
# -----------------------------------------------------------------------------
def critic_reference(torch_params, x_nchw):
    hi = jax.lax.Precision.HIGHEST

    def conv(x, w, b):
        y = jax.lax.conv_general_dilated(
            x, w, window_strides=(1, 1), padding="VALID",
            dimension_numbers=("NCHW", "OIHW", "NCHW"), precision=hi)
        return jax.nn.relu(y + b[None, :, None, None])

    x = conv(x_nchw, torch_params["conv1_w"], torch_params["conv1_b"])
    x = conv(x, torch_params["conv2_w"], torch_params["conv2_b"])
    x = conv(x, torch_params["conv3_w"], torch_params["conv3_b"])
    x = x.reshape(x.shape[0], -1)
    x = jax.nn.relu(jnp.dot(x, torch_params["fc1_w"].T, precision=hi)
                    + torch_params["fc1_b"])
    return jnp.dot(x, torch_params["fc2_w"].T, precision=hi) + torch_params["fc2_b"]


if __name__ == "__main__":
    key = jax.random.PRNGKey(0)
    k_param, k_x = jax.random.split(key)

    # state_size = (4, 4, 4): 4 input channels, 4x4 spatial (required so three
    # k=2/s=1 convs reduce the spatial dims to 1x1 and the flatten gives 432).
    B, C, H, W = 2, 4, 4, 4
    x = jax.random.normal(k_x, (B, C, H, W), dtype=jnp.float32)

    torch_params = init_params(C, k_param)
    params = prepare_params(torch_params)

    fwd = jax.jit(critic_forward)
    value = jax.block_until_ready(fwd(params, x))

    assert value.shape == (B, 1), value.shape
    assert value.dtype == jnp.float32

    # Tolerance covers bf16 weight/activation rounding vs. the f32 HIGHEST
    # reference (estimated |err| ~ 5e-3 here).
    ref = critic_reference(torch_params, x)
    if not bool(jnp.allclose(value, ref, atol=3e-2, rtol=3e-2)):
        raise AssertionError(f"kernel/reference mismatch:\n{value}\nvs\n{ref}")

    print("KERNEL_OK")
</pallas_src>

<mosaic_0001>
module attributes {stable_mosaic.version = 11 : i64} {
  func.func @_critic_kernel(%arg0: memref<18x16xf32, #tpu.memory_space<vmem>>, %arg1: memref<16x144xbf16, #tpu.memory_space<vmem>>, %arg2: memref<1x144xf32, #tpu.memory_space<vmem>>, %arg3: memref<576x288xbf16, #tpu.memory_space<vmem>>, %arg4: memref<1x288xf32, #tpu.memory_space<vmem>>, %arg5: memref<4x288x512xbf16, #tpu.memory_space<vmem>>, %arg6: memref<1x512xf32, #tpu.memory_space<vmem>>, %arg7: memref<512x512xbf16, #tpu.memory_space<vmem>>, %arg8: memref<1x512xf32, #tpu.memory_space<vmem>>, %arg9: memref<1x512xf32, #tpu.memory_space<vmem>>, %arg10: memref<1x1xf32, #tpu.memory_space<vmem>>, %arg11: memref<2x1xf32, #tpu.memory_space<vmem>>, %arg12: memref<8x576xf32, #tpu.memory_space<vmem>>) attributes {dimension_semantics = [], scalar_prefetch = 0 : i64, scratch_operands = 1 : i64, tpu.core_type = #tpu.core_type<tc>} {
    %c0 = arith.constant 0 : index
    %c0_0 = arith.constant 0 : index
    %0 = vector.load %arg0[%c0, %c0_0] : memref<18x16xf32, #tpu.memory_space<vmem>>, vector<18x16xf32>
    %1 = arith.truncf %0 : vector<18x16xf32> to vector<18x16xbf16>
    %c0_1 = arith.constant 0 : index
    %c0_2 = arith.constant 0 : index
    %2 = vector.load %arg1[%c0_1, %c0_2] : memref<16x144xbf16, #tpu.memory_space<vmem>>, vector<16x144xbf16>
    %cst = arith.constant dense<0.000000e+00> : vector<18x144xf32>
    %3 = tpu.matmul %1, %2, %cst {dimension_numbers = #tpu.dot_dimension_numbers<[1], [0], [0], [1], [0, 0, 1, 1], [], []>} : vector<18x16xbf16>, vector<16x144xbf16>, vector<18x144xf32> -> vector<18x144xf32>
    %c0_3 = arith.constant 0 : index
    %c0_4 = arith.constant 0 : index
    %4 = vector.load %arg2[%c0_3, %c0_4] : memref<1x144xf32, #tpu.memory_space<vmem>>, vector<1x144xf32>
    %5 = vector.broadcast %4 : vector<1x144xf32> to vector<18x144xf32>
    %6 = arith.addf %3, %5 : vector<18x144xf32>
    %cst_5 = arith.constant 0.000000e+00 : f32
    %7 = vector.broadcast %cst_5 : f32 to vector<18x144xf32>
    %8 = arith.maximumf %6, %7 : vector<18x144xf32>
    %9 = vector.extract_strided_slice %8 {offsets = [0, 0], sizes = [4, 144], strides = [1, 1]} : vector<18x144xf32> to vector<4x144xf32>
    %c0_6 = arith.constant 0 : index
    %c0_7 = arith.constant 0 : index
    %10 = vector.load %arg12[%c0_6, %c0_7] : memref<8x576xf32, #tpu.memory_space<vmem>>, vector<4x144xf32>
    tpu.vector_store %arg12[%c0_6, %c0_7], %9 {strides = array<i32>} : memref<8x576xf32, #tpu.memory_space<vmem>>, vector<4x144xf32>,
    %11 = vector.extract_strided_slice %8 {offsets = [6, 0], sizes = [4, 144], strides = [1, 1]} : vector<18x144xf32> to vector<4x144xf32>
    %c4 = arith.constant 4 : index
    %c0_8 = arith.constant 0 : index
    %12 = vector.load %arg12[%c4, %c0_8] : memref<8x576xf32, #tpu.memory_space<vmem>>, vector<4x144xf32>
    tpu.vector_store %arg12[%c4, %c0_8], %11 {strides = array<i32>} : memref<8x576xf32, #tpu.memory_space<vmem>>, vector<4x144xf32>,
    %13 = vector.extract_strided_slice %8 {offsets = [2, 0], sizes = [4, 144], strides = [1, 1]} : vector<18x144xf32> to vector<4x144xf32>
    %c0_9 = arith.constant 0 : index
    %c144 = arith.constant 144 : index
    %14 = vector.load %arg12[%c0_9, %c144] : memref<8x576xf32, #tpu.memory_space<vmem>>, vector<4x144xf32>
    tpu.vector_store %arg12[%c0_9, %c144], %13 {strides = array<i32>} : memref<8x576xf32, #tpu.memory_space<vmem>>, vector<4x144xf32>,
    %15 = vector.extract_strided_slice %8 {offsets = [8, 0], sizes = [4, 144], strides = [1, 1]} : vector<18x144xf32> to vector<4x144xf32>
    %c4_10 = arith.constant 4 : index
    %c144_11 = arith.constant 144 : index
    %16 = vector.load %arg12[%c4_10, %c144_11] : memref<8x576xf32, #tpu.memory_space<vmem>>, vector<4x144xf32>
    tpu.vector_store %arg12[%c4_10, %c144_11], %15 {strides = array<i32>} : memref<8x576xf32, #tpu.memory_space<vmem>>, vector<4x144xf32>,
    %17 = vector.extract_strided_slice %8 {offsets = [6, 0], sizes = [4, 144], strides = [1, 1]} : vector<18x144xf32> to vector<4x144xf32>
    %c0_12 = arith.constant 0 : index
    %c288 = arith.constant 288 : index
    %18 = vector.load %arg12[%c0_12, %c288] : memref<8x576xf32, #tpu.memory_space<vmem>>, vector<4x144xf32>
    tpu.vector_store %arg12[%c0_12, %c288], %17 {strides = array<i32>} : memref<8x576xf32, #tpu.memory_space<vmem>>, vector<4x144xf32>,
    %19 = vector.extract_strided_slice %8 {offsets = [12, 0], sizes = [4, 144], strides = [1, 1]} : vector<18x144xf32> to vector<4x144xf32>
    %c4_13 = arith.constant 4 : index
    %c288_14 = arith.constant 288 : index
    %20 = vector.load %arg12[%c4_13, %c288_14] : memref<8x576xf32, #tpu.memory_space<vmem>>, vector<4x144xf32>
    tpu.vector_store %arg12[%c4_13, %c288_14], %19 {strides = array<i32>} : memref<8x576xf32, #tpu.memory_space<vmem>>, vector<4x144xf32>,
    %21 = vector.extract_strided_slice %8 {offsets = [8, 0], sizes = [4, 144], strides = [1, 1]} : vector<18x144xf32> to vector<4x144xf32>
    %c0_15 = arith.constant 0 : index
    %c432 = arith.constant 432 : index
    %22 = vector.load %arg12[%c0_15, %c432] : memref<8x576xf32, #tpu.memory_space<vmem>>, vector<4x144xf32>
    tpu.vector_store %arg12[%c0_15, %c432], %21 {strides = array<i32>} : memref<8x576xf32, #tpu.memory_space<vmem>>, vector<4x144xf32>,
    %23 = vector.extract_strided_slice %8 {offsets = [14, 0], sizes = [4, 144], strides = [1, 1]} : vector<18x144xf32> to vector<4x144xf32>
    %c4_16 = arith.constant 4 : index
    %c432_17 = arith.constant 432 : index
    %24 = vector.load %arg12[%c4_16, %c432_17] : memref<8x576xf32, #tpu.memory_space<vmem>>, vector<4x144xf32>
    tpu.vector_store %arg12[%c4_16, %c432_17], %23 {strides = array<i32>} : memref<8x576xf32, #tpu.memory_space<vmem>>, vector<4x144xf32>,
    %c0_18 = arith.constant 0 : index
    %c0_19 = arith.constant 0 : index
    %25 = vector.load %arg12[%c0_18, %c0_19] : memref<8x576xf32, #tpu.memory_space<vmem>>, vector<8x576xf32>
    %26 = arith.truncf %25 : vector<8x576xf32> to vector<8x576xbf16>
    %c0_20 = arith.constant 0 : index
    %c0_21 = arith.constant 0 : index
    %27 = vector.load %arg3[%c0_20, %c0_21] : memref<576x288xbf16, #tpu.memory_space<vmem>>, vector<576x288xbf16>
    %cst_22 = arith.constant dense<0.000000e+00> : vector<8x288xf32>
    %28 = tpu.matmul %26, %27, %cst_22 {dimension_numbers = #tpu.dot_dimension_numbers<[1], [0], [0], [1], [0, 0, 1, 1], [], []>} : vector<8x576xbf16>, vector<576x288xbf16>, vector<8x288xf32> -> vector<8x288xf32>
    %c0_23 = arith.constant 0 : index
    %c0_24 = arith.constant 0 : index
    %29 = vector.load %arg4[%c0_23, %c0_24] : memref<1x288xf32, #tpu.memory_space<vmem>>, vector<1x288xf32>
    %30 = vector.broadcast %29 : vector<1x288xf32> to vector<8x288xf32>
    %31 = arith.addf %28, %30 : vector<8x288xf32>
    %cst_25 = arith.constant 0.000000e+00 : f32
    %32 = vector.broadcast %cst_25 : f32 to vector<8x288xf32>
    %33 = arith.maximumf %31, %32 : vector<8x288xf32>
    %cst_26 = arith.constant 0.000000e+00 : f32
    %34 = vector.broadcast %cst_26 : f32 to vector<2x512xf32>
    %35 = vector.extract_strided_slice %33 {offsets = [0, 0], sizes = [2, 288], strides = [1, 1]} : vector<8x288xf32> to vector<2x288xf32>
    %36 = arith.truncf %35 : vector<2x288xf32> to vector<2x288xbf16>
    %c0_27 = arith.constant 0 : index
    %c0_28 = arith.constant 0 : index
    %c0_29 = arith.constant 0 : index
    %37 = vector.load %arg5[%c0_27, %c0_28, %c0_29] : memref<4x288x512xbf16, #tpu.memory_space<vmem>>, vector<1x288x512xbf16>
    %38 = vector.shape_cast %37 : vector<1x288x512xbf16> to vector<288x512xbf16>
    %cst_30 = arith.constant dense<0.000000e+00> : vector<2x512xf32>
    %39 = tpu.matmul %36, %38, %cst_30 {dimension_numbers = #tpu.dot_dimension_numbers<[1], [0], [0], [1], [0, 0, 1, 1], [], []>} : vector<2x288xbf16>, vector<288x512xbf16>, vector<2x512xf32> -> vector<2x512xf32>
    %40 = arith.addf %34, %39 : vector<2x512xf32>
    %41 = vector.extract_strided_slice %33 {offsets = [2, 0], sizes = [2, 288], strides = [1, 1]} : vector<8x288xf32> to vector<2x288xf32>
    %42 = arith.truncf %41 : vector<2x288xf32> to vector<2x288xbf16>
    %c1 = arith.constant 1 : index
    %c0_31 = arith.constant 0 : index
    %c0_32 = arith.constant 0 : index
    %43 = vector.load %arg5[%c1, %c0_31, %c0_32] : memref<4x288x512xbf16, #tpu.memory_space<vmem>>, vector<1x288x512xbf16>
    %44 = vector.shape_cast %43 : vector<1x288x512xbf16> to vector<288x512xbf16>
    %cst_33 = arith.constant dense<0.000000e+00> : vector<2x512xf32>
    %45 = tpu.matmul %42, %44, %cst_33 {dimension_numbers = #tpu.dot_dimension_numbers<[1], [0], [0], [1], [0, 0, 1, 1], [], []>} : vector<2x288xbf16>, vector<288x512xbf16>, vector<2x512xf32> -> vector<2x512xf32>
    %46 = arith.addf %40, %45 : vector<2x512xf32>
    %47 = vector.extract_strided_slice %33 {offsets = [4, 0], sizes = [2, 288], strides = [1, 1]} : vector<8x288xf32> to vector<2x288xf32>
    %48 = arith.truncf %47 : vector<2x288xf32> to vector<2x288xbf16>
    %c2 = arith.constant 2 : index
    %c0_34 = arith.constant 0 : index
    %c0_35 = arith.constant 0 : index
    %49 = vector.load %arg5[%c2, %c0_34, %c0_35] : memref<4x288x512xbf16, #tpu.memory_space<vmem>>, vector<1x288x512xbf16>
    %50 = vector.shape_cast %49 : vector<1x288x512xbf16> to vector<288x512xbf16>
    %cst_36 = arith.constant dense<0.000000e+00> : vector<2x512xf32>
    %51 = tpu.matmul %48, %50, %cst_36 {dimension_numbers = #tpu.dot_dimension_numbers<[1], [0], [0], [1], [0, 0, 1, 1], [], []>} : vector<2x288xbf16>, vector<288x512xbf16>, vector<2x512xf32> -> vector<2x512xf32>
    %52 = arith.addf %46, %51 : vector<2x512xf32>
    %53 = vector.extract_strided_slice %33 {offsets = [6, 0], sizes = [2, 288], strides = [1, 1]} : vector<8x288xf32> to vector<2x288xf32>
    %54 = arith.truncf %53 : vector<2x288xf32> to vector<2x288xbf16>
    %c3 = arith.constant 3 : index
    %c0_37 = arith.constant 0 : index
    %c0_38 = arith.constant 0 : index
    %55 = vector.load %arg5[%c3, %c0_37, %c0_38] : memref<4x288x512xbf16, #tpu.memory_space<vmem>>, vector<1x288x512xbf16>
    %56 = vector.shape_cast %55 : vector<1x288x512xbf16> to vector<288x512xbf16>
    %cst_39 = arith.constant dense<0.000000e+00> : vector<2x512xf32>
    %57 = tpu.matmul %54, %56, %cst_39 {dimension_numbers = #tpu.dot_dimension_numbers<[1], [0], [0], [1], [0, 0, 1, 1], [], []>} : vector<2x288xbf16>, vector<288x512xbf16>, vector<2x512xf32> -> vector<2x512xf32>
    %58 = arith.addf %52, %57 : vector<2x512xf32>
    %c0_40 = arith.constant 0 : index
    %c0_41 = arith.constant 0 : index
    %59 = vector.load %arg6[%c0_40, %c0_41] : memref<1x512xf32, #tpu.memory_space<vmem>>, vector<1x512xf32>
    %60 = vector.broadcast %59 : vector<1x512xf32> to vector<2x512xf32>
    %61 = arith.addf %58, %60 : vector<2x512xf32>
    %cst_42 = arith.constant 0.000000e+00 : f32
    %62 = vector.broadcast %cst_42 : f32 to vector<2x512xf32>
    %63 = arith.maximumf %61, %62 : vector<2x512xf32>
    %64 = arith.truncf %63 : vector<2x512xf32> to vector<2x512xbf16>
    %c0_43 = arith.constant 0 : index
    %c0_44 = arith.constant 0 : index
    %65 = vector.load %arg7[%c0_43, %c0_44] : memref<512x512xbf16, #tpu.memory_space<vmem>>, vector<512x512xbf16>
    %cst_45 = arith.constant dense<0.000000e+00> : vector<2x512xf32>
    %66 = tpu.matmul %64, %65, %cst_45 {dimension_numbers = #tpu.dot_dimension_numbers<[1], [0], [0], [1], [0, 0, 1, 1], [], []>} : vector<2x512xbf16>, vector<512x512xbf16>, vector<2x512xf32> -> vector<2x512xf32>
    %c0_46 = arith.constant 0 : index
    %c0_47 = arith.constant 0 : index
    %67 = vector.load %arg8[%c0_46, %c0_47] : memref<1x512xf32, #tpu.memory_space<vmem>>, vector<1x512xf32>
    %68 = vector.broadcast %67 : vector<1x512xf32> to vector<2x512xf32>
    %69 = arith.addf %66, %68 : vector<2x512xf32>
    %cst_48 = arith.constant 0.000000e+00 : f32
    %70 = vector.broadcast %cst_48 : f32 to vector<2x512xf32>
    %71 = arith.maximumf %69, %70 : vector<2x512xf32>
    %c0_49 = arith.constant 0 : index
    %c0_50 = arith.constant 0 : index
    %72 = vector.load %arg9[%c0_49, %c0_50] : memref<1x512xf32, #tpu.memory_space<vmem>>, vector<1x512xf32>
    %73 = vector.broadcast %72 : vector<1x512xf32> to vector<2x512xf32>
    %74 = arith.mulf %71, %73 : vector<2x512xf32>
    %cst_51 = arith.constant dense<0.000000e+00> : vector<2xf32>
    %75 = vector.multi_reduction <add>, %74, %cst_51 [1] : vector<2x512xf32> to vector<2xf32>
    %76 = vector.shape_cast %75 : vector<2xf32> to vector<2x1xf32>
    %c0_52 = arith.constant 0 : index
    %c0_53 = arith.constant 0 : index
    %77 = vector.load %arg10[%c0_52, %c0_53] : memref<1x1xf32, #tpu.memory_space<vmem>>, vector<1x1xf32>
    %78 = vector.broadcast %77 : vector<1x1xf32> to vector<2x1xf32>
    %79 = arith.addf %76, %78 : vector<2x1xf32>
    %c0_54 = arith.constant 0 : index
    %c0_55 = arith.constant 0 : index
    %80 = vector.load %arg11[%c0_54, %c0_55] : memref<2x1xf32, #tpu.memory_space<vmem>>, vector<2x1xf32>
    tpu.vector_store %arg11[%c0_54, %c0_55], %79 {strides = array<i32>} : memref<2x1xf32, #tpu.memory_space<vmem>>, vector<2x1xf32>,
    return
  }
}

</mosaic_0001>

<llo_original>
// kernel: critic_forward.1
$region0: #{critic_forward.1}
  #allocation0 [shape = 'u32[]', space=smem, size = 0x4, offset = 0x4, fixed_abs, tag = 'smem constant byte address 0x4 - core index']
  #allocation1 [shape = 'u32[144,128]{1,0:T(1,128)}', space=vmem, size = 0x12000, scoped, tag = 'internal scratch']
  #allocation2 [shape = 'f32[8,576]{1,0:T(8,128)}', space=vmem, size = 0x5000, scoped, tag = 'scratch operand']
  #allocation3 [shape = 'f32[1,1]{1,0:T(1,128)S(1)}', space=vmem, size = 0x200, scoped, tag = 'scoped memory for critic_forward.1']
  %s0 = inlined_call_operand.vmem [shape: f32[18,16], index: 0, kind: input, shape index: {}]
  %s1 = inlined_call_operand.vmem [shape: bf16[16,144], index: 1, kind: input, shape index: {}]
  %s2 = inlined_call_operand.vmem [shape: f32[1,144], index: 2, kind: input, shape index: {}]
  %s3 = inlined_call_operand.vmem [shape: bf16[576,288], index: 3, kind: input, shape index: {}]
  %s4 = inlined_call_operand.vmem [shape: f32[1,288], index: 4, kind: input, shape index: {}]
  %s5 = inlined_call_operand.vmem [shape: bf16[4,288,512], index: 5, kind: input, shape index: {}]
  %s6 = inlined_call_operand.vmem [shape: f32[1,512], index: 6, kind: input, shape index: {}]
  %s7 = inlined_call_operand.hbm [shape: bf16[512,512], index: 7, kind: input, shape index: {}]
  %s8 = inlined_call_operand.vmem [shape: f32[1,512], index: 8, kind: input, shape index: {}]
  %s9 = inlined_call_operand.vmem [shape: f32[1,512], index: 9, kind: input, shape index: {}]
  %s10 = inlined_call_operand.<no memory space> [shape: f32[1,1], index: 10, kind: input, shape index: {}]
  %s11 = inlined_call_operand.vmem [shape: f32[2,1], index: 11, kind: output, shape index: {}]
  %s12 = sld [smem:[#allocation0]]
  $region58: #{critic_forward.1} parent=0
    _
  %s14 = ssub.s32 1, %s12
  %s15 = scalar_select 0, %s14, %s12
  %v16 = vstv %s10
  %17 = vst [vmem:[#allocation3] sm:$0x1] %v16
  $region1: #{critic_forward.1} parent=0
    #allocation4 [shape = 'u8[524288]{0}', space=vmem, size = 0x80000, scoped, tag = 'input window, operand 7, single buffered']
    #allocation5 [shape = 's32[1]{0}', space=sflag, size = 0x4, scoped, tag = 'scoped memory for critic_forward.1']
    %18 = vsyncpa [#allocation5], 0
    // Predicated region
    $region2: #{critic_forward.1} parent=1 // pred_check
      _
    $region3: #{critic_forward.1} parent=1 // pred_check_branch
      %20 = sbr.rel (0) target = $region5
    $region4: #{critic_forward.1} parent=1 // pred_region
      _
    $region5: #{critic_forward.1} parent=1 // pred_fallthru
      _
    // Predicated region
    $region6: #{critic_forward.1} parent=1 // pred_check
      _
    $region7: #{critic_forward.1} parent=1 // pred_check_branch
      %22 = sbr.rel (0) target = $region9
    $region8: #{critic_forward.1} parent=1 // pred_region
      _
    $region9: #{critic_forward.1} parent=1 // pred_fallthru
      _
    // Predicated region
    $region10: #{critic_forward.1} parent=1 // pred_check
      _
    $region11: #{critic_forward.1} parent=1 // pred_check_branch
      %24 = sbr.rel (0) target = $region13
    $region12: #{critic_forward.1} parent=1 // pred_region
      _
    $region13: #{critic_forward.1} parent=1 // pred_fallthru
      _
    // Predicated region
    $region14: #{critic_forward.1} parent=1 // pred_check
      _
    $region15: #{critic_forward.1} parent=1 // pred_check_branch
      %26 = sbr.rel (0) target = $region17
    $region16: #{critic_forward.1} parent=1 // pred_region
      _
    $region17: #{critic_forward.1} parent=1 // pred_fallthru
      _
    // Predicated region
    $region18: #{critic_forward.1} parent=1 // pred_check
      _
    $region19: #{critic_forward.1} parent=1 // pred_check_branch
      %28 = sbr.rel (0) target = $region21
    $region20: #{critic_forward.1} parent=1 // pred_region
      _
    $region21: #{critic_forward.1} parent=1 // pred_fallthru
      _
    // Predicated region
    $region22: #{critic_forward.1} parent=1 // pred_check
      _
    $region23: #{critic_forward.1} parent=1 // pred_check_branch
      %30 = sbr.rel (0) target = $region25
    $region24: #{critic_forward.1} parent=1 // pred_region
      _
    $region25: #{critic_forward.1} parent=1 // pred_fallthru
      _
    // Predicated region
    $region26: #{critic_forward.1} parent=1 // pred_check
      _
    $region27: #{critic_forward.1} parent=1 // pred_check_branch
      %32 = sbr.rel (0) target = $region29
    $region28: #{critic_forward.1} parent=1 // pred_region
      _
    $region29: #{critic_forward.1} parent=1 // pred_fallthru
      _
    // Predicated region
    $region30: #{critic_forward.1} parent=1 // pred_check
      _
    $region31: #{critic_forward.1} parent=1 // pred_check_branch
      %34 = sbr.rel (0) target = $region33
    $region32: #{critic_forward.1} parent=1 // pred_region
      %s36 = ssub.s32 16384, 16384
      %37 = vsyncadd [#allocation5], %s36
      %s38 = sshll.u32 [#allocation4], 4
      %s39 = int_to_ptr.vmem [resolvable:$true] %s38
      %44 = dma.hbm_to_vmem [thread:$0]  %s7, 16384, %s39, [#allocation5], 256, 256, 16
    $region33: #{critic_forward.1} parent=1 // pred_fallthru
      _
    // Predicated region
    $region34: #{critic_forward.1} parent=1 // pred_check
      _
    $region35: #{critic_forward.1} parent=1 // pred_check_branch
      %46 = sbr.rel (0) target = $region37
    $region36: #{critic_forward.1} parent=1 // pred_region
      _
    $region37: #{critic_forward.1} parent=1 // pred_fallthru
      _
    // Predicated region
    $region38: #{critic_forward.1} parent=1 // pred_check
      _
    $region39: #{critic_forward.1} parent=1 // pred_check_branch
      %48 = sbr.rel (0) target = $region41
    $region40: #{critic_forward.1} parent=1 // pred_region
      _
    $region41: #{critic_forward.1} parent=1 // pred_fallthru
      _
    // Predicated region
    $region42: #{critic_forward.1} parent=1 // pred_check
      _
    $region43: #{critic_forward.1} parent=1 // pred_check_branch
      %50 = sbr.rel (0) target = $region45
    $region44: #{critic_forward.1} parent=1 // pred_region
      _
    $region45: #{critic_forward.1} parent=1 // pred_fallthru
      _
    // Predicated region
    $region46: #{critic_forward.1} parent=1 // pred_check
      _
    $region47: #{critic_forward.1} parent=1 // pred_check_branch
      %52 = sbr.rel (0) target = $region49
    $region48: #{critic_forward.1} parent=1 // pred_region
      %53 = dma.done [#allocation5], 16384
    $region49: #{critic_forward.1} parent=1 // pred_fallthru
      _
    %v55 = vld [vmem:[%s0] sm:$0xff]
    %v56 = vld [vmem:[%s0 + $0x8] sm:$0xff]
    %v57 = vld [vmem:[%s0 + $0x10] sm:$0x3]
    %v58 = vpack.c.bf16 %v56, %v55
    %v59 = vpack.c.bf16 %v57, %v57
    %v60 = vld [vmem:[%s1] sm:$0xff]
    %v61 = vld [vmem:[%s1 + $0x8] sm:$0xff]
    %v62 = vld [vmem:[%s2] sm:$0x3]
    %v64 = vlaneseq
    %v65 = vshrl.u32 %v64, 7
    %v66 = vsub.s32 0, %v65
    %v67 = vrot.slane %v62, %v66
    %v68 = vlaneseq
    %v69 = vshrl.u32 %v68, 7
    %v70 = vsub.s32 1, %v69
    %v71 = vrot.slane %v62, %v70
    %v76 = vunpack.c.l.b16 %v60
    %v77 = vunpack.c.h.b16 %v60
    %v78 = vunpack.c.l.b16 %v61
    %v79 = vunpack.c.h.b16 %v61
    %v80 = vpack.c.b16 %v78, %v76
    %v81 = vpack.c.b16 %v79, %v77
    %vm84 = vcmask 130048
    %v86 = vsel %vm84, %v58, 0
    %v89 = vsel %vm84, %v59, 0
    %91 = vmatprep.subr.bf16.mxu0 0
    %92 = vmatpush1.bf16.msra.mxu0 0
    %93 = vmatprep.subr.bf16.mxu0 0
    %94 = vmatpush1.bf16.msra.mxu0 0
    %95 = vmatprep.subr.bf16.mxu0 0
    %96 = vmatpush1.bf16.msra.mxu0 0
    %97 = vmatprep.subr.bf16.mxu0 0
    %98 = vmatpush1.bf16.msra.mxu0 0
    %99 = vmatprep.subr.bf16.mxu0 0
    %100 = vmatpush1.bf16.msra.mxu0 0
    %101 = vmatprep.subr.bf16.mxu0 0
    %102 = vmatpush1.bf16.msra.mxu0 0
    %103 = vmatprep.subr.bf16.mxu0 0
    %104 = vmatpush1.bf16.msra.mxu0 0
    %105 = vmatprep.subr.bf16.mxu0 %v81
    %106 = vmatpush1.bf16.msra.mxu0 %v80
    %107 = vmatprep.subr.bf16.mxu0 0
    %108 = vmatpush2.bf16.msra.mxu0 0
    %109 = vmatprep.subr.bf16.mxu0 0
    %110 = vmatpush2.bf16.msra.mxu0 0
    %111 = vmatprep.subr.bf16.mxu0 0
    %112 = vmatpush2.bf16.msra.mxu0 0
    %113 = vmatprep.subr.bf16.mxu0 0
    %114 = vmatpush2.bf16.msra.mxu0 0
    %115 = vmatprep.subr.bf16.mxu0 0
    %116 = vmatpush2.bf16.msra.mxu0 0
    %117 = vmatprep.subr.bf16.mxu0 0
    %118 = vmatpush2.bf16.msra.mxu0 0
    %119 = vmatprep.subr.bf16.mxu0 0
    %120 = vmatpush2.bf16.msra.mxu0 0
    %121 = vmatprep.subr.bf16.mxu0 0
    %122 = vmatpush2.bf16.msra.mxu0 0
    %123 = vmatprep.mubr.bf16.mxu0 0
    %124 = vmatmul.mubr.bf16.gmra.mxu0 %v86
    %v125 = vpop.f32.mrf.mxu0
    %v126 = vadd.f32 %v67, %v125
    %v127 = vpop.f32.mrf.mxu0
    %v128 = vadd.f32 %v71, %v127
    %v129 = vpop.f32.mrf.mxu0
    %v130 = vadd.f32 %v67, %v129
    %v131 = vpop.f32.mrf.mxu0
    %v132 = vadd.f32 %v71, %v131
    %133 = vmatprep.mubr.bf16.mxu0 0
    %134 = vmatmul.mubr.bf16.gmra.mxu0 %v89
    %v135 = vpop.f32.mrf.mxu0
    %v136 = vadd.f32 %v67, %v135
    %v137 = vpop.f32.mrf.mxu0
    %v138 = vadd.f32 %v71, %v137
    %v139 = vpop.f32.mrf.mxu0
    %v140 = vpop.f32.mrf.mxu0
    %141 = vdwg.mxu0
    %v142 = vmax.f32 %v126, 0.0
    %v143 = vmax.f32 %v128, 0.0
    %v144 = vmax.f32 %v130, 0.0
    %v145 = vmax.f32 %v132, 0.0
    %v146 = vmax.f32 %v136, 0.0
    %v147 = vmax.f32 %v138, 0.0
    %148 = vst [vmem:[#allocation2] sm:$0xf] %v142
    %vm149 = vcmask 125952
    %150 = vst.msk [vmem:[#allocation2 + $0x8] sm:$0xf] %vm149, %v143
    %vm155 = vcmask 1045504
    %v156 = vrot.slane %v142, 2
    %v157 = vrot.slane %v144, 2
    %v158 = vsel %vm155, %v156, %v157
    %v159 = vrot.slane %v143, 2
    %v160 = vrot.slane %v145, 2
    %v161 = vsel %vm155, %v159, %v160
    %164 = vst [vmem:[#allocation2] sm:$0xf0] %v158
    %vm165 = vcmask 130052
    %166 = vst.msk [vmem:[#allocation2 + $0x8] sm:$0xf0] %vm165, %v161
    %167 = vrot.lane.b32.xlu0 %v156, 16
    %v168 = vpop.permute.xlu0 %167
    %169 = vrot.lane.b32.xlu0 %v159, 16
    %v170 = vpop.permute.xlu0 %169
    %v171 = vsel %vm84, %v168, %v170
    %vm174 = vcmask 1043584
    %175 = vst.msk [vmem:[#allocation2 + $0x8] sm:$0xf] %vm174, %v168
    %vm176 = vcmask 257024
    %177 = vst.msk [vmem:[#allocation2 + $0x10] sm:$0xf] %vm176, %v171
    %v178 = vrot.slane %v144, 4
    %v179 = vrot.slane %v145, 4
    %180 = vrot.lane.b32.xlu0 %v178, 16
    %v181 = vpop.permute.xlu0 %180
    %182 = vrot.lane.b32.xlu0 %v179, 16
    %v183 = vpop.permute.xlu0 %182
    %v184 = vsel %vm84, %v181, %v183
    %vm187 = vcmask 1047684
    %188 = vst.msk [vmem:[#allocation2 + $0x8] sm:$0xf0] %vm187, %v181
    %vm189 = vcmask 261124
    %190 = vst.msk [vmem:[#allocation2 + $0x10] sm:$0xf0] %vm189, %v184
    %vm191 = vcmask 1041408
    %v192 = vrot.slane %v142, 6
    %v193 = vrot.slane %v144, 6
    %v194 = vsel %vm191, %v192, %v193
    %v195 = vrot.slane %v143, 6
    %v196 = vrot.slane %v145, 6
    %v197 = vsel %vm191, %v195, %v196
    %198 = vrot.lane.b32.xlu0 %v194, 32
    %v199 = vpop.permute.xlu0 %198
    %200 = vrot.lane.b32.xlu0 %v197, 32
    %v201 = vpop.permute.xlu0 %200
    %vm202 = vcmask 261120
    %v203 = vsel %vm202, %v199, %v201
    %vm206 = vcmask 1043712
    %207 = vst.msk [vmem:[#allocation2 + $0x10] sm:$0xf] %vm206, %v199
    %vm208 = vcmask 388096
    %209 = vst.msk [vmem:[#allocation2 + $0x18] sm:$0xf] %vm208, %v203
    %210 = vrot.lane.b32.xlu0 %v144, 32
    %v211 = vpop.permute.xlu0 %210
    %212 = vrot.lane.b32.xlu0 %v145, 32
    %v213 = vpop.permute.xlu0 %212
    %v214 = vsel %vm202, %v211, %v213
    %vm217 = vcmask 1047812
    %218 = vst.msk [vmem:[#allocation2 + $0x10] sm:$0xf0] %vm217, %v211
    %vm219 = vcmask 392196
    %220 = vst.msk [vmem:[#allocation2 + $0x18] sm:$0xf0] %vm219, %v214
    %221 = vrot.lane.b32.xlu0 %v144, 48
    %v222 = vpop.permute.xlu0 %221
    %223 = vrot.lane.b32.xlu0 %v145, 48
    %v224 = vpop.permute.xlu0 %223
    %vm225 = vcmask 392192
    %v226 = vsel %vm225, %v222, %v224
    %vm229 = vcmask 1043840
    %230 = vst.msk [vmem:[#allocation2 + $0x18] sm:$0xf] %vm229, %v222
    %vm231 = vcmask 519168
    %232 = vst.msk [vmem:[#allocation2 + $0x20] sm:$0xf] %vm231, %v226
    %v235 = vrot.slane %v146, 2
    %v236 = vsel %vm155, %v157, %v235
    %v237 = vrot.slane %v147, 2
    %v238 = vsel %vm155, %v160, %v237
    %239 = vrot.lane.b32.xlu0 %v236, 48
    %v240 = vpop.permute.xlu0 %239
    %241 = vrot.lane.b32.xlu0 %v238, 48
    %v242 = vpop.permute.xlu0 %241
    %v243 = vsel %vm225, %v240, %v242
    %vm246 = vcmask 1047940
    %247 = vst.msk [vmem:[#allocation2 + $0x18] sm:$0xf0] %vm246, %v240
    %vm248 = vcmask 523268
    %249 = vst.msk [vmem:[#allocation2 + $0x20] sm:$0xf0] %vm248, %v243
    %v250 = vld [vmem:[#allocation2] sm:$0xff]
    %v251 = vld [vmem:[#allocation2 + $0x8] sm:$0xff]
    %v252 = vld [vmem:[#allocation2 + $0x10] sm:$0xff]
    %v253 = vld [vmem:[#allocation2 + $0x18] sm:$0xff]
    %v254 = vld [vmem:[#allocation2 + $0x20] sm:$0xff]
    %v255 = vpack.c.bf16 %v250, %v250
    %v256 = vpack.c.bf16 %v251, %v251
    %v257 = vpack.c.bf16 %v252, %v252
    %v258 = vpack.c.bf16 %v253, %v253
    %v259 = vpack.c.bf16 %v254, %v254
    %v260 = vld [vmem:[%s3] sm:$0xff]
    %v261 = vld [vmem:[%s3 + $0x8] sm:$0xf]
    %v262 = vld [vmem:[%s3 + $0xc] sm:$0xff]
    %v263 = vld [vmem:[%s3 + $0x14] sm:$0xf]
    %v264 = vld [vmem:[%s3 + $0x18] sm:$0xff]
    %v265 = vld [vmem:[%s3 + $0x20] sm:$0xf]
    %v266 = vld [vmem:[%s3 + $0x24] sm:$0xff]
    %v267 = vld [vmem:[%s3 + $0x2c] sm:$0xf]
    %v268 = vld [vmem:[%s3 + $0x30] sm:$0xff]
    %v269 = vld [vmem:[%s3 + $0x38] sm:$0xf]
    %v270 = vld [vmem:[%s3 + $0x3c] sm:$0xff]
    %v271 = vld [vmem:[%s3 + $0x44] sm:$0xf]
    %v272 = vld [vmem:[%s3 + $0x48] sm:$0xff]
    %v273 = vld [vmem:[%s3 + $0x50] sm:$0xf]
    %v274 = vld [vmem:[%s3 + $0x54] sm:$0xff]
    %v275 = vld [vmem:[%s3 + $0x5c] sm:$0xf]
    %v276 = vld [vmem:[%s3 + $0x60] sm:$0xff]
    %v277 = vld [vmem:[%s3 + $0x68] sm:$0xf]
    %v278 = vld [vmem:[%s3 + $0x6c] sm:$0xff]
    %v279 = vld [vmem:[%s3 + $0x74] sm:$0xf]
    %v280 = vld [vmem:[%s3 + $0x78] sm:$0xff]
    %v281 = vld [vmem:[%s3 + $0x80] sm:$0xf]
    %v282 = vld [vmem:[%s3 + $0x84] sm:$0xff]
    %v283 = vld [vmem:[%s3 + $0x8c] sm:$0xf]
    %v284 = vld [vmem:[%s3 + $0x90] sm:$0xff]
    %v285 = vld [vmem:[%s3 + $0x98] sm:$0xf]
    %v286 = vld [vmem:[%s3 + $0x9c] sm:$0xff]
    %v287 = vld [vmem:[%s3 + $0xa4] sm:$0xf]
    %v288 = vld [vmem:[%s3 + $0xa8] sm:$0xff]
    %v289 = vld [vmem:[%s3 + $0xb0] sm:$0xf]
    %v290 = vld [vmem:[%s3 + $0xb4] sm:$0xff]
    %v291 = vld [vmem:[%s3 + $0xbc] sm:$0xf]
    %v292 = vld [vmem:[%s3 + $0xc0] sm:$0xff]
    %v293 = vld [vmem:[%s3 + $0xc8] sm:$0xf]
    %v294 = vld [vmem:[%s3 + $0xcc] sm:$0xff]
    %v295 = vld [vmem:[%s3 + $0xd4] sm:$0xf]
    %v296 = vld [vmem:[%s3 + $0xd8] sm:$0xff]
    %v297 = vld [vmem:[%s3 + $0xe0] sm:$0xf]
    %v298 = vld [vmem:[%s3 + $0xe4] sm:$0xff]
    %v299 = vld [vmem:[%s3 + $0xec] sm:$0xf]
    %v300 = vld [vmem:[%s3 + $0xf0] sm:$0xff]
    %v301 = vld [vmem:[%s3 + $0xf8] sm:$0xf]
    %v302 = vld [vmem:[%s3 + $0xfc] sm:$0xff]
    %v303 = vld [vmem:[%s3 + $0x104] sm:$0xf]
    %v304 = vld [vmem:[%s3 + $0x108] sm:$0xff]
    %v305 = vld [vmem:[%s3 + $0x110] sm:$0xf]
    %v306 = vld [vmem:[%s3 + $0x114] sm:$0xff]
    %v307 = vld [vmem:[%s3 + $0x11c] sm:$0xf]
    %v308 = vld [vmem:[%s3 + $0x120] sm:$0xff]
    %v309 = vld [vmem:[%s3 + $0x128] sm:$0xf]
    %v310 = vld [vmem:[%s3 + $0x12c] sm:$0xff]
    %v311 = vld [vmem:[%s3 + $0x134] sm:$0xf]
    %v312 = vld [vmem:[%s3 + $0x138] sm:$0xff]
    %v313 = vld [vmem:[%s3 + $0x140] sm:$0xf]
    %v314 = vld [vmem:[%s3 + $0x144] sm:$0xff]
    %v315 = vld [vmem:[%s3 + $0x14c] sm:$0xf]
    %v316 = vld [vmem:[%s3 + $0x150] sm:$0xff]
    %v317 = vld [vmem:[%s3 + $0x158] sm:$0xf]
    %v318 = vld [vmem:[%s3 + $0x15c] sm:$0xff]
    %v319 = vld [vmem:[%s3 + $0x164] sm:$0xf]
    %v320 = vld [vmem:[%s3 + $0x168] sm:$0xff]
    %v321 = vld [vmem:[%s3 + $0x170] sm:$0xf]
    %v322 = vld [vmem:[%s3 + $0x174] sm:$0xff]
    %v323 = vld [vmem:[%s3 + $0x17c] sm:$0xf]
    %v324 = vld [vmem:[%s3 + $0x180] sm:$0xff]
    %v325 = vld [vmem:[%s3 + $0x188] sm:$0xf]
    %v326 = vld [vmem:[%s3 + $0x18c] sm:$0xff]
    %v327 = vld [vmem:[%s3 + $0x194] sm:$0xf]
    %v328 = vld [vmem:[%s3 + $0x198] sm:$0xff]
    %v329 = vld [vmem:[%s3 + $0x1a0] sm:$0xf]
    %v330 = vld [vmem:[%s3 + $0x1a4] sm:$0xff]
    %v331 = vld [vmem:[%s3 + $0x1ac] sm:$0xf]
    %v332 = vld [vmem:[%s3 + $0x1b0] sm:$0xff]
    %v333 = vld [vmem:[%s3 + $0x1b8] sm:$0xf]
    %v334 = vld [vmem:[%s3 + $0x1bc] sm:$0xff]
    %v335 = vld [vmem:[%s3 + $0x1c4] sm:$0xf]
    %v336 = vld [vmem:[%s3 + $0x1c8] sm:$0xff]
    %v337 = vld [vmem:[%s3 + $0x1d0] sm:$0xf]
    %v338 = vld [vmem:[%s3 + $0x1d4] sm:$0xff]
    %v339 = vld [vmem:[%s3 + $0x1dc] sm:$0xf]
    %v340 = vld [vmem:[%s3 + $0x1e0] sm:$0xff]
    %v341 = vld [vmem:[%s3 + $0x1e8] sm:$0xf]
    %v342 = vld [vmem:[%s3 + $0x1ec] sm:$0xff]
    %v343 = vld [vmem:[%s3 + $0x1f4] sm:$0xf]
    %v344 = vld [vmem:[%s3 + $0x1f8] sm:$0xff]
    %v345 = vld [vmem:[%s3 + $0x200] sm:$0xf]
    %v346 = vld [vmem:[%s3 + $0x204] sm:$0xff]
    %v347 = vld [vmem:[%s3 + $0x20c] sm:$0xf]
    %v348 = vld [vmem:[%s3 + $0x210] sm:$0xff]
    %v349 = vld [vmem:[%s3 + $0x218] sm:$0xf]
    %v350 = vld [vmem:[%s3 + $0x21c] sm:$0xff]
    %v351 = vld [vmem:[%s3 + $0x224] sm:$0xf]
    %v352 = vld [vmem:[%s3 + $0x228] sm:$0xff]
    %v353 = vld [vmem:[%s3 + $0x230] sm:$0xf]
    %v354 = vld [vmem:[%s3 + $0x234] sm:$0xff]
    %v355 = vld [vmem:[%s3 + $0x23c] sm:$0xf]
    %v356 = vld [vmem:[%s3 + $0x240] sm:$0xff]
    %v357 = vld [vmem:[%s3 + $0x248] sm:$0xf]
    %v358 = vld [vmem:[%s3 + $0x24c] sm:$0xff]
    %v359 = vld [vmem:[%s3 + $0x254] sm:$0xf]
    %v360 = vld [vmem:[%s3 + $0x258] sm:$0xff]
    %v361 = vld [vmem:[%s3 + $0x260] sm:$0xf]
    %v362 = vld [vmem:[%s3 + $0x264] sm:$0xff]
    %v363 = vld [vmem:[%s3 + $0x26c] sm:$0xf]
    %v364 = vld [vmem:[%s3 + $0x270] sm:$0xff]
    %v365 = vld [vmem:[%s3 + $0x278] sm:$0xf]
    %v366 = vld [vmem:[%s3 + $0x27c] sm:$0xff]
    %v367 = vld [vmem:[%s3 + $0x284] sm:$0xf]
    %v368 = vld [vmem:[%s3 + $0x288] sm:$0xff]
    %v369 = vld [vmem:[%s3 + $0x290] sm:$0xf]
    %v370 = vld [vmem:[%s3 + $0x294] sm:$0xff]
    %v371 = vld [vmem:[%s3 + $0x29c] sm:$0xf]
    %v372 = vld [vmem:[%s3 + $0x2a0] sm:$0xff]
    %v373 = vld [vmem:[%s3 + $0x2a8] sm:$0xf]
    %v374 = vld [vmem:[%s3 + $0x2ac] sm:$0xff]
    %v375 = vld [vmem:[%s3 + $0x2b4] sm:$0xf]
    %v376 = vld [vmem:[%s3 + $0x2b8] sm:$0xff]
    %v377 = vld [vmem:[%s3 + $0x2c0] sm:$0xf]
    %v378 = vld [vmem:[%s3 + $0x2c4] sm:$0xff]
    %v379 = vld [vmem:[%s3 + $0x2cc] sm:$0xf]
    %v380 = vld [vmem:[%s3 + $0x2d0] sm:$0xff]
    %v381 = vld [vmem:[%s3 + $0x2d8] sm:$0xf]
    %v382 = vld [vmem:[%s3 + $0x2dc] sm:$0xff]
    %v383 = vld [vmem:[%s3 + $0x2e4] sm:$0xf]
    %v384 = vld [vmem:[%s3 + $0x2e8] sm:$0xff]
    %v385 = vld [vmem:[%s3 + $0x2f0] sm:$0xf]
    %v386 = vld [vmem:[%s3 + $0x2f4] sm:$0xff]
    %v387 = vld [vmem:[%s3 + $0x2fc] sm:$0xf]
    %v388 = vld [vmem:[%s3 + $0x300] sm:$0xff]
    %v389 = vld [vmem:[%s3 + $0x308] sm:$0xf]
    %v390 = vld [vmem:[%s3 + $0x30c] sm:$0xff]
    %v391 = vld [vmem:[%s3 + $0x314] sm:$0xf]
    %v392 = vld [vmem:[%s3 + $0x318] sm:$0xff]
    %v393 = vld [vmem:[%s3 + $0x320] sm:$0xf]
    %v394 = vld [vmem:[%s3 + $0x324] sm:$0xff]
    %v395 = vld [vmem:[%s3 + $0x32c] sm:$0xf]
    %v396 = vld [vmem:[%s3 + $0x330] sm:$0xff]
    %v397 = vld [vmem:[%s3 + $0x338] sm:$0xf]
    %v398 = vld [vmem:[%s3 + $0x33c] sm:$0xff]
    %v399 = vld [vmem:[%s3 + $0x344] sm:$0xf]
    %v400 = vld [vmem:[%s3 + $0x348] sm:$0xff]
    %v401 = vld [vmem:[%s3 + $0x350] sm:$0xf]
    %v402 = vld [vmem:[%s3 + $0x354] sm:$0xff]
    %v403 = vld [vmem:[%s3 + $0x35c] sm:$0xf]
    %v404 = vld [vmem:[%s4] sm:$0x7]
    %v406 = vlaneseq
    %v407 = vshrl.u32 %v406, 7
    %v408 = vsub.s32 0, %v407
    %v409 = vrot.slane %v404, %v408
    %v410 = vlaneseq
    %v411 = vshrl.u32 %v410, 7
    %v412 = vsub.s32 1, %v411
    %v413 = vrot.slane %v404, %v412
    %v414 = vlaneseq
    %v415 = vshrl.u32 %v414, 7
    %v416 = vsub.s32 2, %v415
    %v417 = vrot.slane %v404, %v416
    %v565 = vunpack.c.l.b16 %v260
    %v566 = vunpack.c.h.b16 %v260
    %v567 = vunpack.c.l.b16 %v261
    %v568 = vunpack.c.l.b16 %v262
    %v569 = vunpack.c.h.b16 %v262
    %v570 = vunpack.c.l.b16 %v263
    %v571 = vunpack.c.l.b16 %v264
    %v572 = vunpack.c.h.b16 %v264
    %v573 = vunpack.c.l.b16 %v265
    %v574 = vunpack.c.l.b16 %v266
    %v575 = vunpack.c.h.b16 %v266
    %v576 = vunpack.c.l.b16 %v267
    %v577 = vunpack.c.l.b16 %v268
    %v578 = vunpack.c.h.b16 %v268
    %v579 = vunpack.c.l.b16 %v269
    %v580 = vunpack.c.l.b16 %v270
    %v581 = vunpack.c.h.b16 %v270
    %v582 = vunpack.c.l.b16 %v271
    %v583 = vunpack.c.l.b16 %v272
    %v584 = vunpack.c.h.b16 %v272
    %v585 = vunpack.c.l.b16 %v273
    %v586 = vunpack.c.l.b16 %v274
    %v587 = vunpack.c.h.b16 %v274
    %v588 = vunpack.c.l.b16 %v275
    %v589 = vunpack.c.l.b16 %v276
    %v590 = vunpack.c.h.b16 %v276
    %v591 = vunpack.c.l.b16 %v277
    %v592 = vunpack.c.l.b16 %v278
    %v593 = vunpack.c.h.b16 %v278
    %v594 = vunpack.c.l.b16 %v279
    %v595 = vunpack.c.l.b16 %v280
    %v596 = vunpack.c.h.b16 %v280
    %v597 = vunpack.c.l.b16 %v281
    %v598 = vunpack.c.l.b16 %v282
    %v599 = vunpack.c.h.b16 %v282
    %v600 = vunpack.c.l.b16 %v283
    %v601 = vunpack.c.l.b16 %v284
    %v602 = vunpack.c.h.b16 %v284
    %v603 = vunpack.c.l.b16 %v285
    %v604 = vunpack.c.l.b16 %v286
    %v605 = vunpack.c.h.b16 %v286
    %v606 = vunpack.c.l.b16 %v287
    %v607 = vunpack.c.l.b16 %v288
    %v608 = vunpack.c.h.b16 %v288
    %v609 = vunpack.c.l.b16 %v289
    %v610 = vunpack.c.l.b16 %v290
    %v611 = vunpack.c.h.b16 %v290
    %v612 = vunpack.c.l.b16 %v291
    %v613 = vunpack.c.l.b16 %v292
    %v614 = vunpack.c.h.b16 %v292
    %v615 = vunpack.c.l.b16 %v293
    %v616 = vunpack.c.l.b16 %v294
    %v617 = vunpack.c.h.b16 %v294
    %v618 = vunpack.c.l.b16 %v295
    %v619 = vunpack.c.l.b16 %v296
    %v620 = vunpack.c.h.b16 %v296
    %v621 = vunpack.c.l.b16 %v297
    %v622 = vunpack.c.l.b16 %v298
    %v623 = vunpack.c.h.b16 %v298
    %v624 = vunpack.c.l.b16 %v299
    %v625 = vunpack.c.l.b16 %v300
    %v626 = vunpack.c.h.b16 %v300
    %v627 = vunpack.c.l.b16 %v301
    %v628 = vunpack.c.l.b16 %v302
    %v629 = vunpack.c.h.b16 %v302
    %v630 = vunpack.c.l.b16 %v303
    %v631 = vunpack.c.l.b16 %v304
    %v632 = vunpack.c.h.b16 %v304
    %v633 = vunpack.c.l.b16 %v305
    %v634 = vunpack.c.l.b16 %v306
    %v635 = vunpack.c.h.b16 %v306
    %v636 = vunpack.c.l.b16 %v307
    %v637 = vunpack.c.l.b16 %v308
    %v638 = vunpack.c.h.b16 %v308
    %v639 = vunpack.c.l.b16 %v309
    %v640 = vunpack.c.l.b16 %v310
    %v641 = vunpack.c.h.b16 %v310
    %v642 = vunpack.c.l.b16 %v311
    %v643 = vunpack.c.l.b16 %v312
    %v644 = vunpack.c.h.b16 %v312
    %v645 = vunpack.c.l.b16 %v313
    %v646 = vunpack.c.l.b16 %v314
    %v647 = vunpack.c.h.b16 %v314
    %v648 = vunpack.c.l.b16 %v315
    %v649 = vunpack.c.l.b16 %v316
    %v650 = vunpack.c.h.b16 %v316
    %v651 = vunpack.c.l.b16 %v317
    %v652 = vunpack.c.l.b16 %v318
    %v653 = vunpack.c.h.b16 %v318
    %v654 = vunpack.c.l.b16 %v319
    %v655 = vunpack.c.l.b16 %v320
    %v656 = vunpack.c.h.b16 %v320
    %v657 = vunpack.c.l.b16 %v321
    %v658 = vunpack.c.l.b16 %v322
    %v659 = vunpack.c.h.b16 %v322
    %v660 = vunpack.c.l.b16 %v323
    %v661 = vunpack.c.l.b16 %v324
    %v662 = vunpack.c.h.b16 %v324
    %v663 = vunpack.c.l.b16 %v325
    %v664 = vunpack.c.l.b16 %v326
    %v665 = vunpack.c.h.b16 %v326
    %v666 = vunpack.c.l.b16 %v327
    %v667 = vunpack.c.l.b16 %v328
    %v668 = vunpack.c.h.b16 %v328
    %v669 = vunpack.c.l.b16 %v329
    %v670 = vunpack.c.l.b16 %v330
    %v671 = vunpack.c.h.b16 %v330
    %v672 = vunpack.c.l.b16 %v331
    %v673 = vunpack.c.l.b16 %v332
    %v674 = vunpack.c.h.b16 %v332
    %v675 = vunpack.c.l.b16 %v333
    %v676 = vunpack.c.l.b16 %v334
    %v677 = vunpack.c.h.b16 %v334
    %v678 = vunpack.c.l.b16 %v335
    %v679 = vunpack.c.l.b16 %v336
    %v680 = vunpack.c.h.b16 %v336
    %v681 = vunpack.c.l.b16 %v337
    %v682 = vunpack.c.l.b16 %v338
    %v683 = vunpack.c.h.b16 %v338
    %v684 = vunpack.c.l.b16 %v339
    %v685 = vunpack.c.l.b16 %v340
    %v686 = vunpack.c.h.b16 %v340
    %v687 = vunpack.c.l.b16 %v341
    %v688 = vunpack.c.l.b16 %v342
    %v689 = vunpack.c.h.b16 %v342
    %v690 = vunpack.c.l.b16 %v343
    %v691 = vunpack.c.l.b16 %v344
    %v692 = vunpack.c.h.b16 %v344
    %v693 = vunpack.c.l.b16 %v345
    %v694 = vunpack.c.l.b16 %v346
    %v695 = vunpack.c.h.b16 %v346
    %v696 = vunpack.c.l.b16 %v347
    %v697 = vunpack.c.l.b16 %v348
    %v698 = vunpack.c.h.b16 %v348
    %v699 = vunpack.c.l.b16 %v349
    %v700 = vunpack.c.l.b16 %v350
    %v701 = vunpack.c.h.b16 %v350
    %v702 = vunpack.c.l.b16 %v351
    %v703 = vunpack.c.l.b16 %v352
    %v704 = vunpack.c.h.b16 %v352
    %v705 = vunpack.c.l.b16 %v353
    %v706 = vunpack.c.l.b16 %v354
    %v707 = vunpack.c.h.b16 %v354
    %v708 = vunpack.c.l.b16 %v355
    %v709 = vunpack.c.l.b16 %v356
    %v710 = vunpack.c.h.b16 %v356
    %v711 = vunpack.c.l.b16 %v357
    %v712 = vunpack.c.l.b16 %v358
    %v713 = vunpack.c.h.b16 %v358
    %v714 = vunpack.c.l.b16 %v359
    %v715 = vunpack.c.l.b16 %v360
    %v716 = vunpack.c.h.b16 %v360
    %v717 = vunpack.c.l.b16 %v361
    %v718 = vunpack.c.l.b16 %v362
    %v719 = vunpack.c.h.b16 %v362
    %v720 = vunpack.c.l.b16 %v363
    %v721 = vunpack.c.l.b16 %v364
    %v722 = vunpack.c.h.b16 %v364
    %v723 = vunpack.c.l.b16 %v365
    %v724 = vunpack.c.l.b16 %v366
    %v725 = vunpack.c.h.b16 %v366
    %v726 = vunpack.c.l.b16 %v367
    %v727 = vunpack.c.l.b16 %v368
    %v728 = vunpack.c.h.b16 %v368
    %v729 = vunpack.c.l.b16 %v369
    %v730 = vunpack.c.l.b16 %v370
    %v731 = vunpack.c.h.b16 %v370
    %v732 = vunpack.c.l.b16 %v371
    %v733 = vunpack.c.l.b16 %v372
    %v734 = vunpack.c.h.b16 %v372
    %v735 = vunpack.c.l.b16 %v373
    %v736 = vunpack.c.l.b16 %v374
    %v737 = vunpack.c.h.b16 %v374
    %v738 = vunpack.c.l.b16 %v375
    %v739 = vunpack.c.l.b16 %v376
    %v740 = vunpack.c.h.b16 %v376
    %v741 = vunpack.c.l.b16 %v377
    %v742 = vunpack.c.l.b16 %v378
    %v743 = vunpack.c.h.b16 %v378
    %v744 = vunpack.c.l.b16 %v379
    %v745 = vunpack.c.l.b16 %v380
    %v746 = vunpack.c.h.b16 %v380
    %v747 = vunpack.c.l.b16 %v381
    %v748 = vunpack.c.l.b16 %v382
    %v749 = vunpack.c.h.b16 %v382
    %v750 = vunpack.c.l.b16 %v383
    %v751 = vunpack.c.l.b16 %v384
    %v752 = vunpack.c.h.b16 %v384
    %v753 = vunpack.c.l.b16 %v385
    %v754 = vunpack.c.l.b16 %v386
    %v755 = vunpack.c.h.b16 %v386
    %v756 = vunpack.c.l.b16 %v387
    %v757 = vunpack.c.l.b16 %v388
    %v758 = vunpack.c.h.b16 %v388
    %v759 = vunpack.c.l.b16 %v389
    %v760 = vunpack.c.l.b16 %v390
    %v761 = vunpack.c.h.b16 %v390
    %v762 = vunpack.c.l.b16 %v391
    %v763 = vunpack.c.l.b16 %v392
    %v764 = vunpack.c.h.b16 %v392
    %v765 = vunpack.c.l.b16 %v393
    %v766 = vunpack.c.l.b16 %v394
    %v767 = vunpack.c.h.b16 %v394
    %v768 = vunpack.c.l.b16 %v395
    %v769 = vunpack.c.l.b16 %v396
    %v770 = vunpack.c.h.b16 %v396
    %v771 = vunpack.c.l.b16 %v397
    %v772 = vunpack.c.l.b16 %v398
    %v773 = vunpack.c.h.b16 %v398
    %v774 = vunpack.c.l.b16 %v399
    %v775 = vunpack.c.l.b16 %v400
    %v776 = vunpack.c.h.b16 %v400
    %v777 = vunpack.c.l.b16 %v401
    %v778 = vunpack.c.l.b16 %v402
    %v779 = vunpack.c.h.b16 %v402
    %v780 = vunpack.c.l.b16 %v403
    %v781 = vpack.c.b16 %v568, %v565
    %v782 = vpack.c.b16 %v569, %v566
    %v783 = vpack.c.b16 %v570, %v567
    %v784 = vpack.c.b16 %v574, %v571
    %v785 = vpack.c.b16 %v575, %v572
    %v786 = vpack.c.b16 %v576, %v573
    %v787 = vpack.c.b16 %v580, %v577
    %v788 = vpack.c.b16 %v581, %v578
    %v789 = vpack.c.b16 %v582, %v579
    %v790 = vpack.c.b16 %v586, %v583
    %v791 = vpack.c.b16 %v587, %v584
    %v792 = vpack.c.b16 %v588, %v585
    %v793 = vpack.c.b16 %v592, %v589
    %v794 = vpack.c.b16 %v593, %v590
    %v795 = vpack.c.b16 %v594, %v591
    %v796 = vpack.c.b16 %v598, %v595
    %v797 = vpack.c.b16 %v599, %v596
    %v798 = vpack.c.b16 %v600, %v597
    %v799 = vpack.c.b16 %v604, %v601
    %v800 = vpack.c.b16 %v605, %v602
    %v801 = vpack.c.b16 %v606, %v603
    %v802 = vpack.c.b16 %v610, %v607
    %v803 = vpack.c.b16 %v611, %v608
    %v804 = vpack.c.b16 %v612, %v609
    %v805 = vpack.c.b16 %v616, %v613
    %v806 = vpack.c.b16 %v617, %v614
    %v807 = vpack.c.b16 %v618, %v615
    %v808 = vpack.c.b16 %v622, %v619
    %v809 = vpack.c.b16 %v623, %v620
    %v810 = vpack.c.b16 %v624, %v621
    %v811 = vpack.c.b16 %v628, %v625
    %v812 = vpack.c.b16 %v629, %v626
    %v813 = vpack.c.b16 %v630, %v627
    %v814 = vpack.c.b16 %v634, %v631
    %v815 = vpack.c.b16 %v635, %v632
    %v816 = vpack.c.b16 %v636, %v633
    %v817 = vpack.c.b16 %v640, %v637
    %v818 = vpack.c.b16 %v641, %v638
    %v819 = vpack.c.b16 %v642, %v639
    %v820 = vpack.c.b16 %v646, %v643
    %v821 = vpack.c.b16 %v647, %v644
    %v822 = vpack.c.b16 %v648, %v645
    %v823 = vpack.c.b16 %v652, %v649
    %v824 = vpack.c.b16 %v653, %v650
    %v825 = vpack.c.b16 %v654, %v651
    %v826 = vpack.c.b16 %v658, %v655
    %v827 = vpack.c.b16 %v659, %v656
    %v828 = vpack.c.b16 %v660, %v657
    %v829 = vpack.c.b16 %v664, %v661
    %v830 = vpack.c.b16 %v665, %v662
    %v831 = vpack.c.b16 %v666, %v663
    %v832 = vpack.c.b16 %v670, %v667
    %v833 = vpack.c.b16 %v671, %v668
    %v834 = vpack.c.b16 %v672, %v669
    %v835 = vpack.c.b16 %v676, %v673
    %v836 = vpack.c.b16 %v677, %v674
    %v837 = vpack.c.b16 %v678, %v675
    %v838 = vpack.c.b16 %v682, %v679
    %v839 = vpack.c.b16 %v683, %v680
    %v840 = vpack.c.b16 %v684, %v681
    %v841 = vpack.c.b16 %v688, %v685
    %v842 = vpack.c.b16 %v689, %v686
    %v843 = vpack.c.b16 %v690, %v687
    %v844 = vpack.c.b16 %v694, %v691
    %v845 = vpack.c.b16 %v695, %v692
    %v846 = vpack.c.b16 %v696, %v693
    %v847 = vpack.c.b16 %v700, %v697
    %v848 = vpack.c.b16 %v701, %v698
    %v849 = vpack.c.b16 %v702, %v699
    %v850 = vpack.c.b16 %v706, %v703
    %v851 = vpack.c.b16 %v707, %v704
    %v852 = vpack.c.b16 %v708, %v705
    %v853 = vpack.c.b16 %v712, %v709
    %v854 = vpack.c.b16 %v713, %v710
    %v855 = vpack.c.b16 %v714, %v711
    %v856 = vpack.c.b16 %v718, %v715
    %v857 = vpack.c.b16 %v719, %v716
    %v858 = vpack.c.b16 %v720, %v717
    %v859 = vpack.c.b16 %v724, %v721
    %v860 = vpack.c.b16 %v725, %v722
    %v861 = vpack.c.b16 %v726, %v723
    %v862 = vpack.c.b16 %v730, %v727
    %v863 = vpack.c.b16 %v731, %v728
    %v864 = vpack.c.b16 %v732, %v729
    %v865 = vpack.c.b16 %v736, %v733
    %v866 = vpack.c.b16 %v737, %v734
    %v867 = vpack.c.b16 %v738, %v735
    %v868 = vpack.c.b16 %v742, %v739
    %v869 = vpack.c.b16 %v743, %v740
    %v870 = vpack.c.b16 %v744, %v741
    %v871 = vpack.c.b16 %v748, %v745
    %v872 = vpack.c.b16 %v749, %v746
    %v873 = vpack.c.b16 %v750, %v747
    %v874 = vpack.c.b16 %v754, %v751
    %v875 = vpack.c.b16 %v755, %v752
    %v876 = vpack.c.b16 %v756, %v753
    %v877 = vpack.c.b16 %v760, %v757
    %v878 = vpack.c.b16 %v761, %v758
    %v879 = vpack.c.b16 %v762, %v759
    %v880 = vpack.c.b16 %v766, %v763
    %v881 = vpack.c.b16 %v767, %v764
    %v882 = vpack.c.b16 %v768, %v765
    %v883 = vpack.c.b16 %v772, %v769
    %v884 = vpack.c.b16 %v773, %v770
    %v885 = vpack.c.b16 %v774, %v771
    %v886 = vpack.c.b16 %v778, %v775
    %v887 = vpack.c.b16 %v779, %v776
    %v888 = vpack.c.b16 %v780, %v777
    %vm997 = vcmask 523264
    %v999 = vsel %vm997, %v259, 0
    %1001 = vmatprep.subr.bf16.mxu0 %v803
    %1002 = vmatpush1.bf16.msra.mxu0 %v802
    %1003 = vmatprep.subr.bf16.mxu0 %v800
    %1004 = vmatpush1.bf16.msra.mxu0 %v799
    %1005 = vmatprep.subr.bf16.mxu0 %v797
    %1006 = vmatpush1.bf16.msra.mxu0 %v796
    %1007 = vmatprep.subr.bf16.mxu0 %v794
    %1008 = vmatpush1.bf16.msra.mxu0 %v793
    %1009 = vmatprep.subr.bf16.mxu0 %v791
    %1010 = vmatpush1.bf16.msra.mxu0 %v790
    %1011 = vmatprep.subr.bf16.mxu0 %v788
    %1012 = vmatpush1.bf16.msra.mxu0 %v787
    %1013 = vmatprep.subr.bf16.mxu0 %v785
    %1014 = vmatpush1.bf16.msra.mxu0 %v784
    %1015 = vmatprep.subr.bf16.mxu0 %v782
    %1016 = vmatpush1.bf16.msra.mxu0 %v781
    %1017 = vmatprep.subr.bf16.mxu0 %v827
    %1018 = vmatpush2.bf16.msra.mxu0 %v826
    %1019 = vmatprep.subr.bf16.mxu0 %v824
    %1020 = vmatpush2.bf16.msra.mxu0 %v823
    %1021 = vmatprep.subr.bf16.mxu0 %v821
    %1022 = vmatpush2.bf16.msra.mxu0 %v820
    %1023 = vmatprep.subr.bf16.mxu0 %v818
    %1024 = vmatpush2.bf16.msra.mxu0 %v817
    %1025 = vmatprep.subr.bf16.mxu0 %v815
    %1026 = vmatpush2.bf16.msra.mxu0 %v814
    %1027 = vmatprep.subr.bf16.mxu0 %v812
    %1028 = vmatpush2.bf16.msra.mxu0 %v811
    %1029 = vmatprep.subr.bf16.mxu0 %v809
    %1030 = vmatpush2.bf16.msra.mxu0 %v808
    %1031 = vmatprep.subr.bf16.mxu0 %v806
    %1032 = vmatpush2.bf16.msra.mxu0 %v805
    %1033 = vmatprep.mubr.bf16.mxu0 %v256
    %1034 = vmatmul.mubr.bf16.gmra.mxu0 %v255
    %v1035 = vpop.f32.mrf.mxu0
    %v1036 = vadd.f32 %v409, %v1035
    %v1037 = vpop.f32.mrf.mxu0
    %v1038 = vadd.f32 %v413, %v1037
    %v1039 = vpop.f32.mrf.mxu0
    %v1040 = vpop.f32.mrf.mxu0
    %1041 = vdwg.mxu0
    %1042 = vmatprep.subr.bf16.mxu0 %v851
    %1043 = vmatpush1.bf16.msra.mxu0 %v850
    %1044 = vmatprep.subr.bf16.mxu0 %v848
    %1045 = vmatpush1.bf16.msra.mxu0 %v847
    %1046 = vmatprep.subr.bf16.mxu0 %v845
    %1047 = vmatpush1.bf16.msra.mxu0 %v844
    %1048 = vmatprep.subr.bf16.mxu0 %v842
    %1049 = vmatpush1.bf16.msra.mxu0 %v841
    %1050 = vmatprep.subr.bf16.mxu0 %v839
    %1051 = vmatpush1.bf16.msra.mxu0 %v838
    %1052 = vmatprep.subr.bf16.mxu0 %v836
    %1053 = vmatpush1.bf16.msra.mxu0 %v835
    %1054 = vmatprep.subr.bf16.mxu0 %v833
    %1055 = vmatpush1.bf16.msra.mxu0 %v832
    %1056 = vmatprep.subr.bf16.mxu0 %v830
    %1057 = vmatpush1.bf16.msra.mxu0 %v829
    %1058 = vmatprep.subr.bf16.mxu0 %v875
    %1059 = vmatpush2.bf16.msra.mxu0 %v874
    %1060 = vmatprep.subr.bf16.mxu0 %v872
    %1061 = vmatpush2.bf16.msra.mxu0 %v871
    %1062 = vmatprep.subr.bf16.mxu0 %v869
    %1063 = vmatpush2.bf16.msra.mxu0 %v868
    %1064 = vmatprep.subr.bf16.mxu0 %v866
    %1065 = vmatpush2.bf16.msra.mxu0 %v865
    %1066 = vmatprep.subr.bf16.mxu0 %v863
    %1067 = vmatpush2.bf16.msra.mxu0 %v862
    %1068 = vmatprep.subr.bf16.mxu0 %v860
    %1069 = vmatpush2.bf16.msra.mxu0 %v859
    %1070 = vmatprep.subr.bf16.mxu0 %v857
    %1071 = vmatpush2.bf16.msra.mxu0 %v856
    %1072 = vmatprep.subr.bf16.mxu0 %v854
    %1073 = vmatpush2.bf16.msra.mxu0 %v853
    %1074 = vmatprep.mubr.bf16.mxu0 %v258
    %1075 = vmatmul.mubr.bf16.gmra.mxu0 %v257
    %v1076 = vpop.f32.mrf.mxu0
    %v1077 = vadd.f32 %v1036, %v1076
    %v1078 = vpop.f32.mrf.mxu0
    %v1079 = vadd.f32 %v1038, %v1078
    %v1080 = vpop.f32.mrf.mxu0
    %v1081 = vpop.f32.mrf.mxu0
    %1082 = vdwg.mxu0
    %1083 = vmatprep.subr.bf16.mxu0 0
    %1084 = vmatpush1.bf16.msra.mxu0 0
    %1085 = vmatprep.subr.bf16.mxu0 0
    %1086 = vmatpush1.bf16.msra.mxu0 0
    %1087 = vmatprep.subr.bf16.mxu0 0
    %1088 = vmatpush1.bf16.msra.mxu0 0
    %1089 = vmatprep.subr.bf16.mxu0 0
    %1090 = vmatpush1.bf16.msra.mxu0 0
    %1091 = vmatprep.subr.bf16.mxu0 %v887
    %1092 = vmatpush1.bf16.msra.mxu0 %v886
    %1093 = vmatprep.subr.bf16.mxu0 %v884
    %1094 = vmatpush1.bf16.msra.mxu0 %v883
    %1095 = vmatprep.subr.bf16.mxu0 %v881
    %1096 = vmatpush1.bf16.msra.mxu0 %v880
    %1097 = vmatprep.subr.bf16.mxu0 %v878
    %1098 = vmatpush1.bf16.msra.mxu0 %v877
    %1099 = vmatprep.subr.bf16.mxu0 0
    %1100 = vmatpush2.bf16.msra.mxu0 0
    %1101 = vmatprep.subr.bf16.mxu0 0
    %1102 = vmatpush2.bf16.msra.mxu0 0
    %1103 = vmatprep.subr.bf16.mxu0 0
    %1104 = vmatpush2.bf16.msra.mxu0 0
    %1105 = vmatprep.subr.bf16.mxu0 0
    %1106 = vmatpush2.bf16.msra.mxu0 0
    %1107 = vmatprep.subr.bf16.mxu0 0
    %1108 = vmatpush2.bf16.msra.mxu0 0
    %1109 = vmatprep.subr.bf16.mxu0 0
    %1110 = vmatpush2.bf16.msra.mxu0 0
    %1111 = vmatprep.subr.bf16.mxu0 0
    %1112 = vmatpush2.bf16.msra.mxu0 0
    %1113 = vmatprep.subr.bf16.mxu0 0
    %1114 = vmatpush2.bf16.msra.mxu0 0
    %1115 = vmatprep.mubr.bf16.mxu0 0
    %1116 = vmatmul.mubr.bf16.gmra.mxu0 %v999
    %v1117 = vpop.f32.mrf.mxu0
    %v1118 = vadd.f32 %v1077, %v1117
    %v1119 = vpop.f32.mrf.mxu0
    %v1120 = vadd.f32 %v1079, %v1119
    %v1121 = vpop.f32.mrf.mxu0
    %v1122 = vpop.f32.mrf.mxu0
    %1123 = vdwg.mxu0
    %1124 = vmatprep.subr.bf16.mxu0 0
    %1125 = vmatpush1.bf16.msra.mxu0 %v804
    %1126 = vmatprep.subr.bf16.mxu0 0
    %1127 = vmatpush1.bf16.msra.mxu0 %v801
    %1128 = vmatprep.subr.bf16.mxu0 0
    %1129 = vmatpush1.bf16.msra.mxu0 %v798
    %1130 = vmatprep.subr.bf16.mxu0 0
    %1131 = vmatpush1.bf16.msra.mxu0 %v795
    %1132 = vmatprep.subr.bf16.mxu0 0
    %1133 = vmatpush1.bf16.msra.mxu0 %v792
    %1134 = vmatprep.subr.bf16.mxu0 0
    %1135 = vmatpush1.bf16.msra.mxu0 %v789
    %1136 = vmatprep.subr.bf16.mxu0 0
    %1137 = vmatpush1.bf16.msra.mxu0 %v786
    %1138 = vmatprep.subr.bf16.mxu0 0
    %1139 = vmatpush1.bf16.msra.mxu0 %v783
    %1140 = vmatprep.subr.bf16.mxu0 0
    %1141 = vmatpush2.bf16.msra.mxu0 %v828
    %1142 = vmatprep.subr.bf16.mxu0 0
    %1143 = vmatpush2.bf16.msra.mxu0 %v825
    %1144 = vmatprep.subr.bf16.mxu0 0
    %1145 = vmatpush2.bf16.msra.mxu0 %v822
    %1146 = vmatprep.subr.bf16.mxu0 0
    %1147 = vmatpush2.bf16.msra.mxu0 %v819
    %1148 = vmatprep.subr.bf16.mxu0 0
    %1149 = vmatpush2.bf16.msra.mxu0 %v816
    %1150 = vmatprep.subr.bf16.mxu0 0
    %1151 = vmatpush2.bf16.msra.mxu0 %v813
    %1152 = vmatprep.subr.bf16.mxu0 0
    %1153 = vmatpush2.bf16.msra.mxu0 %v810
    %1154 = vmatprep.subr.bf16.mxu0 0
    %1155 = vmatpush2.bf16.msra.mxu0 %v807
    %1156 = vmatprep.mubr.bf16.mxu0 %v256
    %1157 = vmatmul.mubr.bf16.gmra.mxu0 %v255
    %v1158 = vpop.f32.mrf.mxu0
    %v1159 = vadd.f32 %v417, %v1158
    %v1160 = vpop.f32.mrf.mxu0
    %v1161 = vpop.f32.mrf.mxu0
    %v1162 = vpop.f32.mrf.mxu0
    %1163 = vdwg.mxu0
    %1164 = vmatprep.subr.bf16.mxu0 0
    %1165 = vmatpush1.bf16.msra.mxu0 %v852
    %1166 = vmatprep.subr.bf16.mxu0 0
    %1167 = vmatpush1.bf16.msra.mxu0 %v849
    %1168 = vmatprep.subr.bf16.mxu0 0
    %1169 = vmatpush1.bf16.msra.mxu0 %v846
    %1170 = vmatprep.subr.bf16.mxu0 0
    %1171 = vmatpush1.bf16.msra.mxu0 %v843
    %1172 = vmatprep.subr.bf16.mxu0 0
    %1173 = vmatpush1.bf16.msra.mxu0 %v840
    %1174 = vmatprep.subr.bf16.mxu0 0
    %1175 = vmatpush1.bf16.msra.mxu0 %v837
    %1176 = vmatprep.subr.bf16.mxu0 0
    %1177 = vmatpush1.bf16.msra.mxu0 %v834
    %1178 = vmatprep.subr.bf16.mxu0 0
    %1179 = vmatpush1.bf16.msra.mxu0 %v831
    %1180 = vmatprep.subr.bf16.mxu0 0
    %1181 = vmatpush2.bf16.msra.mxu0 %v876
    %1182 = vmatprep.subr.bf16.mxu0 0
    %1183 = vmatpush2.bf16.msra.mxu0 %v873
    %1184 = vmatprep.subr.bf16.mxu0 0
    %1185 = vmatpush2.bf16.msra.mxu0 %v870
    %1186 = vmatprep.subr.bf16.mxu0 0
    %1187 = vmatpush2.bf16.msra.mxu0 %v867
    %1188 = vmatprep.subr.bf16.mxu0 0
    %1189 = vmatpush2.bf16.msra.mxu0 %v864
    %1190 = vmatprep.subr.bf16.mxu0 0
    %1191 = vmatpush2.bf16.msra.mxu0 %v861
    %1192 = vmatprep.subr.bf16.mxu0 0
    %1193 = vmatpush2.bf16.msra.mxu0 %v858
    %1194 = vmatprep.subr.bf16.mxu0 0
    %1195 = vmatpush2.bf16.msra.mxu0 %v855
    %1196 = vmatprep.mubr.bf16.mxu0 %v258
    %1197 = vmatmul.mubr.bf16.gmra.mxu0 %v257
    %v1198 = vpop.f32.mrf.mxu0
    %v1199 = vadd.f32 %v1159, %v1198
    %v1200 = vpop.f32.mrf.mxu0
    %v1201 = vpop.f32.mrf.mxu0
    %v1202 = vpop.f32.mrf.mxu0
    %1203 = vdwg.mxu0
    %1204 = vmatprep.subr.bf16.mxu0 0
    %1205 = vmatpush1.bf16.msra.mxu0 0
    %1206 = vmatprep.subr.bf16.mxu0 0
    %1207 = vmatpush1.bf16.msra.mxu0 0
    %1208 = vmatprep.subr.bf16.mxu0 0
    %1209 = vmatpush1.bf16.msra.mxu0 0
    %1210 = vmatprep.subr.bf16.mxu0 0
    %1211 = vmatpush1.bf16.msra.mxu0 0
    %1212 = vmatprep.subr.bf16.mxu0 0
    %1213 = vmatpush1.bf16.msra.mxu0 %v888
    %1214 = vmatprep.subr.bf16.mxu0 0
    %1215 = vmatpush1.bf16.msra.mxu0 %v885
    %1216 = vmatprep.subr.bf16.mxu0 0
    %1217 = vmatpush1.bf16.msra.mxu0 %v882
    %1218 = vmatprep.subr.bf16.mxu0 0
    %1219 = vmatpush1.bf16.msra.mxu0 %v879
    %1220 = vmatprep.subr.bf16.mxu0 0
    %1221 = vmatpush2.bf16.msra.mxu0 0
    %1222 = vmatprep.subr.bf16.mxu0 0
    %1223 = vmatpush2.bf16.msra.mxu0 0
    %1224 = vmatprep.subr.bf16.mxu0 0
    %1225 = vmatpush2.bf16.msra.mxu0 0
    %1226 = vmatprep.subr.bf16.mxu0 0
    %1227 = vmatpush2.bf16.msra.mxu0 0
    %1228 = vmatprep.subr.bf16.mxu0 0
    %1229 = vmatpush2.bf16.msra.mxu0 0
    %1230 = vmatprep.subr.bf16.mxu0 0
    %1231 = vmatpush2.bf16.msra.mxu0 0
    %1232 = vmatprep.subr.bf16.mxu0 0
    %1233 = vmatpush2.bf16.msra.mxu0 0
    %1234 = vmatprep.subr.bf16.mxu0 0
    %1235 = vmatpush2.bf16.msra.mxu0 0
    %1236 = vmatprep.mubr.bf16.mxu0 0
    %1237 = vmatmul.mubr.bf16.gmra.mxu0 %v999
    %v1238 = vpop.f32.mrf.mxu0
    %v1239 = vadd.f32 %v1199, %v1238
    %v1240 = vpop.f32.mrf.mxu0
    %v1241 = vpop.f32.mrf.mxu0
    %v1242 = vpop.f32.mrf.mxu0
    %1243 = vdwg.mxu0
    %v1244 = vmax.f32 %v1118, 0.0
    %v1245 = vmax.f32 %v1120, 0.0
    %v1246 = vmax.f32 %v1239, 0.0
    %v1247 = vpack.c.bf16 %v1244, %v1244
    %v1248 = vpack.c.bf16 %v1245, %v1245
    %v1249 = vpack.c.bf16 %v1246, %v1246
    %v1250 = vld [vmem:[%s5] sm:$0xff]
    %v1251 = vld [vmem:[%s5 + $0x8] sm:$0xff]
    %v1252 = vld [vmem:[%s5 + $0x10] sm:$0xff]
    %v1253 = vld [vmem:[%s5 + $0x18] sm:$0xff]
    %v1254 = vld [vmem:[%s5 + $0x20] sm:$0xff]
    %v1255 = vld [vmem:[%s5 + $0x28] sm:$0xff]
    %v1256 = vld [vmem:[%s5 + $0x30] sm:$0xff]
    %v1257 = vld [vmem:[%s5 + $0x38] sm:$0xff]
    %v1258 = vld [vmem:[%s5 + $0x40] sm:$0xff]
    %v1259 = vld [vmem:[%s5 + $0x48] sm:$0xff]
    %v1260 = vld [vmem:[%s5 + $0x50] sm:$0xff]
    %v1261 = vld [vmem:[%s5 + $0x58] sm:$0xff]
    %v1262 = vld [vmem:[%s5 + $0x60] sm:$0xff]
    %v1263 = vld [vmem:[%s5 + $0x68] sm:$0xff]
    %v1264 = vld [vmem:[%s5 + $0x70] sm:$0xff]
    %v1265 = vld [vmem:[%s5 + $0x78] sm:$0xff]
    %v1266 = vld [vmem:[%s5 + $0x80] sm:$0xff]
    %v1267 = vld [vmem:[%s5 + $0x88] sm:$0xff]
    %v1268 = vld [vmem:[%s5 + $0x90] sm:$0xff]
    %v1269 = vld [vmem:[%s5 + $0x98] sm:$0xff]
    %v1270 = vld [vmem:[%s5 + $0xa0] sm:$0xff]
    %v1271 = vld [vmem:[%s5 + $0xa8] sm:$0xff]
    %v1272 = vld [vmem:[%s5 + $0xb0] sm:$0xff]
    %v1273 = vld [vmem:[%s5 + $0xb8] sm:$0xff]
    %v1274 = vld [vmem:[%s5 + $0xc0] sm:$0xff]
    %v1275 = vld [vmem:[%s5 + $0xc8] sm:$0xff]
    %v1276 = vld [vmem:[%s5 + $0xd0] sm:$0xff]
    %v1277 = vld [vmem:[%s5 + $0xd8] sm:$0xff]
    %v1278 = vld [vmem:[%s5 + $0xe0] sm:$0xff]
    %v1279 = vld [vmem:[%s5 + $0xe8] sm:$0xff]
    %v1280 = vld [vmem:[%s5 + $0xf0] sm:$0xff]
    %v1281 = vld [vmem:[%s5 + $0xf8] sm:$0xff]
    %v1282 = vld [vmem:[%s5 + $0x100] sm:$0xff]
    %v1283 = vld [vmem:[%s5 + $0x108] sm:$0xff]
    %v1284 = vld [vmem:[%s5 + $0x110] sm:$0xff]
    %v1285 = vld [vmem:[%s5 + $0x118] sm:$0xff]
    %v1286 = vld [vmem:[%s5 + $0x120] sm:$0xff]
    %v1287 = vld [vmem:[%s5 + $0x128] sm:$0xff]
    %v1288 = vld [vmem:[%s5 + $0x130] sm:$0xff]
    %v1289 = vld [vmem:[%s5 + $0x138] sm:$0xff]
    %v1290 = vld [vmem:[%s5 + $0x140] sm:$0xff]
    %v1291 = vld [vmem:[%s5 + $0x148] sm:$0xff]
    %v1292 = vld [vmem:[%s5 + $0x150] sm:$0xff]
    %v1293 = vld [vmem:[%s5 + $0x158] sm:$0xff]
    %v1294 = vld [vmem:[%s5 + $0x160] sm:$0xff]
    %v1295 = vld [vmem:[%s5 + $0x168] sm:$0xff]
    %v1296 = vld [vmem:[%s5 + $0x170] sm:$0xff]
    %v1297 = vld [vmem:[%s5 + $0x178] sm:$0xff]
    %v1298 = vld [vmem:[%s5 + $0x180] sm:$0xff]
    %v1299 = vld [vmem:[%s5 + $0x188] sm:$0xff]
    %v1300 = vld [vmem:[%s5 + $0x190] sm:$0xff]
    %v1301 = vld [vmem:[%s5 + $0x198] sm:$0xff]
    %v1302 = vld [vmem:[%s5 + $0x1a0] sm:$0xff]
    %v1303 = vld [vmem:[%s5 + $0x1a8] sm:$0xff]
    %v1304 = vld [vmem:[%s5 + $0x1b0] sm:$0xff]
    %v1305 = vld [vmem:[%s5 + $0x1b8] sm:$0xff]
    %v1306 = vld [vmem:[%s5 + $0x1c0] sm:$0xff]
    %v1307 = vld [vmem:[%s5 + $0x1c8] sm:$0xff]
    %v1308 = vld [vmem:[%s5 + $0x1d0] sm:$0xff]
    %v1309 = vld [vmem:[%s5 + $0x1d8] sm:$0xff]
    %v1310 = vld [vmem:[%s5 + $0x1e0] sm:$0xff]
    %v1311 = vld [vmem:[%s5 + $0x1e8] sm:$0xff]
    %v1312 = vld [vmem:[%s5 + $0x1f0] sm:$0xff]
    %v1313 = vld [vmem:[%s5 + $0x1f8] sm:$0xff]
    %v1314 = vld [vmem:[%s5 + $0x200] sm:$0xff]
    %v1315 = vld [vmem:[%s5 + $0x208] sm:$0xff]
    %v1316 = vld [vmem:[%s5 + $0x210] sm:$0xff]
    %v1317 = vld [vmem:[%s5 + $0x218] sm:$0xff]
    %v1318 = vld [vmem:[%s5 + $0x220] sm:$0xff]
    %v1319 = vld [vmem:[%s5 + $0x228] sm:$0xff]
    %v1320 = vld [vmem:[%s5 + $0x230] sm:$0xff]
    %v1321 = vld [vmem:[%s5 + $0x238] sm:$0xff]
    %s1322 = scalar_lea.vmem %s5, 576
    %v1323 = vld [vmem:[%s1322] sm:$0xff]
    %v1324 = vld [vmem:[%s1322 + $0x8] sm:$0xff]
    %v1325 = vld [vmem:[%s1322 + $0x10] sm:$0xff]
    %v1326 = vld [vmem:[%s1322 + $0x18] sm:$0xff]
    %v1327 = vld [vmem:[%s1322 + $0x20] sm:$0xff]
    %v1328 = vld [vmem:[%s1322 + $0x28] sm:$0xff]
    %v1329 = vld [vmem:[%s1322 + $0x30] sm:$0xff]
    %v1330 = vld [vmem:[%s1322 + $0x38] sm:$0xff]
    %v1331 = vld [vmem:[%s1322 + $0x40] sm:$0xff]
    %v1332 = vld [vmem:[%s1322 + $0x48] sm:$0xff]
    %v1333 = vld [vmem:[%s1322 + $0x50] sm:$0xff]
    %v1334 = vld [vmem:[%s1322 + $0x58] sm:$0xff]
    %v1335 = vld [vmem:[%s1322 + $0x60] sm:$0xff]
    %v1336 = vld [vmem:[%s1322 + $0x68] sm:$0xff]
    %v1337 = vld [vmem:[%s1322 + $0x70] sm:$0xff]
    %v1338 = vld [vmem:[%s1322 + $0x78] sm:$0xff]
    %v1339 = vld [vmem:[%s1322 + $0x80] sm:$0xff]
    %v1340 = vld [vmem:[%s1322 + $0x88] sm:$0xff]
    %v1341 = vld [vmem:[%s1322 + $0x90] sm:$0xff]
    %v1342 = vld [vmem:[%s1322 + $0x98] sm:$0xff]
    %v1343 = vld [vmem:[%s1322 + $0xa0] sm:$0xff]
    %v1344 = vld [vmem:[%s1322 + $0xa8] sm:$0xff]
    %v1345 = vld [vmem:[%s1322 + $0xb0] sm:$0xff]
    %v1346 = vld [vmem:[%s1322 + $0xb8] sm:$0xff]
    %v1347 = vld [vmem:[%s1322 + $0xc0] sm:$0xff]
    %v1348 = vld [vmem:[%s1322 + $0xc8] sm:$0xff]
    %v1349 = vld [vmem:[%s1322 + $0xd0] sm:$0xff]
    %v1350 = vld [vmem:[%s1322 + $0xd8] sm:$0xff]
    %v1351 = vld [vmem:[%s1322 + $0xe0] sm:$0xff]
    %v1352 = vld [vmem:[%s1322 + $0xe8] sm:$0xff]
    %v1353 = vld [vmem:[%s1322 + $0xf0] sm:$0xff]
    %v1354 = vld [vmem:[%s1322 + $0xf8] sm:$0xff]
    %v1355 = vld [vmem:[%s1322 + $0x100] sm:$0xff]
    %v1356 = vld [vmem:[%s1322 + $0x108] sm:$0xff]
    %v1357 = vld [vmem:[%s1322 + $0x110] sm:$0xff]
    %v1358 = vld [vmem:[%s1322 + $0x118] sm:$0xff]
    %v1359 = vld [vmem:[%s1322 + $0x120] sm:$0xff]
    %v1360 = vld [vmem:[%s1322 + $0x128] sm:$0xff]
    %v1361 = vld [vmem:[%s1322 + $0x130] sm:$0xff]
    %v1362 = vld [vmem:[%s1322 + $0x138] sm:$0xff]
    %v1363 = vld [vmem:[%s1322 + $0x140] sm:$0xff]
    %v1364 = vld [vmem:[%s1322 + $0x148] sm:$0xff]
    %v1365 = vld [vmem:[%s1322 + $0x150] sm:$0xff]
    %v1366 = vld [vmem:[%s1322 + $0x158] sm:$0xff]
    %v1367 = vld [vmem:[%s1322 + $0x160] sm:$0xff]
    %v1368 = vld [vmem:[%s1322 + $0x168] sm:$0xff]
    %v1369 = vld [vmem:[%s1322 + $0x170] sm:$0xff]
    %v1370 = vld [vmem:[%s1322 + $0x178] sm:$0xff]
    %v1371 = vld [vmem:[%s1322 + $0x180] sm:$0xff]
    %v1372 = vld [vmem:[%s1322 + $0x188] sm:$0xff]
    %v1373 = vld [vmem:[%s1322 + $0x190] sm:$0xff]
    %v1374 = vld [vmem:[%s1322 + $0x198] sm:$0xff]
    %v1375 = vld [vmem:[%s1322 + $0x1a0] sm:$0xff]
    %v1376 = vld [vmem:[%s1322 + $0x1a8] sm:$0xff]
    %v1377 = vld [vmem:[%s1322 + $0x1b0] sm:$0xff]
    %v1378 = vld [vmem:[%s1322 + $0x1b8] sm:$0xff]
    %v1379 = vld [vmem:[%s1322 + $0x1c0] sm:$0xff]
    %v1380 = vld [vmem:[%s1322 + $0x1c8] sm:$0xff]
    %v1381 = vld [vmem:[%s1322 + $0x1d0] sm:$0xff]
    %v1382 = vld [vmem:[%s1322 + $0x1d8] sm:$0xff]
    %v1383 = vld [vmem:[%s1322 + $0x1e0] sm:$0xff]
    %v1384 = vld [vmem:[%s1322 + $0x1e8] sm:$0xff]
    %v1385 = vld [vmem:[%s1322 + $0x1f0] sm:$0xff]
    %v1386 = vld [vmem:[%s1322 + $0x1f8] sm:$0xff]
    %v1387 = vld [vmem:[%s1322 + $0x200] sm:$0xff]
    %v1388 = vld [vmem:[%s1322 + $0x208] sm:$0xff]
    %v1389 = vld [vmem:[%s1322 + $0x210] sm:$0xff]
    %v1390 = vld [vmem:[%s1322 + $0x218] sm:$0xff]
    %v1391 = vld [vmem:[%s1322 + $0x220] sm:$0xff]
    %v1392 = vld [vmem:[%s1322 + $0x228] sm:$0xff]
    %v1393 = vld [vmem:[%s1322 + $0x230] sm:$0xff]
    %v1394 = vld [vmem:[%s1322 + $0x238] sm:$0xff]
    %v1398 = vrot.slane %v1247, 1
    %v1399 = vrot.slane %v1248, 1
    %v1400 = vrot.slane %v1249, 1
    %v1475 = vunpack.c.l.b16 %v1323
    %v1476 = vunpack.c.h.b16 %v1323
    %v1477 = vunpack.c.l.b16 %v1324
    %v1478 = vunpack.c.h.b16 %v1324
    %v1479 = vunpack.c.l.b16 %v1325
    %v1480 = vunpack.c.h.b16 %v1325
    %v1481 = vunpack.c.l.b16 %v1326
    %v1482 = vunpack.c.h.b16 %v1326
    %v1483 = vunpack.c.l.b16 %v1327
    %v1484 = vunpack.c.h.b16 %v1327
    %v1485 = vunpack.c.l.b16 %v1328
    %v1486 = vunpack.c.h.b16 %v1328
    %v1487 = vunpack.c.l.b16 %v1329
    %v1488 = vunpack.c.h.b16 %v1329
    %v1489 = vunpack.c.l.b16 %v1330
    %v1490 = vunpack.c.h.b16 %v1330
    %v1491 = vunpack.c.l.b16 %v1331
    %v1492 = vunpack.c.h.b16 %v1331
    %v1493 = vunpack.c.l.b16 %v1332
    %v1494 = vunpack.c.h.b16 %v1332
    %v1495 = vunpack.c.l.b16 %v1333
    %v1496 = vunpack.c.h.b16 %v1333
    %v1497 = vunpack.c.l.b16 %v1334
    %v1498 = vunpack.c.h.b16 %v1334
    %v1499 = vunpack.c.l.b16 %v1335
    %v1500 = vunpack.c.h.b16 %v1335
    %v1501 = vunpack.c.l.b16 %v1336
    %v1502 = vunpack.c.h.b16 %v1336
    %v1503 = vunpack.c.l.b16 %v1337
    %v1504 = vunpack.c.h.b16 %v1337
    %v1505 = vunpack.c.l.b16 %v1338
    %v1506 = vunpack.c.h.b16 %v1338
    %v1507 = vunpack.c.l.b16 %v1339
    %v1508 = vunpack.c.h.b16 %v1339
    %v1509 = vunpack.c.l.b16 %v1340
    %v1510 = vunpack.c.h.b16 %v1340
    %v1511 = vunpack.c.l.b16 %v1341
    %v1512 = vunpack.c.h.b16 %v1341
    %v1513 = vunpack.c.l.b16 %v1342
    %v1514 = vunpack.c.h.b16 %v1342
    %v1515 = vunpack.c.l.b16 %v1343
    %v1516 = vunpack.c.h.b16 %v1343
    %v1517 = vunpack.c.l.b16 %v1344
    %v1518 = vunpack.c.h.b16 %v1344
    %v1519 = vunpack.c.l.b16 %v1345
    %v1520 = vunpack.c.h.b16 %v1345
    %v1521 = vunpack.c.l.b16 %v1346
    %v1522 = vunpack.c.h.b16 %v1346
    %v1523 = vunpack.c.l.b16 %v1347
    %v1524 = vunpack.c.h.b16 %v1347
    %v1525 = vunpack.c.l.b16 %v1348
    %v1526 = vunpack.c.h.b16 %v1348
    %v1527 = vunpack.c.l.b16 %v1349
    %v1528 = vunpack.c.h.b16 %v1349
    %v1529 = vunpack.c.l.b16 %v1350
    %v1530 = vunpack.c.h.b16 %v1350
    %v1531 = vunpack.c.l.b16 %v1351
    %v1532 = vunpack.c.h.b16 %v1351
    %v1533 = vunpack.c.l.b16 %v1352
    %v1534 = vunpack.c.h.b16 %v1352
    %v1535 = vunpack.c.l.b16 %v1353
    %v1536 = vunpack.c.h.b16 %v1353
    %v1537 = vunpack.c.l.b16 %v1354
    %v1538 = vunpack.c.h.b16 %v1354
    %v1539 = vunpack.c.l.b16 %v1355
    %v1540 = vunpack.c.h.b16 %v1355
    %v1541 = vunpack.c.l.b16 %v1356
    %v1542 = vunpack.c.h.b16 %v1356
    %v1543 = vunpack.c.l.b16 %v1357
    %v1544 = vunpack.c.h.b16 %v1357
    %v1545 = vunpack.c.l.b16 %v1358
    %v1546 = vunpack.c.h.b16 %v1358
    %v1547 = vunpack.c.l.b16 %v1359
    %v1548 = vunpack.c.h.b16 %v1359
    %v1549 = vunpack.c.l.b16 %v1360
    %v1550 = vunpack.c.h.b16 %v1360
    %v1551 = vunpack.c.l.b16 %v1361
    %v1552 = vunpack.c.h.b16 %v1361
    %v1553 = vunpack.c.l.b16 %v1362
    %v1554 = vunpack.c.h.b16 %v1362
    %v1555 = vunpack.c.l.b16 %v1363
    %v1556 = vunpack.c.h.b16 %v1363
    %v1557 = vunpack.c.l.b16 %v1364
    %v1558 = vunpack.c.h.b16 %v1364
    %v1559 = vunpack.c.l.b16 %v1365
    %v1560 = vunpack.c.h.b16 %v1365
    %v1561 = vunpack.c.l.b16 %v1366
    %v1562 = vunpack.c.h.b16 %v1366
    %v1563 = vunpack.c.l.b16 %v1367
    %v1564 = vunpack.c.h.b16 %v1367
    %v1565 = vunpack.c.l.b16 %v1368
    %v1566 = vunpack.c.h.b16 %v1368
    %v1567 = vunpack.c.l.b16 %v1369
    %v1568 = vunpack.c.h.b16 %v1369
    %v1569 = vunpack.c.l.b16 %v1370
    %v1570 = vunpack.c.h.b16 %v1370
    %v1571 = vunpack.c.l.b16 %v1371
    %v1572 = vunpack.c.h.b16 %v1371
    %v1573 = vunpack.c.l.b16 %v1372
    %v1574 = vunpack.c.h.b16 %v1372
    %v1575 = vunpack.c.l.b16 %v1373
    %v1576 = vunpack.c.h.b16 %v1373
    %v1577 = vunpack.c.l.b16 %v1374
    %v1578 = vunpack.c.h.b16 %v1374
    %v1579 = vunpack.c.l.b16 %v1375
    %v1580 = vunpack.c.h.b16 %v1375
    %v1581 = vunpack.c.l.b16 %v1376
    %v1582 = vunpack.c.h.b16 %v1376
    %v1583 = vunpack.c.l.b16 %v1377
    %v1584 = vunpack.c.h.b16 %v1377
    %v1585 = vunpack.c.l.b16 %v1378
    %v1586 = vunpack.c.h.b16 %v1378
    %v1587 = vunpack.c.l.b16 %v1379
    %v1588 = vunpack.c.h.b16 %v1379
    %v1589 = vunpack.c.l.b16 %v1380
    %v1590 = vunpack.c.h.b16 %v1380
    %v1591 = vunpack.c.l.b16 %v1381
    %v1592 = vunpack.c.h.b16 %v1381
    %v1593 = vunpack.c.l.b16 %v1382
    %v1594 = vunpack.c.h.b16 %v1382
    %v1595 = vunpack.c.l.b16 %v1383
    %v1596 = vunpack.c.h.b16 %v1383
    %v1597 = vunpack.c.l.b16 %v1384
    %v1598 = vunpack.c.h.b16 %v1384
    %v1599 = vunpack.c.l.b16 %v1385
    %v1600 = vunpack.c.h.b16 %v1385
    %v1601 = vunpack.c.l.b16 %v1386
    %v1602 = vunpack.c.h.b16 %v1386
    %v1603 = vunpack.c.l.b16 %v1387
    %v1604 = vunpack.c.h.b16 %v1387
    %v1605 = vunpack.c.l.b16 %v1388
    %v1606 = vunpack.c.h.b16 %v1388
    %v1607 = vunpack.c.l.b16 %v1389
    %v1608 = vunpack.c.h.b16 %v1389
    %v1609 = vunpack.c.l.b16 %v1390
    %v1610 = vunpack.c.h.b16 %v1390
    %v1611 = vunpack.c.l.b16 %v1391
    %v1612 = vunpack.c.h.b16 %v1391
    %v1613 = vunpack.c.l.b16 %v1392
    %v1614 = vunpack.c.h.b16 %v1392
    %v1615 = vunpack.c.l.b16 %v1393
    %v1616 = vunpack.c.h.b16 %v1393
    %v1617 = vunpack.c.l.b16 %v1394
    %v1618 = vunpack.c.h.b16 %v1394
    %v1619 = vpack.c.b16 %v1479, %v1475
    %v1620 = vpack.c.b16 %v1480, %v1476
    %v1621 = vpack.c.b16 %v1481, %v1477
    %v1622 = vpack.c.b16 %v1482, %v1478
    %v1623 = vpack.c.b16 %v1487, %v1483
    %v1624 = vpack.c.b16 %v1488, %v1484
    %v1625 = vpack.c.b16 %v1489, %v1485
    %v1626 = vpack.c.b16 %v1490, %v1486
    %v1627 = vpack.c.b16 %v1495, %v1491
    %v1628 = vpack.c.b16 %v1496, %v1492
    %v1629 = vpack.c.b16 %v1497, %v1493
    %v1630 = vpack.c.b16 %v1498, %v1494
    %v1631 = vpack.c.b16 %v1503, %v1499
    %v1632 = vpack.c.b16 %v1504, %v1500
    %v1633 = vpack.c.b16 %v1505, %v1501
    %v1634 = vpack.c.b16 %v1506, %v1502
    %v1635 = vpack.c.b16 %v1511, %v1507
    %v1636 = vpack.c.b16 %v1512, %v1508
    %v1637 = vpack.c.b16 %v1513, %v1509
    %v1638 = vpack.c.b16 %v1514, %v1510
    %v1639 = vpack.c.b16 %v1519, %v1515
    %v1640 = vpack.c.b16 %v1520, %v1516
    %v1641 = vpack.c.b16 %v1521, %v1517
    %v1642 = vpack.c.b16 %v1522, %v1518
    %v1643 = vpack.c.b16 %v1527, %v1523
    %v1644 = vpack.c.b16 %v1528, %v1524
    %v1645 = vpack.c.b16 %v1529, %v1525
    %v1646 = vpack.c.b16 %v1530, %v1526
    %v1647 = vpack.c.b16 %v1535, %v1531
    %v1648 = vpack.c.b16 %v1536, %v1532
    %v1649 = vpack.c.b16 %v1537, %v1533
    %v1650 = vpack.c.b16 %v1538, %v1534
    %v1651 = vpack.c.b16 %v1543, %v1539
    %v1652 = vpack.c.b16 %v1544, %v1540
    %v1653 = vpack.c.b16 %v1545, %v1541
    %v1654 = vpack.c.b16 %v1546, %v1542
    %v1655 = vpack.c.b16 %v1551, %v1547
    %v1656 = vpack.c.b16 %v1552, %v1548
    %v1657 = vpack.c.b16 %v1553, %v1549
    %v1658 = vpack.c.b16 %v1554, %v1550
    %v1659 = vpack.c.b16 %v1559, %v1555
    %v1660 = vpack.c.b16 %v1560, %v1556
    %v1661 = vpack.c.b16 %v1561, %v1557
    %v1662 = vpack.c.b16 %v1562, %v1558
    %v1663 = vpack.c.b16 %v1567, %v1563
    %v1664 = vpack.c.b16 %v1568, %v1564
    %v1665 = vpack.c.b16 %v1569, %v1565
    %v1666 = vpack.c.b16 %v1570, %v1566
    %v1667 = vpack.c.b16 %v1575, %v1571
    %v1668 = vpack.c.b16 %v1576, %v1572
    %v1669 = vpack.c.b16 %v1577, %v1573
    %v1670 = vpack.c.b16 %v1578, %v1574
    %v1671 = vpack.c.b16 %v1583, %v1579
    %v1672 = vpack.c.b16 %v1584, %v1580
    %v1673 = vpack.c.b16 %v1585, %v1581
    %v1674 = vpack.c.b16 %v1586, %v1582
    %v1675 = vpack.c.b16 %v1591, %v1587
    %v1676 = vpack.c.b16 %v1592, %v1588
    %v1677 = vpack.c.b16 %v1593, %v1589
    %v1678 = vpack.c.b16 %v1594, %v1590
    %v1679 = vpack.c.b16 %v1599, %v1595
    %v1680 = vpack.c.b16 %v1600, %v1596
    %v1681 = vpack.c.b16 %v1601, %v1597
    %v1682 = vpack.c.b16 %v1602, %v1598
    %v1683 = vpack.c.b16 %v1607, %v1603
    %v1684 = vpack.c.b16 %v1608, %v1604
    %v1685 = vpack.c.b16 %v1609, %v1605
    %v1686 = vpack.c.b16 %v1610, %v1606
    %v1687 = vpack.c.b16 %v1615, %v1611
    %v1688 = vpack.c.b16 %v1616, %v1612
    %v1689 = vpack.c.b16 %v1617, %v1613
    %v1690 = vpack.c.b16 %v1618, %v1614
    %v1764 = vsel %vm202, %v1400, 0
    %1766 = vmatprep.subr.bf16.mxu0 %v1648
    %1767 = vmatpush1.bf16.msra.mxu0 %v1647
    %1768 = vmatprep.subr.bf16.mxu0 %v1644
    %1769 = vmatpush1.bf16.msra.mxu0 %v1643
    %1770 = vmatprep.subr.bf16.mxu0 %v1640
    %1771 = vmatpush1.bf16.msra.mxu0 %v1639
    %1772 = vmatprep.subr.bf16.mxu0 %v1636
    %1773 = vmatpush1.bf16.msra.mxu0 %v1635
    %1774 = vmatprep.subr.bf16.mxu0 %v1632
    %1775 = vmatpush1.bf16.msra.mxu0 %v1631
    %1776 = vmatprep.subr.bf16.mxu0 %v1628
    %1777 = vmatpush1.bf16.msra.mxu0 %v1627
    %1778 = vmatprep.subr.bf16.mxu0 %v1624
    %1779 = vmatpush1.bf16.msra.mxu0 %v1623
    %1780 = vmatprep.subr.bf16.mxu0 %v1620
    %1781 = vmatpush1.bf16.msra.mxu0 %v1619
    %1782 = vmatprep.subr.bf16.mxu0 %v1680
    %1783 = vmatpush2.bf16.msra.mxu0 %v1679
    %1784 = vmatprep.subr.bf16.mxu0 %v1676
    %1785 = vmatpush2.bf16.msra.mxu0 %v1675
    %1786 = vmatprep.subr.bf16.mxu0 %v1672
    %1787 = vmatpush2.bf16.msra.mxu0 %v1671
    %1788 = vmatprep.subr.bf16.mxu0 %v1668
    %1789 = vmatpush2.bf16.msra.mxu0 %v1667
    %1790 = vmatprep.subr.bf16.mxu0 %v1664
    %1791 = vmatpush2.bf16.msra.mxu0 %v1663
    %1792 = vmatprep.subr.bf16.mxu0 %v1660
    %1793 = vmatpush2.bf16.msra.mxu0 %v1659
    %1794 = vmatprep.subr.bf16.mxu0 %v1656
    %1795 = vmatpush2.bf16.msra.mxu0 %v1655
    %1796 = vmatprep.subr.bf16.mxu0 %v1652
    %1797 = vmatpush2.bf16.msra.mxu0 %v1651
    %1798 = vmatprep.mubr.bf16.mxu0 %v1399
    %1799 = vmatmul.mubr.bf16.gmra.mxu0 %v1398
    %v1800 = vpop.f32.mrf.mxu0
    %v1801 = vadd.f32 0.0, %v1800
    %v1802 = vpop.f32.mrf.mxu0
    %v1803 = vadd.f32 0.0, %v1802
    %v1804 = vpop.f32.mrf.mxu0
    %v1805 = vpop.f32.mrf.mxu0
    %1806 = vdwg.mxu0
    %1807 = vmatprep.subr.bf16.mxu0 0
    %1808 = vmatpush1.bf16.msra.mxu0 0
    %1809 = vmatprep.subr.bf16.mxu0 0
    %1810 = vmatpush1.bf16.msra.mxu0 0
    %1811 = vmatprep.subr.bf16.mxu0 0
    %1812 = vmatpush1.bf16.msra.mxu0 0
    %1813 = vmatprep.subr.bf16.mxu0 0
    %1814 = vmatpush1.bf16.msra.mxu0 0
    %1815 = vmatprep.subr.bf16.mxu0 0
    %1816 = vmatpush1.bf16.msra.mxu0 0
    %1817 = vmatprep.subr.bf16.mxu0 0
    %1818 = vmatpush1.bf16.msra.mxu0 0
    %1819 = vmatprep.subr.bf16.mxu0 %v1688
    %1820 = vmatpush1.bf16.msra.mxu0 %v1687
    %1821 = vmatprep.subr.bf16.mxu0 %v1684
    %1822 = vmatpush1.bf16.msra.mxu0 %v1683
    %1823 = vmatprep.subr.bf16.mxu0 0
    %1824 = vmatpush2.bf16.msra.mxu0 0
    %1825 = vmatprep.subr.bf16.mxu0 0
    %1826 = vmatpush2.bf16.msra.mxu0 0
    %1827 = vmatprep.subr.bf16.mxu0 0
    %1828 = vmatpush2.bf16.msra.mxu0 0
    %1829 = vmatprep.subr.bf16.mxu0 0
    %1830 = vmatpush2.bf16.msra.mxu0 0
    %1831 = vmatprep.subr.bf16.mxu0 0
    %1832 = vmatpush2.bf16.msra.mxu0 0
    %1833 = vmatprep.subr.bf16.mxu0 0
    %1834 = vmatpush2.bf16.msra.mxu0 0
    %1835 = vmatprep.subr.bf16.mxu0 0
    %1836 = vmatpush2.bf16.msra.mxu0 0
    %1837 = vmatprep.subr.bf16.mxu0 0
    %1838 = vmatpush2.bf16.msra.mxu0 0
    %1839 = vmatprep.mubr.bf16.mxu0 0
    %1840 = vmatmul.mubr.bf16.gmra.mxu0 %v1764
    %v1841 = vpop.f32.mrf.mxu0
    %v1842 = vadd.f32 %v1801, %v1841
    %v1843 = vpop.f32.mrf.mxu0
    %v1844 = vadd.f32 %v1803, %v1843
    %v1845 = vpop.f32.mrf.mxu0
    %v1846 = vpop.f32.mrf.mxu0
    %1847 = vdwg.mxu0
    %1848 = vmatprep.subr.bf16.mxu0 %v1650
    %1849 = vmatpush1.bf16.msra.mxu0 %v1649
    %1850 = vmatprep.subr.bf16.mxu0 %v1646
    %1851 = vmatpush1.bf16.msra.mxu0 %v1645
    %1852 = vmatprep.subr.bf16.mxu0 %v1642
    %1853 = vmatpush1.bf16.msra.mxu0 %v1641
    %1854 = vmatprep.subr.bf16.mxu0 %v1638
    %1855 = vmatpush1.bf16.msra.mxu0 %v1637
    %1856 = vmatprep.subr.bf16.mxu0 %v1634
    %1857 = vmatpush1.bf16.msra.mxu0 %v1633
    %1858 = vmatprep.subr.bf16.mxu0 %v1630
    %1859 = vmatpush1.bf16.msra.mxu0 %v1629
    %1860 = vmatprep.subr.bf16.mxu0 %v1626
    %1861 = vmatpush1.bf16.msra.mxu0 %v1625
    %1862 = vmatprep.subr.bf16.mxu0 %v1622
    %1863 = vmatpush1.bf16.msra.mxu0 %v1621
    %1864 = vmatprep.subr.bf16.mxu0 %v1682
    %1865 = vmatpush2.bf16.msra.mxu0 %v1681
    %1866 = vmatprep.subr.bf16.mxu0 %v1678
    %1867 = vmatpush2.bf16.msra.mxu0 %v1677
    %1868 = vmatprep.subr.bf16.mxu0 %v1674
    %1869 = vmatpush2.bf16.msra.mxu0 %v1673
    %1870 = vmatprep.subr.bf16.mxu0 %v1670
    %1871 = vmatpush2.bf16.msra.mxu0 %v1669
    %1872 = vmatprep.subr.bf16.mxu0 %v1666
    %1873 = vmatpush2.bf16.msra.mxu0 %v1665
    %1874 = vmatprep.subr.bf16.mxu0 %v1662
    %1875 = vmatpush2.bf16.msra.mxu0 %v1661
    %1876 = vmatprep.subr.bf16.mxu0 %v1658
    %1877 = vmatpush2.bf16.msra.mxu0 %v1657
    %1878 = vmatprep.subr.bf16.mxu0 %v1654
    %1879 = vmatpush2.bf16.msra.mxu0 %v1653
    %1880 = vmatprep.mubr.bf16.mxu0 %v1399
    %1881 = vmatmul.mubr.bf16.gmra.mxu0 %v1398
    %v1882 = vpop.f32.mrf.mxu0
    %v1883 = vadd.f32 0.0, %v1882
    %v1884 = vpop.f32.mrf.mxu0
    %v1885 = vadd.f32 0.0, %v1884
    %v1886 = vpop.f32.mrf.mxu0
    %v1887 = vpop.f32.mrf.mxu0
    %1888 = vdwg.mxu0
    %1889 = vmatprep.subr.bf16.mxu0 0
    %1890 = vmatpush1.bf16.msra.mxu0 0
    %1891 = vmatprep.subr.bf16.mxu0 0
    %1892 = vmatpush1.bf16.msra.mxu0 0
    %1893 = vmatprep.subr.bf16.mxu0 0
    %1894 = vmatpush1.bf16.msra.mxu0 0
    %1895 = vmatprep.subr.bf16.mxu0 0
    %1896 = vmatpush1.bf16.msra.mxu0 0
    %1897 = vmatprep.subr.bf16.mxu0 0
    %1898 = vmatpush1.bf16.msra.mxu0 0
    %1899 = vmatprep.subr.bf16.mxu0 0
    %1900 = vmatpush1.bf16.msra.mxu0 0
    %1901 = vmatprep.subr.bf16.mxu0 %v1690
    %1902 = vmatpush1.bf16.msra.mxu0 %v1689
    %1903 = vmatprep.subr.bf16.mxu0 %v1686
    %1904 = vmatpush1.bf16.msra.mxu0 %v1685
    %1905 = vmatprep.subr.bf16.mxu0 0
    %1906 = vmatpush2.bf16.msra.mxu0 0
    %1907 = vmatprep.subr.bf16.mxu0 0
    %1908 = vmatpush2.bf16.msra.mxu0 0
    %1909 = vmatprep.subr.bf16.mxu0 0
    %1910 = vmatpush2.bf16.msra.mxu0 0
    %1911 = vmatprep.subr.bf16.mxu0 0
    %1912 = vmatpush2.bf16.msra.mxu0 0
    %1913 = vmatprep.subr.bf16.mxu0 0
    %1914 = vmatpush2.bf16.msra.mxu0 0
    %1915 = vmatprep.subr.bf16.mxu0 0
    %1916 = vmatpush2.bf16.msra.mxu0 0
    %1917 = vmatprep.subr.bf16.mxu0 0
    %1918 = vmatpush2.bf16.msra.mxu0 0
    %1919 = vmatprep.subr.bf16.mxu0 0
    %1920 = vmatpush2.bf16.msra.mxu0 0
    %1921 = vmatprep.mubr.bf16.mxu0 0
    %1922 = vmatmul.mubr.bf16.gmra.mxu0 %v1764
    %v1923 = vpop.f32.mrf.mxu0
    %v1924 = vadd.f32 %v1883, %v1923
    %v1925 = vpop.f32.mrf.mxu0
    %v1926 = vadd.f32 %v1885, %v1925
    %v1927 = vpop.f32.mrf.mxu0
    %v1928 = vpop.f32.mrf.mxu0
    %1929 = vdwg.mxu0
    %v2002 = vunpack.c.l.b16 %v1250
    %v2003 = vunpack.c.h.b16 %v1250
    %v2004 = vunpack.c.l.b16 %v1251
    %v2005 = vunpack.c.h.b16 %v1251
    %v2006 = vunpack.c.l.b16 %v1252
    %v2007 = vunpack.c.h.b16 %v1252
    %v2008 = vunpack.c.l.b16 %v1253
    %v2009 = vunpack.c.h.b16 %v1253
    %v2010 = vunpack.c.l.b16 %v1254
    %v2011 = vunpack.c.h.b16 %v1254
    %v2012 = vunpack.c.l.b16 %v1255
    %v2013 = vunpack.c.h.b16 %v1255
    %v2014 = vunpack.c.l.b16 %v1256
    %v2015 = vunpack.c.h.b16 %v1256
    %v2016 = vunpack.c.l.b16 %v1257
    %v2017 = vunpack.c.h.b16 %v1257
    %v2018 = vunpack.c.l.b16 %v1258
    %v2019 = vunpack.c.h.b16 %v1258
    %v2020 = vunpack.c.l.b16 %v1259
    %v2021 = vunpack.c.h.b16 %v1259
    %v2022 = vunpack.c.l.b16 %v1260
    %v2023 = vunpack.c.h.b16 %v1260
    %v2024 = vunpack.c.l.b16 %v1261
    %v2025 = vunpack.c.h.b16 %v1261
    %v2026 = vunpack.c.l.b16 %v1262
    %v2027 = vunpack.c.h.b16 %v1262
    %v2028 = vunpack.c.l.b16 %v1263
    %v2029 = vunpack.c.h.b16 %v1263
    %v2030 = vunpack.c.l.b16 %v1264
    %v2031 = vunpack.c.h.b16 %v1264
    %v2032 = vunpack.c.l.b16 %v1265
    %v2033 = vunpack.c.h.b16 %v1265
    %v2034 = vunpack.c.l.b16 %v1266
    %v2035 = vunpack.c.h.b16 %v1266
    %v2036 = vunpack.c.l.b16 %v1267
    %v2037 = vunpack.c.h.b16 %v1267
    %v2038 = vunpack.c.l.b16 %v1268
    %v2039 = vunpack.c.h.b16 %v1268
    %v2040 = vunpack.c.l.b16 %v1269
    %v2041 = vunpack.c.h.b16 %v1269
    %v2042 = vunpack.c.l.b16 %v1270
    %v2043 = vunpack.c.h.b16 %v1270
    %v2044 = vunpack.c.l.b16 %v1271
    %v2045 = vunpack.c.h.b16 %v1271
    %v2046 = vunpack.c.l.b16 %v1272
    %v2047 = vunpack.c.h.b16 %v1272
    %v2048 = vunpack.c.l.b16 %v1273
    %v2049 = vunpack.c.h.b16 %v1273
    %v2050 = vunpack.c.l.b16 %v1274
    %v2051 = vunpack.c.h.b16 %v1274
    %v2052 = vunpack.c.l.b16 %v1275
    %v2053 = vunpack.c.h.b16 %v1275
    %v2054 = vunpack.c.l.b16 %v1276
    %v2055 = vunpack.c.h.b16 %v1276
    %v2056 = vunpack.c.l.b16 %v1277
    %v2057 = vunpack.c.h.b16 %v1277
    %v2058 = vunpack.c.l.b16 %v1278
    %v2059 = vunpack.c.h.b16 %v1278
    %v2060 = vunpack.c.l.b16 %v1279
    %v2061 = vunpack.c.h.b16 %v1279
    %v2062 = vunpack.c.l.b16 %v1280
    %v2063 = vunpack.c.h.b16 %v1280
    %v2064 = vunpack.c.l.b16 %v1281
    %v2065 = vunpack.c.h.b16 %v1281
    %v2066 = vunpack.c.l.b16 %v1282
    %v2067 = vunpack.c.h.b16 %v1282
    %v2068 = vunpack.c.l.b16 %v1283
    %v2069 = vunpack.c.h.b16 %v1283
    %v2070 = vunpack.c.l.b16 %v1284
    %v2071 = vunpack.c.h.b16 %v1284
    %v2072 = vunpack.c.l.b16 %v1285
    %v2073 = vunpack.c.h.b16 %v1285
    %v2074 = vunpack.c.l.b16 %v1286
    %v2075 = vunpack.c.h.b16 %v1286
    %v2076 = vunpack.c.l.b16 %v1287
    %v2077 = vunpack.c.h.b16 %v1287
    %v2078 = vunpack.c.l.b16 %v1288
    %v2079 = vunpack.c.h.b16 %v1288
    %v2080 = vunpack.c.l.b16 %v1289
    %v2081 = vunpack.c.h.b16 %v1289
    %v2082 = vunpack.c.l.b16 %v1290
    %v2083 = vunpack.c.h.b16 %v1290
    %v2084 = vunpack.c.l.b16 %v1291
    %v2085 = vunpack.c.h.b16 %v1291
    %v2086 = vunpack.c.l.b16 %v1292
    %v2087 = vunpack.c.h.b16 %v1292
    %v2088 = vunpack.c.l.b16 %v1293
    %v2089 = vunpack.c.h.b16 %v1293
    %v2090 = vunpack.c.l.b16 %v1294
    %v2091 = vunpack.c.h.b16 %v1294
    %v2092 = vunpack.c.l.b16 %v1295
    %v2093 = vunpack.c.h.b16 %v1295
    %v2094 = vunpack.c.l.b16 %v1296
    %v2095 = vunpack.c.h.b16 %v1296
    %v2096 = vunpack.c.l.b16 %v1297
    %v2097 = vunpack.c.h.b16 %v1297
    %v2098 = vunpack.c.l.b16 %v1298
    %v2099 = vunpack.c.h.b16 %v1298
    %v2100 = vunpack.c.l.b16 %v1299
    %v2101 = vunpack.c.h.b16 %v1299
    %v2102 = vunpack.c.l.b16 %v1300
    %v2103 = vunpack.c.h.b16 %v1300
    %v2104 = vunpack.c.l.b16 %v1301
    %v2105 = vunpack.c.h.b16 %v1301
    %v2106 = vunpack.c.l.b16 %v1302
    %v2107 = vunpack.c.h.b16 %v1302
    %v2108 = vunpack.c.l.b16 %v1303
    %v2109 = vunpack.c.h.b16 %v1303
    %v2110 = vunpack.c.l.b16 %v1304
    %v2111 = vunpack.c.h.b16 %v1304
    %v2112 = vunpack.c.l.b16 %v1305
    %v2113 = vunpack.c.h.b16 %v1305
    %v2114 = vunpack.c.l.b16 %v1306
    %v2115 = vunpack.c.h.b16 %v1306
    %v2116 = vunpack.c.l.b16 %v1307
    %v2117 = vunpack.c.h.b16 %v1307
    %v2118 = vunpack.c.l.b16 %v1308
    %v2119 = vunpack.c.h.b16 %v1308
    %v2120 = vunpack.c.l.b16 %v1309
    %v2121 = vunpack.c.h.b16 %v1309
    %v2122 = vunpack.c.l.b16 %v1310
    %v2123 = vunpack.c.h.b16 %v1310
    %v2124 = vunpack.c.l.b16 %v1311
    %v2125 = vunpack.c.h.b16 %v1311
    %v2126 = vunpack.c.l.b16 %v1312
    %v2127 = vunpack.c.h.b16 %v1312
    %v2128 = vunpack.c.l.b16 %v1313
    %v2129 = vunpack.c.h.b16 %v1313
    %v2130 = vunpack.c.l.b16 %v1314
    %v2131 = vunpack.c.h.b16 %v1314
    %v2132 = vunpack.c.l.b16 %v1315
    %v2133 = vunpack.c.h.b16 %v1315
    %v2134 = vunpack.c.l.b16 %v1316
    %v2135 = vunpack.c.h.b16 %v1316
    %v2136 = vunpack.c.l.b16 %v1317
    %v2137 = vunpack.c.h.b16 %v1317
    %v2138 = vunpack.c.l.b16 %v1318
    %v2139 = vunpack.c.h.b16 %v1318
    %v2140 = vunpack.c.l.b16 %v1319
    %v2141 = vunpack.c.h.b16 %v1319
    %v2142 = vunpack.c.l.b16 %v1320
    %v2143 = vunpack.c.h.b16 %v1320
    %v2144 = vunpack.c.l.b16 %v1321
    %v2145 = vunpack.c.h.b16 %v1321
    %v2146 = vpack.c.b16 %v2006, %v2002
    %v2147 = vpack.c.b16 %v2007, %v2003
    %v2148 = vpack.c.b16 %v2008, %v2004
    %v2149 = vpack.c.b16 %v2009, %v2005
    %v2150 = vpack.c.b16 %v2014, %v2010
    %v2151 = vpack.c.b16 %v2015, %v2011
    %v2152 = vpack.c.b16 %v2016, %v2012
    %v2153 = vpack.c.b16 %v2017, %v2013
    %v2154 = vpack.c.b16 %v2022, %v2018
    %v2155 = vpack.c.b16 %v2023, %v2019
    %v2156 = vpack.c.b16 %v2024, %v2020
    %v2157 = vpack.c.b16 %v2025, %v2021
    %v2158 = vpack.c.b16 %v2030, %v2026
    %v2159 = vpack.c.b16 %v2031, %v2027
    %v2160 = vpack.c.b16 %v2032, %v2028
    %v2161 = vpack.c.b16 %v2033, %v2029
    %v2162 = vpack.c.b16 %v2038, %v2034
    %v2163 = vpack.c.b16 %v2039, %v2035
    %v2164 = vpack.c.b16 %v2040, %v2036
    %v2165 = vpack.c.b16 %v2041, %v2037
    %v2166 = vpack.c.b16 %v2046, %v2042
    %v2167 = vpack.c.b16 %v2047, %v2043
    %v2168 = vpack.c.b16 %v2048, %v2044
    %v2169 = vpack.c.b16 %v2049, %v2045
    %v2170 = vpack.c.b16 %v2054, %v2050
    %v2171 = vpack.c.b16 %v2055, %v2051
    %v2172 = vpack.c.b16 %v2056, %v2052
    %v2173 = vpack.c.b16 %v2057, %v2053
    %v2174 = vpack.c.b16 %v2062, %v2058
    %v2175 = vpack.c.b16 %v2063, %v2059
    %v2176 = vpack.c.b16 %v2064, %v2060
    %v2177 = vpack.c.b16 %v2065, %v2061
    %v2178 = vpack.c.b16 %v2070, %v2066
    %v2179 = vpack.c.b16 %v2071, %v2067
    %v2180 = vpack.c.b16 %v2072, %v2068
    %v2181 = vpack.c.b16 %v2073, %v2069
    %v2182 = vpack.c.b16 %v2078, %v2074
    %v2183 = vpack.c.b16 %v2079, %v2075
    %v2184 = vpack.c.b16 %v2080, %v2076
    %v2185 = vpack.c.b16 %v2081, %v2077
    %v2186 = vpack.c.b16 %v2086, %v2082
    %v2187 = vpack.c.b16 %v2087, %v2083
    %v2188 = vpack.c.b16 %v2088, %v2084
    %v2189 = vpack.c.b16 %v2089, %v2085
    %v2190 = vpack.c.b16 %v2094, %v2090
    %v2191 = vpack.c.b16 %v2095, %v2091
    %v2192 = vpack.c.b16 %v2096, %v2092
    %v2193 = vpack.c.b16 %v2097, %v2093
    %v2194 = vpack.c.b16 %v2102, %v2098
    %v2195 = vpack.c.b16 %v2103, %v2099
    %v2196 = vpack.c.b16 %v2104, %v2100
    %v2197 = vpack.c.b16 %v2105, %v2101
    %v2198 = vpack.c.b16 %v2110, %v2106
    %v2199 = vpack.c.b16 %v2111, %v2107
    %v2200 = vpack.c.b16 %v2112, %v2108
    %v2201 = vpack.c.b16 %v2113, %v2109
    %v2202 = vpack.c.b16 %v2118, %v2114
    %v2203 = vpack.c.b16 %v2119, %v2115
    %v2204 = vpack.c.b16 %v2120, %v2116
    %v2205 = vpack.c.b16 %v2121, %v2117
    %v2206 = vpack.c.b16 %v2126, %v2122
    %v2207 = vpack.c.b16 %v2127, %v2123
    %v2208 = vpack.c.b16 %v2128, %v2124
    %v2209 = vpack.c.b16 %v2129, %v2125
    %v2210 = vpack.c.b16 %v2134, %v2130
    %v2211 = vpack.c.b16 %v2135, %v2131
    %v2212 = vpack.c.b16 %v2136, %v2132
    %v2213 = vpack.c.b16 %v2137, %v2133
    %v2214 = vpack.c.b16 %v2142, %v2138
    %v2215 = vpack.c.b16 %v2143, %v2139
    %v2216 = vpack.c.b16 %v2144, %v2140
    %v2217 = vpack.c.b16 %v2145, %v2141
    %v2291 = vsel %vm202, %v1249, 0
    %2293 = vmatprep.subr.bf16.mxu0 %v2175
    %2294 = vmatpush1.bf16.msra.mxu0 %v2174
    %2295 = vmatprep.subr.bf16.mxu0 %v2171
    %2296 = vmatpush1.bf16.msra.mxu0 %v2170
    %2297 = vmatprep.subr.bf16.mxu0 %v2167
    %2298 = vmatpush1.bf16.msra.mxu0 %v2166
    %2299 = vmatprep.subr.bf16.mxu0 %v2163
    %2300 = vmatpush1.bf16.msra.mxu0 %v2162
    %2301 = vmatprep.subr.bf16.mxu0 %v2159
    %2302 = vmatpush1.bf16.msra.mxu0 %v2158
    %2303 = vmatprep.subr.bf16.mxu0 %v2155
    %2304 = vmatpush1.bf16.msra.mxu0 %v2154
    %2305 = vmatprep.subr.bf16.mxu0 %v2151
    %2306 = vmatpush1.bf16.msra.mxu0 %v2150
    %2307 = vmatprep.subr.bf16.mxu0 %v2147
    %2308 = vmatpush1.bf16.msra.mxu0 %v2146
    %2309 = vmatprep.subr.bf16.mxu0 %v2207
    %2310 = vmatpush2.bf16.msra.mxu0 %v2206
    %2311 = vmatprep.subr.bf16.mxu0 %v2203
    %2312 = vmatpush2.bf16.msra.mxu0 %v2202
    %2313 = vmatprep.subr.bf16.mxu0 %v2199
    %2314 = vmatpush2.bf16.msra.mxu0 %v2198
    %2315 = vmatprep.subr.bf16.mxu0 %v2195
    %2316 = vmatpush2.bf16.msra.mxu0 %v2194
    %2317 = vmatprep.subr.bf16.mxu0 %v2191
    %2318 = vmatpush2.bf16.msra.mxu0 %v2190
    %2319 = vmatprep.subr.bf16.mxu0 %v2187
    %2320 = vmatpush2.bf16.msra.mxu0 %v2186
    %2321 = vmatprep.subr.bf16.mxu0 %v2183
    %2322 = vmatpush2.bf16.msra.mxu0 %v2182
    %2323 = vmatprep.subr.bf16.mxu0 %v2179
    %2324 = vmatpush2.bf16.msra.mxu0 %v2178
    %2325 = vmatprep.mubr.bf16.mxu0 %v1248
    %2326 = vmatmul.mubr.bf16.gmra.mxu0 %v1247
    %v2327 = vpop.f32.mrf.mxu0
    %v2328 = vadd.f32 %v1842, %v2327
    %v2329 = vpop.f32.mrf.mxu0
    %v2330 = vadd.f32 %v1844, %v2329
    %v2331 = vpop.f32.mrf.mxu0
    %v2332 = vpop.f32.mrf.mxu0
    %2333 = vdwg.mxu0
    %2334 = vmatprep.subr.bf16.mxu0 0
    %2335 = vmatpush1.bf16.msra.mxu0 0
    %2336 = vmatprep.subr.bf16.mxu0 0
    %2337 = vmatpush1.bf16.msra.mxu0 0
    %2338 = vmatprep.subr.bf16.mxu0 0
    %2339 = vmatpush1.bf16.msra.mxu0 0
    %2340 = vmatprep.subr.bf16.mxu0 0
    %2341 = vmatpush1.bf16.msra.mxu0 0
    %2342 = vmatprep.subr.bf16.mxu0 0
    %2343 = vmatpush1.bf16.msra.mxu0 0
    %2344 = vmatprep.subr.bf16.mxu0 0
    %2345 = vmatpush1.bf16.msra.mxu0 0
    %2346 = vmatprep.subr.bf16.mxu0 %v2215
    %2347 = vmatpush1.bf16.msra.mxu0 %v2214
    %2348 = vmatprep.subr.bf16.mxu0 %v2211
    %2349 = vmatpush1.bf16.msra.mxu0 %v2210
    %2350 = vmatprep.subr.bf16.mxu0 0
    %2351 = vmatpush2.bf16.msra.mxu0 0
    %2352 = vmatprep.subr.bf16.mxu0 0
    %2353 = vmatpush2.bf16.msra.mxu0 0
    %2354 = vmatprep.subr.bf16.mxu0 0
    %2355 = vmatpush2.bf16.msra.mxu0 0
    %2356 = vmatprep.subr.bf16.mxu0 0
    %2357 = vmatpush2.bf16.msra.mxu0 0
    %2358 = vmatprep.subr.bf16.mxu0 0
    %2359 = vmatpush2.bf16.msra.mxu0 0
    %2360 = vmatprep.subr.bf16.mxu0 0
    %2361 = vmatpush2.bf16.msra.mxu0 0
    %2362 = vmatprep.subr.bf16.mxu0 0
    %2363 = vmatpush2.bf16.msra.mxu0 0
    %2364 = vmatprep.subr.bf16.mxu0 0
    %2365 = vmatpush2.bf16.msra.mxu0 0
    %2366 = vmatprep.mubr.bf16.mxu0 0
    %2367 = vmatmul.mubr.bf16.gmra.mxu0 %v2291
    %v2368 = vpop.f32.mrf.mxu0
    %v2369 = vadd.f32 %v2328, %v2368
    %v2370 = vpop.f32.mrf.mxu0
    %v2371 = vadd.f32 %v2330, %v2370
    %v2372 = vpop.f32.mrf.mxu0
    %v2373 = vpop.f32.mrf.mxu0
    %2374 = vdwg.mxu0
    %2375 = vmatprep.subr.bf16.mxu0 %v2177
    %2376 = vmatpush1.bf16.msra.mxu0 %v2176
    %2377 = vmatprep.subr.bf16.mxu0 %v2173
    %2378 = vmatpush1.bf16.msra.mxu0 %v2172
    %2379 = vmatprep.subr.bf16.mxu0 %v2169
    %2380 = vmatpush1.bf16.msra.mxu0 %v2168
    %2381 = vmatprep.subr.bf16.mxu0 %v2165
    %2382 = vmatpush1.bf16.msra.mxu0 %v2164
    %2383 = vmatprep.subr.bf16.mxu0 %v2161
    %2384 = vmatpush1.bf16.msra.mxu0 %v2160
    %2385 = vmatprep.subr.bf16.mxu0 %v2157
    %2386 = vmatpush1.bf16.msra.mxu0 %v2156
    %2387 = vmatprep.subr.bf16.mxu0 %v2153
    %2388 = vmatpush1.bf16.msra.mxu0 %v2152
    %2389 = vmatprep.subr.bf16.mxu0 %v2149
    %2390 = vmatpush1.bf16.msra.mxu0 %v2148
    %2391 = vmatprep.subr.bf16.mxu0 %v2209
    %2392 = vmatpush2.bf16.msra.mxu0 %v2208
    %2393 = vmatprep.subr.bf16.mxu0 %v2205
    %2394 = vmatpush2.bf16.msra.mxu0 %v2204
    %2395 = vmatprep.subr.bf16.mxu0 %v2201
    %2396 = vmatpush2.bf16.msra.mxu0 %v2200
    %2397 = vmatprep.subr.bf16.mxu0 %v2197
    %2398 = vmatpush2.bf16.msra.mxu0 %v2196
    %2399 = vmatprep.subr.bf16.mxu0 %v2193
    %2400 = vmatpush2.bf16.msra.mxu0 %v2192
    %2401 = vmatprep.subr.bf16.mxu0 %v2189
    %2402 = vmatpush2.bf16.msra.mxu0 %v2188
    %2403 = vmatprep.subr.bf16.mxu0 %v2185
    %2404 = vmatpush2.bf16.msra.mxu0 %v2184
    %2405 = vmatprep.subr.bf16.mxu0 %v2181
    %2406 = vmatpush2.bf16.msra.mxu0 %v2180
    %2407 = vmatprep.mubr.bf16.mxu0 %v1248
    %2408 = vmatmul.mubr.bf16.gmra.mxu0 %v1247
    %v2409 = vpop.f32.mrf.mxu0
    %v2410 = vadd.f32 %v1924, %v2409
    %v2411 = vpop.f32.mrf.mxu0
    %v2412 = vadd.f32 %v1926, %v2411
    %v2413 = vpop.f32.mrf.mxu0
    %v2414 = vpop.f32.mrf.mxu0
    %2415 = vdwg.mxu0
    %2416 = vmatprep.subr.bf16.mxu0 0
    %2417 = vmatpush1.bf16.msra.mxu0 0
    %2418 = vmatprep.subr.bf16.mxu0 0
    %2419 = vmatpush1.bf16.msra.mxu0 0
    %2420 = vmatprep.subr.bf16.mxu0 0
    %2421 = vmatpush1.bf16.msra.mxu0 0
    %2422 = vmatprep.subr.bf16.mxu0 0
    %2423 = vmatpush1.bf16.msra.mxu0 0
    %2424 = vmatprep.subr.bf16.mxu0 0
    %2425 = vmatpush1.bf16.msra.mxu0 0
    %2426 = vmatprep.subr.bf16.mxu0 0
    %2427 = vmatpush1.bf16.msra.mxu0 0
    %2428 = vmatprep.subr.bf16.mxu0 %v2217
    %2429 = vmatpush1.bf16.msra.mxu0 %v2216
    %2430 = vmatprep.subr.bf16.mxu0 %v2213
    %2431 = vmatpush1.bf16.msra.mxu0 %v2212
    %2432 = vmatprep.subr.bf16.mxu0 0
    %2433 = vmatpush2.bf16.msra.mxu0 0
    %2434 = vmatprep.subr.bf16.mxu0 0
    %2435 = vmatpush2.bf16.msra.mxu0 0
    %2436 = vmatprep.subr.bf16.mxu0 0
    %2437 = vmatpush2.bf16.msra.mxu0 0
    %2438 = vmatprep.subr.bf16.mxu0 0
    %2439 = vmatpush2.bf16.msra.mxu0 0
    %2440 = vmatprep.subr.bf16.mxu0 0
    %2441 = vmatpush2.bf16.msra.mxu0 0
    %2442 = vmatprep.subr.bf16.mxu0 0
    %2443 = vmatpush2.bf16.msra.mxu0 0
    %2444 = vmatprep.subr.bf16.mxu0 0
    %2445 = vmatpush2.bf16.msra.mxu0 0
    %2446 = vmatprep.subr.bf16.mxu0 0
    %2447 = vmatpush2.bf16.msra.mxu0 0
    %2448 = vmatprep.mubr.bf16.mxu0 0
    %2449 = vmatmul.mubr.bf16.gmra.mxu0 %v2291
    %v2450 = vpop.f32.mrf.mxu0
    %v2451 = vadd.f32 %v2410, %v2450
    %v2452 = vpop.f32.mrf.mxu0
    %v2453 = vadd.f32 %v2412, %v2452
    %v2454 = vpop.f32.mrf.mxu0
    %v2455 = vpop.f32.mrf.mxu0
    %2456 = vdwg.mxu0
    %s2457 = scalar_lea.vmem %s5, 1152
    %v2458 = vld [vmem:[%s2457] sm:$0xff]
    %v2459 = vld [vmem:[%s2457 + $0x8] sm:$0xff]
    %v2460 = vld [vmem:[%s2457 + $0x10] sm:$0xff]
    %v2461 = vld [vmem:[%s2457 + $0x18] sm:$0xff]
    %v2462 = vld [vmem:[%s2457 + $0x20] sm:$0xff]
    %v2463 = vld [vmem:[%s2457 + $0x28] sm:$0xff]
    %v2464 = vld [vmem:[%s2457 + $0x30] sm:$0xff]
    %v2465 = vld [vmem:[%s2457 + $0x38] sm:$0xff]
    %v2466 = vld [vmem:[%s2457 + $0x40] sm:$0xff]
    %v2467 = vld [vmem:[%s2457 + $0x48] sm:$0xff]
    %v2468 = vld [vmem:[%s2457 + $0x50] sm:$0xff]
    %v2469 = vld [vmem:[%s2457 + $0x58] sm:$0xff]
    %v2470 = vld [vmem:[%s2457 + $0x60] sm:$0xff]
    %v2471 = vld [vmem:[%s2457 + $0x68] sm:$0xff]
    %v2472 = vld [vmem:[%s2457 + $0x70] sm:$0xff]
    %v2473 = vld [vmem:[%s2457 + $0x78] sm:$0xff]
    %v2474 = vld [vmem:[%s2457 + $0x80] sm:$0xff]
    %v2475 = vld [vmem:[%s2457 + $0x88] sm:$0xff]
    %v2476 = vld [vmem:[%s2457 + $0x90] sm:$0xff]
    %v2477 = vld [vmem:[%s2457 + $0x98] sm:$0xff]
    %v2478 = vld [vmem:[%s2457 + $0xa0] sm:$0xff]
    %v2479 = vld [vmem:[%s2457 + $0xa8] sm:$0xff]
    %v2480 = vld [vmem:[%s2457 + $0xb0] sm:$0xff]
    %v2481 = vld [vmem:[%s2457 + $0xb8] sm:$0xff]
    %v2482 = vld [vmem:[%s2457 + $0xc0] sm:$0xff]
    %v2483 = vld [vmem:[%s2457 + $0xc8] sm:$0xff]
    %v2484 = vld [vmem:[%s2457 + $0xd0] sm:$0xff]
    %v2485 = vld [vmem:[%s2457 + $0xd8] sm:$0xff]
    %v2486 = vld [vmem:[%s2457 + $0xe0] sm:$0xff]
    %v2487 = vld [vmem:[%s2457 + $0xe8] sm:$0xff]
    %v2488 = vld [vmem:[%s2457 + $0xf0] sm:$0xff]
    %v2489 = vld [vmem:[%s2457 + $0xf8] sm:$0xff]
    %v2490 = vld [vmem:[%s2457 + $0x100] sm:$0xff]
    %v2491 = vld [vmem:[%s2457 + $0x108] sm:$0xff]
    %v2492 = vld [vmem:[%s2457 + $0x110] sm:$0xff]
    %v2493 = vld [vmem:[%s2457 + $0x118] sm:$0xff]
    %v2494 = vld [vmem:[%s2457 + $0x120] sm:$0xff]
    %v2495 = vld [vmem:[%s2457 + $0x128] sm:$0xff]
    %v2496 = vld [vmem:[%s2457 + $0x130] sm:$0xff]
    %v2497 = vld [vmem:[%s2457 + $0x138] sm:$0xff]
    %v2498 = vld [vmem:[%s2457 + $0x140] sm:$0xff]
    %v2499 = vld [vmem:[%s2457 + $0x148] sm:$0xff]
    %v2500 = vld [vmem:[%s2457 + $0x150] sm:$0xff]
    %v2501 = vld [vmem:[%s2457 + $0x158] sm:$0xff]
    %v2502 = vld [vmem:[%s2457 + $0x160] sm:$0xff]
    %v2503 = vld [vmem:[%s2457 + $0x168] sm:$0xff]
    %v2504 = vld [vmem:[%s2457 + $0x170] sm:$0xff]
    %v2505 = vld [vmem:[%s2457 + $0x178] sm:$0xff]
    %v2506 = vld [vmem:[%s2457 + $0x180] sm:$0xff]
    %v2507 = vld [vmem:[%s2457 + $0x188] sm:$0xff]
    %v2508 = vld [vmem:[%s2457 + $0x190] sm:$0xff]
    %v2509 = vld [vmem:[%s2457 + $0x198] sm:$0xff]
    %v2510 = vld [vmem:[%s2457 + $0x1a0] sm:$0xff]
    %v2511 = vld [vmem:[%s2457 + $0x1a8] sm:$0xff]
    %v2512 = vld [vmem:[%s2457 + $0x1b0] sm:$0xff]
    %v2513 = vld [vmem:[%s2457 + $0x1b8] sm:$0xff]
    %v2514 = vld [vmem:[%s2457 + $0x1c0] sm:$0xff]
    %v2515 = vld [vmem:[%s2457 + $0x1c8] sm:$0xff]
    %v2516 = vld [vmem:[%s2457 + $0x1d0] sm:$0xff]
    %v2517 = vld [vmem:[%s2457 + $0x1d8] sm:$0xff]
    %v2518 = vld [vmem:[%s2457 + $0x1e0] sm:$0xff]
    %v2519 = vld [vmem:[%s2457 + $0x1e8] sm:$0xff]
    %v2520 = vld [vmem:[%s2457 + $0x1f0] sm:$0xff]
    %v2521 = vld [vmem:[%s2457 + $0x1f8] sm:$0xff]
    %v2522 = vld [vmem:[%s2457 + $0x200] sm:$0xff]
    %v2523 = vld [vmem:[%s2457 + $0x208] sm:$0xff]
    %v2524 = vld [vmem:[%s2457 + $0x210] sm:$0xff]
    %v2525 = vld [vmem:[%s2457 + $0x218] sm:$0xff]
    %v2526 = vld [vmem:[%s2457 + $0x220] sm:$0xff]
    %v2527 = vld [vmem:[%s2457 + $0x228] sm:$0xff]
    %v2528 = vld [vmem:[%s2457 + $0x230] sm:$0xff]
    %v2529 = vld [vmem:[%s2457 + $0x238] sm:$0xff]
    %v2530 = vrot.slane %v1247, 2
    %v2531 = vrot.slane %v1248, 2
    %v2532 = vrot.slane %v1249, 2
    %v2607 = vunpack.c.l.b16 %v2458
    %v2608 = vunpack.c.h.b16 %v2458
    %v2609 = vunpack.c.l.b16 %v2459
    %v2610 = vunpack.c.h.b16 %v2459
    %v2611 = vunpack.c.l.b16 %v2460
    %v2612 = vunpack.c.h.b16 %v2460
    %v2613 = vunpack.c.l.b16 %v2461
    %v2614 = vunpack.c.h.b16 %v2461
    %v2615 = vunpack.c.l.b16 %v2462
    %v2616 = vunpack.c.h.b16 %v2462
    %v2617 = vunpack.c.l.b16 %v2463
    %v2618 = vunpack.c.h.b16 %v2463
    %v2619 = vunpack.c.l.b16 %v2464
    %v2620 = vunpack.c.h.b16 %v2464
    %v2621 = vunpack.c.l.b16 %v2465
    %v2622 = vunpack.c.h.b16 %v2465
    %v2623 = vunpack.c.l.b16 %v2466
    %v2624 = vunpack.c.h.b16 %v2466
    %v2625 = vunpack.c.l.b16 %v2467
    %v2626 = vunpack.c.h.b16 %v2467
    %v2627 = vunpack.c.l.b16 %v2468
    %v2628 = vunpack.c.h.b16 %v2468
    %v2629 = vunpack.c.l.b16 %v2469
    %v2630 = vunpack.c.h.b16 %v2469
    %v2631 = vunpack.c.l.b16 %v2470
    %v2632 = vunpack.c.h.b16 %v2470
    %v2633 = vunpack.c.l.b16 %v2471
    %v2634 = vunpack.c.h.b16 %v2471
    %v2635 = vunpack.c.l.b16 %v2472
    %v2636 = vunpack.c.h.b16 %v2472
    %v2637 = vunpack.c.l.b16 %v2473
    %v2638 = vunpack.c.h.b16 %v2473
    %v2639 = vunpack.c.l.b16 %v2474
    %v2640 = vunpack.c.h.b16 %v2474
    %v2641 = vunpack.c.l.b16 %v2475
    %v2642 = vunpack.c.h.b16 %v2475
    %v2643 = vunpack.c.l.b16 %v2476
    %v2644 = vunpack.c.h.b16 %v2476
    %v2645 = vunpack.c.l.b16 %v2477
    %v2646 = vunpack.c.h.b16 %v2477
    %v2647 = vunpack.c.l.b16 %v2478
    %v2648 = vunpack.c.h.b16 %v2478
    %v2649 = vunpack.c.l.b16 %v2479
    %v2650 = vunpack.c.h.b16 %v2479
    %v2651 = vunpack.c.l.b16 %v2480
    %v2652 = vunpack.c.h.b16 %v2480
    %v2653 = vunpack.c.l.b16 %v2481
    %v2654 = vunpack.c.h.b16 %v2481
    %v2655 = vunpack.c.l.b16 %v2482
    %v2656 = vunpack.c.h.b16 %v2482
    %v2657 = vunpack.c.l.b16 %v2483
    %v2658 = vunpack.c.h.b16 %v2483
    %v2659 = vunpack.c.l.b16 %v2484
    %v2660 = vunpack.c.h.b16 %v2484
    %v2661 = vunpack.c.l.b16 %v2485
    %v2662 = vunpack.c.h.b16 %v2485
    %v2663 = vunpack.c.l.b16 %v2486
    %v2664 = vunpack.c.h.b16 %v2486
    %v2665 = vunpack.c.l.b16 %v2487
    %v2666 = vunpack.c.h.b16 %v2487
    %v2667 = vunpack.c.l.b16 %v2488
    %v2668 = vunpack.c.h.b16 %v2488
    %v2669 = vunpack.c.l.b16 %v2489
    %v2670 = vunpack.c.h.b16 %v2489
    %v2671 = vunpack.c.l.b16 %v2490
    %v2672 = vunpack.c.h.b16 %v2490
    %v2673 = vunpack.c.l.b16 %v2491
    %v2674 = vunpack.c.h.b16 %v2491
    %v2675 = vunpack.c.l.b16 %v2492
    %v2676 = vunpack.c.h.b16 %v2492
    %v2677 = vunpack.c.l.b16 %v2493
    %v2678 = vunpack.c.h.b16 %v2493
    %v2679 = vunpack.c.l.b16 %v2494
    %v2680 = vunpack.c.h.b16 %v2494
    %v2681 = vunpack.c.l.b16 %v2495
    %v2682 = vunpack.c.h.b16 %v2495
    %v2683 = vunpack.c.l.b16 %v2496
    %v2684 = vunpack.c.h.b16 %v2496
    %v2685 = vunpack.c.l.b16 %v2497
    %v2686 = vunpack.c.h.b16 %v2497
    %v2687 = vunpack.c.l.b16 %v2498
    %v2688 = vunpack.c.h.b16 %v2498
    %v2689 = vunpack.c.l.b16 %v2499
    %v2690 = vunpack.c.h.b16 %v2499
    %v2691 = vunpack.c.l.b16 %v2500
    %v2692 = vunpack.c.h.b16 %v2500
    %v2693 = vunpack.c.l.b16 %v2501
    %v2694 = vunpack.c.h.b16 %v2501
    %v2695 = vunpack.c.l.b16 %v2502
    %v2696 = vunpack.c.h.b16 %v2502
    %v2697 = vunpack.c.l.b16 %v2503
    %v2698 = vunpack.c.h.b16 %v2503
    %v2699 = vunpack.c.l.b16 %v2504
    %v2700 = vunpack.c.h.b16 %v2504
    %v2701 = vunpack.c.l.b16 %v2505
    %v2702 = vunpack.c.h.b16 %v2505
    %v2703 = vunpack.c.l.b16 %v2506
    %v2704 = vunpack.c.h.b16 %v2506
    %v2705 = vunpack.c.l.b16 %v2507
    %v2706 = vunpack.c.h.b16 %v2507
    %v2707 = vunpack.c.l.b16 %v2508
    %v2708 = vunpack.c.h.b16 %v2508
    %v2709 = vunpack.c.l.b16 %v2509
    %v2710 = vunpack.c.h.b16 %v2509
    %v2711 = vunpack.c.l.b16 %v2510
    %v2712 = vunpack.c.h.b16 %v2510
    %v2713 = vunpack.c.l.b16 %v2511
    %v2714 = vunpack.c.h.b16 %v2511
    %v2715 = vunpack.c.l.b16 %v2512
    %v2716 = vunpack.c.h.b16 %v2512
    %v2717 = vunpack.c.l.b16 %v2513
    %v2718 = vunpack.c.h.b16 %v2513
    %v2719 = vunpack.c.l.b16 %v2514
    %v2720 = vunpack.c.h.b16 %v2514
    %v2721 = vunpack.c.l.b16 %v2515
    %v2722 = vunpack.c.h.b16 %v2515
    %v2723 = vunpack.c.l.b16 %v2516
    %v2724 = vunpack.c.h.b16 %v2516
    %v2725 = vunpack.c.l.b16 %v2517
    %v2726 = vunpack.c.h.b16 %v2517
    %v2727 = vunpack.c.l.b16 %v2518
    %v2728 = vunpack.c.h.b16 %v2518
    %v2729 = vunpack.c.l.b16 %v2519
    %v2730 = vunpack.c.h.b16 %v2519
    %v2731 = vunpack.c.l.b16 %v2520
    %v2732 = vunpack.c.h.b16 %v2520
    %v2733 = vunpack.c.l.b16 %v2521
    %v2734 = vunpack.c.h.b16 %v2521
    %v2735 = vunpack.c.l.b16 %v2522
    %v2736 = vunpack.c.h.b16 %v2522
    %v2737 = vunpack.c.l.b16 %v2523
    %v2738 = vunpack.c.h.b16 %v2523
    %v2739 = vunpack.c.l.b16 %v2524
    %v2740 = vunpack.c.h.b16 %v2524
    %v2741 = vunpack.c.l.b16 %v2525
    %v2742 = vunpack.c.h.b16 %v2525
    %v2743 = vunpack.c.l.b16 %v2526
    %v2744 = vunpack.c.h.b16 %v2526
    %v2745 = vunpack.c.l.b16 %v2527
    %v2746 = vunpack.c.h.b16 %v2527
    %v2747 = vunpack.c.l.b16 %v2528
    %v2748 = vunpack.c.h.b16 %v2528
    %v2749 = vunpack.c.l.b16 %v2529
    %v2750 = vunpack.c.h.b16 %v2529
    %v2751 = vpack.c.b16 %v2611, %v2607
    %v2752 = vpack.c.b16 %v2612, %v2608
    %v2753 = vpack.c.b16 %v2613, %v2609
    %v2754 = vpack.c.b16 %v2614, %v2610
    %v2755 = vpack.c.b16 %v2619, %v2615
    %v2756 = vpack.c.b16 %v2620, %v2616
    %v2757 = vpack.c.b16 %v2621, %v2617
    %v2758 = vpack.c.b16 %v2622, %v2618
    %v2759 = vpack.c.b16 %v2627, %v2623
    %v2760 = vpack.c.b16 %v2628, %v2624
    %v2761 = vpack.c.b16 %v2629, %v2625
    %v2762 = vpack.c.b16 %v2630, %v2626
    %v2763 = vpack.c.b16 %v2635, %v2631
    %v2764 = vpack.c.b16 %v2636, %v2632
    %v2765 = vpack.c.b16 %v2637, %v2633
    %v2766 = vpack.c.b16 %v2638, %v2634
    %v2767 = vpack.c.b16 %v2643, %v2639
    %v2768 = vpack.c.b16 %v2644, %v2640
    %v2769 = vpack.c.b16 %v2645, %v2641
    %v2770 = vpack.c.b16 %v2646, %v2642
    %v2771 = vpack.c.b16 %v2651, %v2647
    %v2772 = vpack.c.b16 %v2652, %v2648
    %v2773 = vpack.c.b16 %v2653, %v2649
    %v2774 = vpack.c.b16 %v2654, %v2650
    %v2775 = vpack.c.b16 %v2659, %v2655
    %v2776 = vpack.c.b16 %v2660, %v2656
    %v2777 = vpack.c.b16 %v2661, %v2657
    %v2778 = vpack.c.b16 %v2662, %v2658
    %v2779 = vpack.c.b16 %v2667, %v2663
    %v2780 = vpack.c.b16 %v2668, %v2664
    %v2781 = vpack.c.b16 %v2669, %v2665
    %v2782 = vpack.c.b16 %v2670, %v2666
    %v2783 = vpack.c.b16 %v2675, %v2671
    %v2784 = vpack.c.b16 %v2676, %v2672
    %v2785 = vpack.c.b16 %v2677, %v2673
    %v2786 = vpack.c.b16 %v2678, %v2674
    %v2787 = vpack.c.b16 %v2683, %v2679
    %v2788 = vpack.c.b16 %v2684, %v2680
    %v2789 = vpack.c.b16 %v2685, %v2681
    %v2790 = vpack.c.b16 %v2686, %v2682
    %v2791 = vpack.c.b16 %v2691, %v2687
    %v2792 = vpack.c.b16 %v2692, %v2688
    %v2793 = vpack.c.b16 %v2693, %v2689
    %v2794 = vpack.c.b16 %v2694, %v2690
    %v2795 = vpack.c.b16 %v2699, %v2695
    %v2796 = vpack.c.b16 %v2700, %v2696
    %v2797 = vpack.c.b16 %v2701, %v2697
    %v2798 = vpack.c.b16 %v2702, %v2698
    %v2799 = vpack.c.b16 %v2707, %v2703
    %v2800 = vpack.c.b16 %v2708, %v2704
    %v2801 = vpack.c.b16 %v2709, %v2705
    %v2802 = vpack.c.b16 %v2710, %v2706
    %v2803 = vpack.c.b16 %v2715, %v2711
    %v2804 = vpack.c.b16 %v2716, %v2712
    %v2805 = vpack.c.b16 %v2717, %v2713
    %v2806 = vpack.c.b16 %v2718, %v2714
    %v2807 = vpack.c.b16 %v2723, %v2719
    %v2808 = vpack.c.b16 %v2724, %v2720
    %v2809 = vpack.c.b16 %v2725, %v2721
    %v2810 = vpack.c.b16 %v2726, %v2722
    %v2811 = vpack.c.b16 %v2731, %v2727
    %v2812 = vpack.c.b16 %v2732, %v2728
    %v2813 = vpack.c.b16 %v2733, %v2729
    %v2814 = vpack.c.b16 %v2734, %v2730
    %v2815 = vpack.c.b16 %v2739, %v2735
    %v2816 = vpack.c.b16 %v2740, %v2736
    %v2817 = vpack.c.b16 %v2741, %v2737
    %v2818 = vpack.c.b16 %v2742, %v2738
    %v2819 = vpack.c.b16 %v2747, %v2743
    %v2820 = vpack.c.b16 %v2748, %v2744
    %v2821 = vpack.c.b16 %v2749, %v2745
    %v2822 = vpack.c.b16 %v2750, %v2746
    %v2896 = vsel %vm202, %v2532, 0
    %2898 = vmatprep.subr.bf16.mxu0 %v2780
    %2899 = vmatpush1.bf16.msra.mxu0 %v2779
    %2900 = vmatprep.subr.bf16.mxu0 %v2776
    %2901 = vmatpush1.bf16.msra.mxu0 %v2775
    %2902 = vmatprep.subr.bf16.mxu0 %v2772
    %2903 = vmatpush1.bf16.msra.mxu0 %v2771
    %2904 = vmatprep.subr.bf16.mxu0 %v2768
    %2905 = vmatpush1.bf16.msra.mxu0 %v2767
    %2906 = vmatprep.subr.bf16.mxu0 %v2764
    %2907 = vmatpush1.bf16.msra.mxu0 %v2763
    %2908 = vmatprep.subr.bf16.mxu0 %v2760
    %2909 = vmatpush1.bf16.msra.mxu0 %v2759
    %2910 = vmatprep.subr.bf16.mxu0 %v2756
    %2911 = vmatpush1.bf16.msra.mxu0 %v2755
    %2912 = vmatprep.subr.bf16.mxu0 %v2752
    %2913 = vmatpush1.bf16.msra.mxu0 %v2751
    %2914 = vmatprep.subr.bf16.mxu0 %v2812
    %2915 = vmatpush2.bf16.msra.mxu0 %v2811
    %2916 = vmatprep.subr.bf16.mxu0 %v2808
    %2917 = vmatpush2.bf16.msra.mxu0 %v2807
    %2918 = vmatprep.subr.bf16.mxu0 %v2804
    %2919 = vmatpush2.bf16.msra.mxu0 %v2803
    %2920 = vmatprep.subr.bf16.mxu0 %v2800
    %2921 = vmatpush2.bf16.msra.mxu0 %v2799
    %2922 = vmatprep.subr.bf16.mxu0 %v2796
    %2923 = vmatpush2.bf16.msra.mxu0 %v2795
    %2924 = vmatprep.subr.bf16.mxu0 %v2792
    %2925 = vmatpush2.bf16.msra.mxu0 %v2791
    %2926 = vmatprep.subr.bf16.mxu0 %v2788
    %2927 = vmatpush2.bf16.msra.mxu0 %v2787
    %2928 = vmatprep.subr.bf16.mxu0 %v2784
    %2929 = vmatpush2.bf16.msra.mxu0 %v2783
    %2930 = vmatprep.mubr.bf16.mxu0 %v2531
    %2931 = vmatmul.mubr.bf16.gmra.mxu0 %v2530
    %v2932 = vpop.f32.mrf.mxu0
    %v2933 = vadd.f32 0.0, %v2932
    %v2934 = vpop.f32.mrf.mxu0
    %v2935 = vadd.f32 0.0, %v2934
    %v2936 = vpop.f32.mrf.mxu0
    %v2937 = vpop.f32.mrf.mxu0
    %2938 = vdwg.mxu0
    %2939 = vmatprep.subr.bf16.mxu0 0
    %2940 = vmatpush1.bf16.msra.mxu0 0
    %2941 = vmatprep.subr.bf16.mxu0 0
    %2942 = vmatpush1.bf16.msra.mxu0 0
    %2943 = vmatprep.subr.bf16.mxu0 0
    %2944 = vmatpush1.bf16.msra.mxu0 0
    %2945 = vmatprep.subr.bf16.mxu0 0
    %2946 = vmatpush1.bf16.msra.mxu0 0
    %2947 = vmatprep.subr.bf16.mxu0 0
    %2948 = vmatpush1.bf16.msra.mxu0 0
    %2949 = vmatprep.subr.bf16.mxu0 0
    %2950 = vmatpush1.bf16.msra.mxu0 0
    %2951 = vmatprep.subr.bf16.mxu0 %v2820
    %2952 = vmatpush1.bf16.msra.mxu0 %v2819
    %2953 = vmatprep.subr.bf16.mxu0 %v2816
    %2954 = vmatpush1.bf16.msra.mxu0 %v2815
    %2955 = vmatprep.subr.bf16.mxu0 0
    %2956 = vmatpush2.bf16.msra.mxu0 0
    %2957 = vmatprep.subr.bf16.mxu0 0
    %2958 = vmatpush2.bf16.msra.mxu0 0
    %2959 = vmatprep.subr.bf16.mxu0 0
    %2960 = vmatpush2.bf16.msra.mxu0 0
    %2961 = vmatprep.subr.bf16.mxu0 0
    %2962 = vmatpush2.bf16.msra.mxu0 0
    %2963 = vmatprep.subr.bf16.mxu0 0
    %2964 = vmatpush2.bf16.msra.mxu0 0
    %2965 = vmatprep.subr.bf16.mxu0 0
    %2966 = vmatpush2.bf16.msra.mxu0 0
    %2967 = vmatprep.subr.bf16.mxu0 0
    %2968 = vmatpush2.bf16.msra.mxu0 0
    %2969 = vmatprep.subr.bf16.mxu0 0
    %2970 = vmatpush2.bf16.msra.mxu0 0
    %2971 = vmatprep.mubr.bf16.mxu0 0
    %2972 = vmatmul.mubr.bf16.gmra.mxu0 %v2896
    %v2973 = vpop.f32.mrf.mxu0
    %v2974 = vadd.f32 %v2933, %v2973
    %v2975 = vpop.f32.mrf.mxu0
    %v2976 = vadd.f32 %v2935, %v2975
    %v2977 = vpop.f32.mrf.mxu0
    %v2978 = vpop.f32.mrf.mxu0
    %2979 = vdwg.mxu0
    %2980 = vmatprep.subr.bf16.mxu0 %v2782
    %2981 = vmatpush1.bf16.msra.mxu0 %v2781
    %2982 = vmatprep.subr.bf16.mxu0 %v2778
    %2983 = vmatpush1.bf16.msra.mxu0 %v2777
    %2984 = vmatprep.subr.bf16.mxu0 %v2774
    %2985 = vmatpush1.bf16.msra.mxu0 %v2773
    %2986 = vmatprep.subr.bf16.mxu0 %v2770
    %2987 = vmatpush1.bf16.msra.mxu0 %v2769
    %2988 = vmatprep.subr.bf16.mxu0 %v2766
    %2989 = vmatpush1.bf16.msra.mxu0 %v2765
    %2990 = vmatprep.subr.bf16.mxu0 %v2762
    %2991 = vmatpush1.bf16.msra.mxu0 %v2761
    %2992 = vmatprep.subr.bf16.mxu0 %v2758
    %2993 = vmatpush1.bf16.msra.mxu0 %v2757
    %2994 = vmatprep.subr.bf16.mxu0 %v2754
    %2995 = vmatpush1.bf16.msra.mxu0 %v2753
    %2996 = vmatprep.subr.bf16.mxu0 %v2814
    %2997 = vmatpush2.bf16.msra.mxu0 %v2813
    %2998 = vmatprep.subr.bf16.mxu0 %v2810
    %2999 = vmatpush2.bf16.msra.mxu0 %v2809
    %3000 = vmatprep.subr.bf16.mxu0 %v2806
    %3001 = vmatpush2.bf16.msra.mxu0 %v2805
    %3002 = vmatprep.subr.bf16.mxu0 %v2802
    %3003 = vmatpush2.bf16.msra.mxu0 %v2801
    %3004 = vmatprep.subr.bf16.mxu0 %v2798
    %3005 = vmatpush2.bf16.msra.mxu0 %v2797
    %3006 = vmatprep.subr.bf16.mxu0 %v2794
    %3007 = vmatpush2.bf16.msra.mxu0 %v2793
    %3008 = vmatprep.subr.bf16.mxu0 %v2790
    %3009 = vmatpush2.bf16.msra.mxu0 %v2789
    %3010 = vmatprep.subr.bf16.mxu0 %v2786
    %3011 = vmatpush2.bf16.msra.mxu0 %v2785
    %3012 = vmatprep.mubr.bf16.mxu0 %v2531
    %3013 = vmatmul.mubr.bf16.gmra.mxu0 %v2530
    %v3014 = vpop.f32.mrf.mxu0
    %v3015 = vadd.f32 0.0, %v3014
    %v3016 = vpop.f32.mrf.mxu0
    %v3017 = vadd.f32 0.0, %v3016
    %v3018 = vpop.f32.mrf.mxu0
    %v3019 = vpop.f32.mrf.mxu0
    %3020 = vdwg.mxu0
    %3021 = vmatprep.subr.bf16.mxu0 0
    %3022 = vmatpush1.bf16.msra.mxu0 0
    %3023 = vmatprep.subr.bf16.mxu0 0
    %3024 = vmatpush1.bf16.msra.mxu0 0
    %3025 = vmatprep.subr.bf16.mxu0 0
    %3026 = vmatpush1.bf16.msra.mxu0 0
    %3027 = vmatprep.subr.bf16.mxu0 0
    %3028 = vmatpush1.bf16.msra.mxu0 0
    %3029 = vmatprep.subr.bf16.mxu0 0
    %3030 = vmatpush1.bf16.msra.mxu0 0
    %3031 = vmatprep.subr.bf16.mxu0 0
    %3032 = vmatpush1.bf16.msra.mxu0 0
    %3033 = vmatprep.subr.bf16.mxu0 %v2822
    %3034 = vmatpush1.bf16.msra.mxu0 %v2821
    %3035 = vmatprep.subr.bf16.mxu0 %v2818
    %3036 = vmatpush1.bf16.msra.mxu0 %v2817
    %3037 = vmatprep.subr.bf16.mxu0 0
    %3038 = vmatpush2.bf16.msra.mxu0 0
    %3039 = vmatprep.subr.bf16.mxu0 0
    %3040 = vmatpush2.bf16.msra.mxu0 0
    %3041 = vmatprep.subr.bf16.mxu0 0
    %3042 = vmatpush2.bf16.msra.mxu0 0
    %3043 = vmatprep.subr.bf16.mxu0 0
    %3044 = vmatpush2.bf16.msra.mxu0 0
    %3045 = vmatprep.subr.bf16.mxu0 0
    %3046 = vmatpush2.bf16.msra.mxu0 0
    %3047 = vmatprep.subr.bf16.mxu0 0
    %3048 = vmatpush2.bf16.msra.mxu0 0
    %3049 = vmatprep.subr.bf16.mxu0 0
    %3050 = vmatpush2.bf16.msra.mxu0 0
    %3051 = vmatprep.subr.bf16.mxu0 0
    %3052 = vmatpush2.bf16.msra.mxu0 0
    %3053 = vmatprep.mubr.bf16.mxu0 0
    %3054 = vmatmul.mubr.bf16.gmra.mxu0 %v2896
    %v3055 = vpop.f32.mrf.mxu0
    %v3056 = vadd.f32 %v3015, %v3055
    %v3057 = vpop.f32.mrf.mxu0
    %v3058 = vadd.f32 %v3017, %v3057
    %v3059 = vpop.f32.mrf.mxu0
    %v3060 = vpop.f32.mrf.mxu0
    %3061 = vdwg.mxu0
    %v3062 = vadd.f32 %v2369, %v2974
    %v3063 = vadd.f32 %v2371, %v2976
    %v3064 = vadd.f32 %v2451, %v3056
    %v3065 = vadd.f32 %v2453, %v3058
    %s3066 = scalar_lea.vmem %s5, 1728
    %v3067 = vld [vmem:[%s3066] sm:$0xff]
    %v3068 = vld [vmem:[%s3066 + $0x8] sm:$0xff]
    %v3069 = vld [vmem:[%s3066 + $0x10] sm:$0xff]
    %v3070 = vld [vmem:[%s3066 + $0x18] sm:$0xff]
    %v3071 = vld [vmem:[%s3066 + $0x20] sm:$0xff]
    %v3072 = vld [vmem:[%s3066 + $0x28] sm:$0xff]
    %v3073 = vld [vmem:[%s3066 + $0x30] sm:$0xff]
    %v3074 = vld [vmem:[%s3066 + $0x38] sm:$0xff]
    %v3075 = vld [vmem:[%s3066 + $0x40] sm:$0xff]
    %v3076 = vld [vmem:[%s3066 + $0x48] sm:$0xff]
    %v3077 = vld [vmem:[%s3066 + $0x50] sm:$0xff]
    %v3078 = vld [vmem:[%s3066 + $0x58] sm:$0xff]
    %v3079 = vld [vmem:[%s3066 + $0x60] sm:$0xff]
    %v3080 = vld [vmem:[%s3066 + $0x68] sm:$0xff]
    %v3081 = vld [vmem:[%s3066 + $0x70] sm:$0xff]
    %v3082 = vld [vmem:[%s3066 + $0x78] sm:$0xff]
    %v3083 = vld [vmem:[%s3066 + $0x80] sm:$0xff]
    %v3084 = vld [vmem:[%s3066 + $0x88] sm:$0xff]
    %v3085 = vld [vmem:[%s3066 + $0x90] sm:$0xff]
    %v3086 = vld [vmem:[%s3066 + $0x98] sm:$0xff]
    %v3087 = vld [vmem:[%s3066 + $0xa0] sm:$0xff]
    %v3088 = vld [vmem:[%s3066 + $0xa8] sm:$0xff]
    %v3089 = vld [vmem:[%s3066 + $0xb0] sm:$0xff]
    %v3090 = vld [vmem:[%s3066 + $0xb8] sm:$0xff]
    %v3091 = vld [vmem:[%s3066 + $0xc0] sm:$0xff]
    %v3092 = vld [vmem:[%s3066 + $0xc8] sm:$0xff]
    %v3093 = vld [vmem:[%s3066 + $0xd0] sm:$0xff]
    %v3094 = vld [vmem:[%s3066 + $0xd8] sm:$0xff]
    %v3095 = vld [vmem:[%s3066 + $0xe0] sm:$0xff]
    %v3096 = vld [vmem:[%s3066 + $0xe8] sm:$0xff]
    %v3097 = vld [vmem:[%s3066 + $0xf0] sm:$0xff]
    %v3098 = vld [vmem:[%s3066 + $0xf8] sm:$0xff]
    %v3099 = vld [vmem:[%s3066 + $0x100] sm:$0xff]
    %v3100 = vld [vmem:[%s3066 + $0x108] sm:$0xff]
    %v3101 = vld [vmem:[%s3066 + $0x110] sm:$0xff]
    %v3102 = vld [vmem:[%s3066 + $0x118] sm:$0xff]
    %v3103 = vld [vmem:[%s3066 + $0x120] sm:$0xff]
    %v3104 = vld [vmem:[%s3066 + $0x128] sm:$0xff]
    %v3105 = vld [vmem:[%s3066 + $0x130] sm:$0xff]
    %v3106 = vld [vmem:[%s3066 + $0x138] sm:$0xff]
    %v3107 = vld [vmem:[%s3066 + $0x140] sm:$0xff]
    %v3108 = vld [vmem:[%s3066 + $0x148] sm:$0xff]
    %v3109 = vld [vmem:[%s3066 + $0x150] sm:$0xff]
    %v3110 = vld [vmem:[%s3066 + $0x158] sm:$0xff]
    %v3111 = vld [vmem:[%s3066 + $0x160] sm:$0xff]
    %v3112 = vld [vmem:[%s3066 + $0x168] sm:$0xff]
    %v3113 = vld [vmem:[%s3066 + $0x170] sm:$0xff]
    %v3114 = vld [vmem:[%s3066 + $0x178] sm:$0xff]
    %v3115 = vld [vmem:[%s3066 + $0x180] sm:$0xff]
    %v3116 = vld [vmem:[%s3066 + $0x188] sm:$0xff]
    %v3117 = vld [vmem:[%s3066 + $0x190] sm:$0xff]
    %v3118 = vld [vmem:[%s3066 + $0x198] sm:$0xff]
    %v3119 = vld [vmem:[%s3066 + $0x1a0] sm:$0xff]
    %v3120 = vld [vmem:[%s3066 + $0x1a8] sm:$0xff]
    %v3121 = vld [vmem:[%s3066 + $0x1b0] sm:$0xff]
    %v3122 = vld [vmem:[%s3066 + $0x1b8] sm:$0xff]
    %v3123 = vld [vmem:[%s3066 + $0x1c0] sm:$0xff]
    %v3124 = vld [vmem:[%s3066 + $0x1c8] sm:$0xff]
    %v3125 = vld [vmem:[%s3066 + $0x1d0] sm:$0xff]
    %v3126 = vld [vmem:[%s3066 + $0x1d8] sm:$0xff]
    %v3127 = vld [vmem:[%s3066 + $0x1e0] sm:$0xff]
    %v3128 = vld [vmem:[%s3066 + $0x1e8] sm:$0xff]
    %v3129 = vld [vmem:[%s3066 + $0x1f0] sm:$0xff]
    %v3130 = vld [vmem:[%s3066 + $0x1f8] sm:$0xff]
    %v3131 = vld [vmem:[%s3066 + $0x200] sm:$0xff]
    %v3132 = vld [vmem:[%s3066 + $0x208] sm:$0xff]
    %v3133 = vld [vmem:[%s3066 + $0x210] sm:$0xff]
    %v3134 = vld [vmem:[%s3066 + $0x218] sm:$0xff]
    %v3135 = vld [vmem:[%s3066 + $0x220] sm:$0xff]
    %v3136 = vld [vmem:[%s3066 + $0x228] sm:$0xff]
    %v3137 = vld [vmem:[%s3066 + $0x230] sm:$0xff]
    %v3138 = vld [vmem:[%s3066 + $0x238] sm:$0xff]
    %v3139 = vrot.slane %v1247, 3
    %v3140 = vrot.slane %v1248, 3
    %v3141 = vrot.slane %v1249, 3
    %v3216 = vunpack.c.l.b16 %v3067
    %v3217 = vunpack.c.h.b16 %v3067
    %v3218 = vunpack.c.l.b16 %v3068
    %v3219 = vunpack.c.h.b16 %v3068
    %v3220 = vunpack.c.l.b16 %v3069
    %v3221 = vunpack.c.h.b16 %v3069
    %v3222 = vunpack.c.l.b16 %v3070
    %v3223 = vunpack.c.h.b16 %v3070
    %v3224 = vunpack.c.l.b16 %v3071
    %v3225 = vunpack.c.h.b16 %v3071
    %v3226 = vunpack.c.l.b16 %v3072
    %v3227 = vunpack.c.h.b16 %v3072
    %v3228 = vunpack.c.l.b16 %v3073
    %v3229 = vunpack.c.h.b16 %v3073
    %v3230 = vunpack.c.l.b16 %v3074
    %v3231 = vunpack.c.h.b16 %v3074
    %v3232 = vunpack.c.l.b16 %v3075
    %v3233 = vunpack.c.h.b16 %v3075
    %v3234 = vunpack.c.l.b16 %v3076
    %v3235 = vunpack.c.h.b16 %v3076
    %v3236 = vunpack.c.l.b16 %v3077
    %v3237 = vunpack.c.h.b16 %v3077
    %v3238 = vunpack.c.l.b16 %v3078
    %v3239 = vunpack.c.h.b16 %v3078
    %v3240 = vunpack.c.l.b16 %v3079
    %v3241 = vunpack.c.h.b16 %v3079
    %v3242 = vunpack.c.l.b16 %v3080
    %v3243 = vunpack.c.h.b16 %v3080
    %v3244 = vunpack.c.l.b16 %v3081
    %v3245 = vunpack.c.h.b16 %v3081
    %v3246 = vunpack.c.l.b16 %v3082
    %v3247 = vunpack.c.h.b16 %v3082
    %v3248 = vunpack.c.l.b16 %v3083
    %v3249 = vunpack.c.h.b16 %v3083
    %v3250 = vunpack.c.l.b16 %v3084
    %v3251 = vunpack.c.h.b16 %v3084
    %v3252 = vunpack.c.l.b16 %v3085
    %v3253 = vunpack.c.h.b16 %v3085
    %v3254 = vunpack.c.l.b16 %v3086
    %v3255 = vunpack.c.h.b16 %v3086
    %v3256 = vunpack.c.l.b16 %v3087
    %v3257 = vunpack.c.h.b16 %v3087
    %v3258 = vunpack.c.l.b16 %v3088
    %v3259 = vunpack.c.h.b16 %v3088
    %v3260 = vunpack.c.l.b16 %v3089
    %v3261 = vunpack.c.h.b16 %v3089
    %v3262 = vunpack.c.l.b16 %v3090
    %v3263 = vunpack.c.h.b16 %v3090
    %v3264 = vunpack.c.l.b16 %v3091
    %v3265 = vunpack.c.h.b16 %v3091
    %v3266 = vunpack.c.l.b16 %v3092
    %v3267 = vunpack.c.h.b16 %v3092
    %v3268 = vunpack.c.l.b16 %v3093
    %v3269 = vunpack.c.h.b16 %v3093
    %v3270 = vunpack.c.l.b16 %v3094
    %v3271 = vunpack.c.h.b16 %v3094
    %v3272 = vunpack.c.l.b16 %v3095
    %v3273 = vunpack.c.h.b16 %v3095
    %v3274 = vunpack.c.l.b16 %v3096
    %v3275 = vunpack.c.h.b16 %v3096
    %v3276 = vunpack.c.l.b16 %v3097
    %v3277 = vunpack.c.h.b16 %v3097
    %v3278 = vunpack.c.l.b16 %v3098
    %v3279 = vunpack.c.h.b16 %v3098
    %v3280 = vunpack.c.l.b16 %v3099
    %v3281 = vunpack.c.h.b16 %v3099
    %v3282 = vunpack.c.l.b16 %v3100
    %v3283 = vunpack.c.h.b16 %v3100
    %v3284 = vunpack.c.l.b16 %v3101
    %v3285 = vunpack.c.h.b16 %v3101
    %v3286 = vunpack.c.l.b16 %v3102
    %v3287 = vunpack.c.h.b16 %v3102
    %v3288 = vunpack.c.l.b16 %v3103
    %v3289 = vunpack.c.h.b16 %v3103
    %v3290 = vunpack.c.l.b16 %v3104
    %v3291 = vunpack.c.h.b16 %v3104
    %v3292 = vunpack.c.l.b16 %v3105
    %v3293 = vunpack.c.h.b16 %v3105
    %v3294 = vunpack.c.l.b16 %v3106
    %v3295 = vunpack.c.h.b16 %v3106
    %v3296 = vunpack.c.l.b16 %v3107
    %v3297 = vunpack.c.h.b16 %v3107
    %v3298 = vunpack.c.l.b16 %v3108
    %v3299 = vunpack.c.h.b16 %v3108
    %v3300 = vunpack.c.l.b16 %v3109
    %v3301 = vunpack.c.h.b16 %v3109
    %v3302 = vunpack.c.l.b16 %v3110
    %v3303 = vunpack.c.h.b16 %v3110
    %v3304 = vunpack.c.l.b16 %v3111
    %v3305 = vunpack.c.h.b16 %v3111
    %v3306 = vunpack.c.l.b16 %v3112
    %v3307 = vunpack.c.h.b16 %v3112
    %v3308 = vunpack.c.l.b16 %v3113
    %v3309 = vunpack.c.h.b16 %v3113
    %v3310 = vunpack.c.l.b16 %v3114
    %v3311 = vunpack.c.h.b16 %v3114
    %v3312 = vunpack.c.l.b16 %v3115
    %v3313 = vunpack.c.h.b16 %v3115
    %v3314 = vunpack.c.l.b16 %v3116
    %v3315 = vunpack.c.h.b16 %v3116
    %v3316 = vunpack.c.l.b16 %v3117
    %v3317 = vunpack.c.h.b16 %v3117
    %v3318 = vunpack.c.l.b16 %v3118
    %v3319 = vunpack.c.h.b16 %v3118
    %v3320 = vunpack.c.l.b16 %v3119
    %v3321 = vunpack.c.h.b16 %v3119
    %v3322 = vunpack.c.l.b16 %v3120
    %v3323 = vunpack.c.h.b16 %v3120
    %v3324 = vunpack.c.l.b16 %v3121
    %v3325 = vunpack.c.h.b16 %v3121
    %v3326 = vunpack.c.l.b16 %v3122
    %v3327 = vunpack.c.h.b16 %v3122
    %v3328 = vunpack.c.l.b16 %v3123
    %v3329 = vunpack.c.h.b16 %v3123
    %v3330 = vunpack.c.l.b16 %v3124
    %v3331 = vunpack.c.h.b16 %v3124
    %v3332 = vunpack.c.l.b16 %v3125
    %v3333 = vunpack.c.h.b16 %v3125
    %v3334 = vunpack.c.l.b16 %v3126
    %v3335 = vunpack.c.h.b16 %v3126
    %v3336 = vunpack.c.l.b16 %v3127
    %v3337 = vunpack.c.h.b16 %v3127
    %v3338 = vunpack.c.l.b16 %v3128
    %v3339 = vunpack.c.h.b16 %v3128
    %v3340 = vunpack.c.l.b16 %v3129
    %v3341 = vunpack.c.h.b16 %v3129
    %v3342 = vunpack.c.l.b16 %v3130
    %v3343 = vunpack.c.h.b16 %v3130
    %v3344 = vunpack.c.l.b16 %v3131
    %v3345 = vunpack.c.h.b16 %v3131
    %v3346 = vunpack.c.l.b16 %v3132
    %v3347 = vunpack.c.h.b16 %v3132
    %v3348 = vunpack.c.l.b16 %v3133
    %v3349 = vunpack.c.h.b16 %v3133
    %v3350 = vunpack.c.l.b16 %v3134
    %v3351 = vunpack.c.h.b16 %v3134
    %v3352 = vunpack.c.l.b16 %v3135
    %v3353 = vunpack.c.h.b16 %v3135
    %v3354 = vunpack.c.l.b16 %v3136
    %v3355 = vunpack.c.h.b16 %v3136
    %v3356 = vunpack.c.l.b16 %v3137
    %v3357 = vunpack.c.h.b16 %v3137
    %v3358 = vunpack.c.l.b16 %v3138
    %v3359 = vunpack.c.h.b16 %v3138
    %v3360 = vpack.c.b16 %v3220, %v3216
    %v3361 = vpack.c.b16 %v3221, %v3217
    %v3362 = vpack.c.b16 %v3222, %v3218
    %v3363 = vpack.c.b16 %v3223, %v3219
    %v3364 = vpack.c.b16 %v3228, %v3224
    %v3365 = vpack.c.b16 %v3229, %v3225
    %v3366 = vpack.c.b16 %v3230, %v3226
    %v3367 = vpack.c.b16 %v3231, %v3227
    %v3368 = vpack.c.b16 %v3236, %v3232
    %v3369 = vpack.c.b16 %v3237, %v3233
    %v3370 = vpack.c.b16 %v3238, %v3234
    %v3371 = vpack.c.b16 %v3239, %v3235
    %v3372 = vpack.c.b16 %v3244, %v3240
    %v3373 = vpack.c.b16 %v3245, %v3241
    %v3374 = vpack.c.b16 %v3246, %v3242
    %v3375 = vpack.c.b16 %v3247, %v3243
    %v3376 = vpack.c.b16 %v3252, %v3248
    %v3377 = vpack.c.b16 %v3253, %v3249
    %v3378 = vpack.c.b16 %v3254, %v3250
    %v3379 = vpack.c.b16 %v3255, %v3251
    %v3380 = vpack.c.b16 %v3260, %v3256
    %v3381 = vpack.c.b16 %v3261, %v3257
    %v3382 = vpack.c.b16 %v3262, %v3258
    %v3383 = vpack.c.b16 %v3263, %v3259
    %v3384 = vpack.c.b16 %v3268, %v3264
    %v3385 = vpack.c.b16 %v3269, %v3265
    %v3386 = vpack.c.b16 %v3270, %v3266
    %v3387 = vpack.c.b16 %v3271, %v3267
    %v3388 = vpack.c.b16 %v3276, %v3272
    %v3389 = vpack.c.b16 %v3277, %v3273
    %v3390 = vpack.c.b16 %v3278, %v3274
    %v3391 = vpack.c.b16 %v3279, %v3275
    %v3392 = vpack.c.b16 %v3284, %v3280
    %v3393 = vpack.c.b16 %v3285, %v3281
    %v3394 = vpack.c.b16 %v3286, %v3282
    %v3395 = vpack.c.b16 %v3287, %v3283
    %v3396 = vpack.c.b16 %v3292, %v3288
    %v3397 = vpack.c.b16 %v3293, %v3289
    %v3398 = vpack.c.b16 %v3294, %v3290
    %v3399 = vpack.c.b16 %v3295, %v3291
    %v3400 = vpack.c.b16 %v3300, %v3296
    %v3401 = vpack.c.b16 %v3301, %v3297
    %v3402 = vpack.c.b16 %v3302, %v3298
    %v3403 = vpack.c.b16 %v3303, %v3299
    %v3404 = vpack.c.b16 %v3308, %v3304
    %v3405 = vpack.c.b16 %v3309, %v3305
    %v3406 = vpack.c.b16 %v3310, %v3306
    %v3407 = vpack.c.b16 %v3311, %v3307
    %v3408 = vpack.c.b16 %v3316, %v3312
    %v3409 = vpack.c.b16 %v3317, %v3313
    %v3410 = vpack.c.b16 %v3318, %v3314
    %v3411 = vpack.c.b16 %v3319, %v3315
    %v3412 = vpack.c.b16 %v3324, %v3320
    %v3413 = vpack.c.b16 %v3325, %v3321
    %v3414 = vpack.c.b16 %v3326, %v3322
    %v3415 = vpack.c.b16 %v3327, %v3323
    %v3416 = vpack.c.b16 %v3332, %v3328
    %v3417 = vpack.c.b16 %v3333, %v3329
    %v3418 = vpack.c.b16 %v3334, %v3330
    %v3419 = vpack.c.b16 %v3335, %v3331
    %v3420 = vpack.c.b16 %v3340, %v3336
    %v3421 = vpack.c.b16 %v3341, %v3337
    %v3422 = vpack.c.b16 %v3342, %v3338
    %v3423 = vpack.c.b16 %v3343, %v3339
    %v3424 = vpack.c.b16 %v3348, %v3344
    %v3425 = vpack.c.b16 %v3349, %v3345
    %v3426 = vpack.c.b16 %v3350, %v3346
    %v3427 = vpack.c.b16 %v3351, %v3347
    %v3428 = vpack.c.b16 %v3356, %v3352
    %v3429 = vpack.c.b16 %v3357, %v3353
    %v3430 = vpack.c.b16 %v3358, %v3354
    %v3431 = vpack.c.b16 %v3359, %v3355
    %v3505 = vsel %vm202, %v3141, 0
    %3507 = vmatprep.subr.bf16.mxu0 %v3389
    %3508 = vmatpush1.bf16.msra.mxu0 %v3388
    %3509 = vmatprep.subr.bf16.mxu0 %v3385
    %3510 = vmatpush1.bf16.msra.mxu0 %v3384
    %3511 = vmatprep.subr.bf16.mxu0 %v3381
    %3512 = vmatpush1.bf16.msra.mxu0 %v3380
    %3513 = vmatprep.subr.bf16.mxu0 %v3377
    %3514 = vmatpush1.bf16.msra.mxu0 %v3376
    %3515 = vmatprep.subr.bf16.mxu0 %v3373
    %3516 = vmatpush1.bf16.msra.mxu0 %v3372
    %3517 = vmatprep.subr.bf16.mxu0 %v3369
    %3518 = vmatpush1.bf16.msra.mxu0 %v3368
    %3519 = vmatprep.subr.bf16.mxu0 %v3365
    %3520 = vmatpush1.bf16.msra.mxu0 %v3364
    %3521 = vmatprep.subr.bf16.mxu0 %v3361
    %3522 = vmatpush1.bf16.msra.mxu0 %v3360
    %3523 = vmatprep.subr.bf16.mxu0 %v3421
    %3524 = vmatpush2.bf16.msra.mxu0 %v3420
    %3525 = vmatprep.subr.bf16.mxu0 %v3417
    %3526 = vmatpush2.bf16.msra.mxu0 %v3416
    %3527 = vmatprep.subr.bf16.mxu0 %v3413
    %3528 = vmatpush2.bf16.msra.mxu0 %v3412
    %3529 = vmatprep.subr.bf16.mxu0 %v3409
    %3530 = vmatpush2.bf16.msra.mxu0 %v3408
    %3531 = vmatprep.subr.bf16.mxu0 %v3405
    %3532 = vmatpush2.bf16.msra.mxu0 %v3404
    %3533 = vmatprep.subr.bf16.mxu0 %v3401
    %3534 = vmatpush2.bf16.msra.mxu0 %v3400
    %3535 = vmatprep.subr.bf16.mxu0 %v3397
    %3536 = vmatpush2.bf16.msra.mxu0 %v3396
    %3537 = vmatprep.subr.bf16.mxu0 %v3393
    %3538 = vmatpush2.bf16.msra.mxu0 %v3392
    %3539 = vmatprep.mubr.bf16.mxu0 %v3140
    %3540 = vmatmul.mubr.bf16.gmra.mxu0 %v3139
    %v3541 = vpop.f32.mrf.mxu0
    %v3542 = vadd.f32 0.0, %v3541
    %v3543 = vpop.f32.mrf.mxu0
    %v3544 = vadd.f32 0.0, %v3543
    %v3545 = vpop.f32.mrf.mxu0
    %v3546 = vpop.f32.mrf.mxu0
    %3547 = vdwg.mxu0
    %3548 = vmatprep.subr.bf16.mxu0 0
    %3549 = vmatpush1.bf16.msra.mxu0 0
    %3550 = vmatprep.subr.bf16.mxu0 0
    %3551 = vmatpush1.bf16.msra.mxu0 0
    %3552 = vmatprep.subr.bf16.mxu0 0
    %3553 = vmatpush1.bf16.msra.mxu0 0
    %3554 = vmatprep.subr.bf16.mxu0 0
    %3555 = vmatpush1.bf16.msra.mxu0 0
    %3556 = vmatprep.subr.bf16.mxu0 0
    %3557 = vmatpush1.bf16.msra.mxu0 0
    %3558 = vmatprep.subr.bf16.mxu0 0
    %3559 = vmatpush1.bf16.msra.mxu0 0
    %3560 = vmatprep.subr.bf16.mxu0 %v3429
    %3561 = vmatpush1.bf16.msra.mxu0 %v3428
    %3562 = vmatprep.subr.bf16.mxu0 %v3425
    %3563 = vmatpush1.bf16.msra.mxu0 %v3424
    %3564 = vmatprep.subr.bf16.mxu0 0
    %3565 = vmatpush2.bf16.msra.mxu0 0
    %3566 = vmatprep.subr.bf16.mxu0 0
    %3567 = vmatpush2.bf16.msra.mxu0 0
    %3568 = vmatprep.subr.bf16.mxu0 0
    %3569 = vmatpush2.bf16.msra.mxu0 0
    %3570 = vmatprep.subr.bf16.mxu0 0
    %3571 = vmatpush2.bf16.msra.mxu0 0
    %3572 = vmatprep.subr.bf16.mxu0 0
    %3573 = vmatpush2.bf16.msra.mxu0 0
    %3574 = vmatprep.subr.bf16.mxu0 0
    %3575 = vmatpush2.bf16.msra.mxu0 0
    %3576 = vmatprep.subr.bf16.mxu0 0
    %3577 = vmatpush2.bf16.msra.mxu0 0
    %3578 = vmatprep.subr.bf16.mxu0 0
    %3579 = vmatpush2.bf16.msra.mxu0 0
    %3580 = vmatprep.mubr.bf16.mxu0 0
    %3581 = vmatmul.mubr.bf16.gmra.mxu0 %v3505
    %v3582 = vpop.f32.mrf.mxu0
    %v3583 = vadd.f32 %v3542, %v3582
    %v3584 = vpop.f32.mrf.mxu0
    %v3585 = vadd.f32 %v3544, %v3584
    %v3586 = vpop.f32.mrf.mxu0
    %v3587 = vpop.f32.mrf.mxu0
    %3588 = vdwg.mxu0
    %3589 = vmatprep.subr.bf16.mxu0 %v3391
    %3590 = vmatpush1.bf16.msra.mxu0 %v3390
    %3591 = vmatprep.subr.bf16.mxu0 %v3387
    %3592 = vmatpush1.bf16.msra.mxu0 %v3386
    %3593 = vmatprep.subr.bf16.mxu0 %v3383
    %3594 = vmatpush1.bf16.msra.mxu0 %v3382
    %3595 = vmatprep.subr.bf16.mxu0 %v3379
    %3596 = vmatpush1.bf16.msra.mxu0 %v3378
    %3597 = vmatprep.subr.bf16.mxu0 %v3375
    %3598 = vmatpush1.bf16.msra.mxu0 %v3374
    %3599 = vmatprep.subr.bf16.mxu0 %v3371
    %3600 = vmatpush1.bf16.msra.mxu0 %v3370
    %3601 = vmatprep.subr.bf16.mxu0 %v3367
    %3602 = vmatpush1.bf16.msra.mxu0 %v3366
    %3603 = vmatprep.subr.bf16.mxu0 %v3363
    %3604 = vmatpush1.bf16.msra.mxu0 %v3362
    %3605 = vmatprep.subr.bf16.mxu0 %v3423
    %3606 = vmatpush2.bf16.msra.mxu0 %v3422
    %3607 = vmatprep.subr.bf16.mxu0 %v3419
    %3608 = vmatpush2.bf16.msra.mxu0 %v3418
    %3609 = vmatprep.subr.bf16.mxu0 %v3415
    %3610 = vmatpush2.bf16.msra.mxu0 %v3414
    %3611 = vmatprep.subr.bf16.mxu0 %v3411
    %3612 = vmatpush2.bf16.msra.mxu0 %v3410
    %3613 = vmatprep.subr.bf16.mxu0 %v3407
    %3614 = vmatpush2.bf16.msra.mxu0 %v3406
    %3615 = vmatprep.subr.bf16.mxu0 %v3403
    %3616 = vmatpush2.bf16.msra.mxu0 %v3402
    %3617 = vmatprep.subr.bf16.mxu0 %v3399
    %3618 = vmatpush2.bf16.msra.mxu0 %v3398
    %3619 = vmatprep.subr.bf16.mxu0 %v3395
    %3620 = vmatpush2.bf16.msra.mxu0 %v3394
    %3621 = vmatprep.mubr.bf16.mxu0 %v3140
    %3622 = vmatmul.mubr.bf16.gmra.mxu0 %v3139
    %v3623 = vpop.f32.mrf.mxu0
    %v3624 = vadd.f32 0.0, %v3623
    %v3625 = vpop.f32.mrf.mxu0
    %v3626 = vadd.f32 0.0, %v3625
    %v3627 = vpop.f32.mrf.mxu0
    %v3628 = vpop.f32.mrf.mxu0
    %3629 = vdwg.mxu0
    %3630 = vmatprep.subr.bf16.mxu0 0
    %3631 = vmatpush1.bf16.msra.mxu0 0
    %3632 = vmatprep.subr.bf16.mxu0 0
    %3633 = vmatpush1.bf16.msra.mxu0 0
    %3634 = vmatprep.subr.bf16.mxu0 0
    %3635 = vmatpush1.bf16.msra.mxu0 0
    %3636 = vmatprep.subr.bf16.mxu0 0
    %3637 = vmatpush1.bf16.msra.mxu0 0
    %3638 = vmatprep.subr.bf16.mxu0 0
    %3639 = vmatpush1.bf16.msra.mxu0 0
    %3640 = vmatprep.subr.bf16.mxu0 0
    %3641 = vmatpush1.bf16.msra.mxu0 0
    %3642 = vmatprep.subr.bf16.mxu0 %v3431
    %3643 = vmatpush1.bf16.msra.mxu0 %v3430
    %3644 = vmatprep.subr.bf16.mxu0 %v3427
    %3645 = vmatpush1.bf16.msra.mxu0 %v3426
    %3646 = vmatprep.subr.bf16.mxu0 0
    %3647 = vmatpush2.bf16.msra.mxu0 0
    %3648 = vmatprep.subr.bf16.mxu0 0
    %3649 = vmatpush2.bf16.msra.mxu0 0
    %3650 = vmatprep.subr.bf16.mxu0 0
    %3651 = vmatpush2.bf16.msra.mxu0 0
    %3652 = vmatprep.subr.bf16.mxu0 0
    %3653 = vmatpush2.bf16.msra.mxu0 0
    %3654 = vmatprep.subr.bf16.mxu0 0
    %3655 = vmatpush2.bf16.msra.mxu0 0
    %3656 = vmatprep.subr.bf16.mxu0 0
    %3657 = vmatpush2.bf16.msra.mxu0 0
    %3658 = vmatprep.subr.bf16.mxu0 0
    %3659 = vmatpush2.bf16.msra.mxu0 0
    %3660 = vmatprep.subr.bf16.mxu0 0
    %3661 = vmatpush2.bf16.msra.mxu0 0
    %3662 = vmatprep.mubr.bf16.mxu0 0
    %3663 = vmatmul.mubr.bf16.gmra.mxu0 %v3505
    %v3664 = vpop.f32.mrf.mxu0
    %v3665 = vadd.f32 %v3624, %v3664
    %v3666 = vpop.f32.mrf.mxu0
    %v3667 = vadd.f32 %v3626, %v3666
    %v3668 = vpop.f32.mrf.mxu0
    %v3669 = vpop.f32.mrf.mxu0
    %3670 = vdwg.mxu0
    %v3671 = vadd.f32 %v3062, %v3583
    %v3672 = vadd.f32 %v3063, %v3585
    %v3673 = vadd.f32 %v3064, %v3665
    %v3674 = vadd.f32 %v3065, %v3667
    %v3675 = vld [vmem:[%s6] sm:$0xf]
    %v3677 = vlaneseq
    %v3678 = vshrl.u32 %v3677, 7
    %v3679 = vsub.s32 0, %v3678
    %v3680 = vrot.slane %v3675, %v3679
    %v3681 = vlaneseq
    %v3682 = vshrl.u32 %v3681, 7
    %v3683 = vsub.s32 1, %v3682
    %v3684 = vrot.slane %v3675, %v3683
    %v3685 = vlaneseq
    %v3686 = vshrl.u32 %v3685, 7
    %v3687 = vsub.s32 2, %v3686
    %v3688 = vrot.slane %v3675, %v3687
    %v3689 = vlaneseq
    %v3690 = vshrl.u32 %v3689, 7
    %v3691 = vsub.s32 3, %v3690
    %v3692 = vrot.slane %v3675, %v3691
    %v3697 = vadd.f32 %v3671, %v3680
    %v3698 = vadd.f32 %v3672, %v3684
    %v3699 = vadd.f32 %v3673, %v3688
    %v3700 = vadd.f32 %v3674, %v3692
    %v3701 = vmax.f32 %v3697, 0.0
    %v3702 = vmax.f32 %v3698, 0.0
    %v3703 = vmax.f32 %v3699, 0.0
    %v3704 = vmax.f32 %v3700, 0.0
    %v3705 = vpack.c.bf16 %v3701, %v3701
    %v3706 = vpack.c.bf16 %v3702, %v3702
    %v3707 = vpack.c.bf16 %v3703, %v3703
    %v3708 = vpack.c.bf16 %v3704, %v3704
    %v3709 = vld [vmem:[#allocation4] sm:$0xff]
    %v3710 = vld [vmem:[#allocation4 + $0x8] sm:$0xff]
    %v3711 = vld [vmem:[#allocation4 + $0x10] sm:$0xff]
    %v3712 = vld [vmem:[#allocation4 + $0x18] sm:$0xff]
    %v3713 = vld [vmem:[#allocation4 + $0x20] sm:$0xff]
    %v3714 = vld [vmem:[#allocation4 + $0x28] sm:$0xff]
    %v3715 = vld [vmem:[#allocation4 + $0x30] sm:$0xff]
    %v3716 = vld [vmem:[#allocation4 + $0x38] sm:$0xff]
    %v3717 = vld [vmem:[#allocation4 + $0x40] sm:$0xff]
    %v3718 = vld [vmem:[#allocation4 + $0x48] sm:$0xff]
    %v3719 = vld [vmem:[#allocation4 + $0x50] sm:$0xff]
    %v3720 = vld [vmem:[#allocation4 + $0x58] sm:$0xff]
    %v3721 = vld [vmem:[#allocation4 + $0x60] sm:$0xff]
    %v3722 = vld [vmem:[#allocation4 + $0x68] sm:$0xff]
    %v3723 = vld [vmem:[#allocation4 + $0x70] sm:$0xff]
    %v3724 = vld [vmem:[#allocation4 + $0x78] sm:$0xff]
    %v3725 = vld [vmem:[#allocation4 + $0x80] sm:$0xff]
    %v3726 = vld [vmem:[#allocation4 + $0x88] sm:$0xff]
    %v3727 = vld [vmem:[#allocation4 + $0x90] sm:$0xff]
    %v3728 = vld [vmem:[#allocation4 + $0x98] sm:$0xff]
    %v3729 = vld [vmem:[#allocation4 + $0xa0] sm:$0xff]
    %v3730 = vld [vmem:[#allocation4 + $0xa8] sm:$0xff]
    %v3731 = vld [vmem:[#allocation4 + $0xb0] sm:$0xff]
    %v3732 = vld [vmem:[#allocation4 + $0xb8] sm:$0xff]
    %v3733 = vld [vmem:[#allocation4 + $0xc0] sm:$0xff]
    %v3734 = vld [vmem:[#allocation4 + $0xc8] sm:$0xff]
    %v3735 = vld [vmem:[#allocation4 + $0xd0] sm:$0xff]
    %v3736 = vld [vmem:[#allocation4 + $0xd8] sm:$0xff]
    %v3737 = vld [vmem:[#allocation4 + $0xe0] sm:$0xff]
    %v3738 = vld [vmem:[#allocation4 + $0xe8] sm:$0xff]
    %v3739 = vld [vmem:[#allocation4 + $0xf0] sm:$0xff]
    %v3740 = vld [vmem:[#allocation4 + $0xf8] sm:$0xff]
    %v3741 = vld [vmem:[#allocation4 + $0x100] sm:$0xff]
    %v3742 = vld [vmem:[#allocation4 + $0x108] sm:$0xff]
    %v3743 = vld [vmem:[#allocation4 + $0x110] sm:$0xff]
    %v3744 = vld [vmem:[#allocation4 + $0x118] sm:$0xff]
    %v3745 = vld [vmem:[#allocation4 + $0x120] sm:$0xff]
    %v3746 = vld [vmem:[#allocation4 + $0x128] sm:$0xff]
    %v3747 = vld [vmem:[#allocation4 + $0x130] sm:$0xff]
    %v3748 = vld [vmem:[#allocation4 + $0x138] sm:$0xff]
    %v3749 = vld [vmem:[#allocation4 + $0x140] sm:$0xff]
    %v3750 = vld [vmem:[#allocation4 + $0x148] sm:$0xff]
    %v3751 = vld [vmem:[#allocation4 + $0x150] sm:$0xff]
    %v3752 = vld [vmem:[#allocation4 + $0x158] sm:$0xff]
    %v3753 = vld [vmem:[#allocation4 + $0x160] sm:$0xff]
    %v3754 = vld [vmem:[#allocation4 + $0x168] sm:$0xff]
    %v3755 = vld [vmem:[#allocation4 + $0x170] sm:$0xff]
    %v3756 = vld [vmem:[#allocation4 + $0x178] sm:$0xff]
    %v3757 = vld [vmem:[#allocation4 + $0x180] sm:$0xff]
    %v3758 = vld [vmem:[#allocation4 + $0x188] sm:$0xff]
    %v3759 = vld [vmem:[#allocation4 + $0x190] sm:$0xff]
    %v3760 = vld [vmem:[#allocation4 + $0x198] sm:$0xff]
    %v3761 = vld [vmem:[#allocation4 + $0x1a0] sm:$0xff]
    %v3762 = vld [vmem:[#allocation4 + $0x1a8] sm:$0xff]
    %v3763 = vld [vmem:[#allocation4 + $0x1b0] sm:$0xff]
    %v3764 = vld [vmem:[#allocation4 + $0x1b8] sm:$0xff]
    %v3765 = vld [vmem:[#allocation4 + $0x1c0] sm:$0xff]
    %v3766 = vld [vmem:[#allocation4 + $0x1c8] sm:$0xff]
    %v3767 = vld [vmem:[#allocation4 + $0x1d0] sm:$0xff]
    %v3768 = vld [vmem:[#allocation4 + $0x1d8] sm:$0xff]
    %v3769 = vld [vmem:[#allocation4 + $0x1e0] sm:$0xff]
    %v3770 = vld [vmem:[#allocation4 + $0x1e8] sm:$0xff]
    %v3771 = vld [vmem:[#allocation4 + $0x1f0] sm:$0xff]
    %v3772 = vld [vmem:[#allocation4 + $0x1f8] sm:$0xff]
    %v3773 = vld [vmem:[#allocation4 + $0x200] sm:$0xff]
    %v3774 = vld [vmem:[#allocation4 + $0x208] sm:$0xff]
    %v3775 = vld [vmem:[#allocation4 + $0x210] sm:$0xff]
    %v3776 = vld [vmem:[#allocation4 + $0x218] sm:$0xff]
    %v3777 = vld [vmem:[#allocation4 + $0x220] sm:$0xff]
    %v3778 = vld [vmem:[#allocation4 + $0x228] sm:$0xff]
    %v3779 = vld [vmem:[#allocation4 + $0x230] sm:$0xff]
    %v3780 = vld [vmem:[#allocation4 + $0x238] sm:$0xff]
    %v3781 = vld [vmem:[#allocation4 + $0x240] sm:$0xff]
    %v3782 = vld [vmem:[#allocation4 + $0x248] sm:$0xff]
    %v3783 = vld [vmem:[#allocation4 + $0x250] sm:$0xff]
    %v3784 = vld [vmem:[#allocation4 + $0x258] sm:$0xff]
    %v3785 = vld [vmem:[#allocation4 + $0x260] sm:$0xff]
    %v3786 = vld [vmem:[#allocation4 + $0x268] sm:$0xff]
    %v3787 = vld [vmem:[#allocation4 + $0x270] sm:$0xff]
    %v3788 = vld [vmem:[#allocation4 + $0x278] sm:$0xff]
    %v3789 = vld [vmem:[#allocation4 + $0x280] sm:$0xff]
    %v3790 = vld [vmem:[#allocation4 + $0x288] sm:$0xff]
    %v3791 = vld [vmem:[#allocation4 + $0x290] sm:$0xff]
    %v3792 = vld [vmem:[#allocation4 + $0x298] sm:$0xff]
    %v3793 = vld [vmem:[#allocation4 + $0x2a0] sm:$0xff]
    %v3794 = vld [vmem:[#allocation4 + $0x2a8] sm:$0xff]
    %v3795 = vld [vmem:[#allocation4 + $0x2b0] sm:$0xff]
    %v3796 = vld [vmem:[#allocation4 + $0x2b8] sm:$0xff]
    %v3797 = vld [vmem:[#allocation4 + $0x2c0] sm:$0xff]
    %v3798 = vld [vmem:[#allocation4 + $0x2c8] sm:$0xff]
    %v3799 = vld [vmem:[#allocation4 + $0x2d0] sm:$0xff]
    %v3800 = vld [vmem:[#allocation4 + $0x2d8] sm:$0xff]
    %v3801 = vld [vmem:[#allocation4 + $0x2e0] sm:$0xff]
    %v3802 = vld [vmem:[#allocation4 + $0x2e8] sm:$0xff]
    %v3803 = vld [vmem:[#allocation4 + $0x2f0] sm:$0xff]
    %v3804 = vld [vmem:[#allocation4 + $0x2f8] sm:$0xff]
    %v3805 = vld [vmem:[#allocation4 + $0x300] sm:$0xff]
    %v3806 = vld [vmem:[#allocation4 + $0x308] sm:$0xff]
    %v3807 = vld [vmem:[#allocation4 + $0x310] sm:$0xff]
    %v3808 = vld [vmem:[#allocation4 + $0x318] sm:$0xff]
    %v3809 = vld [vmem:[#allocation4 + $0x320] sm:$0xff]
    %v3810 = vld [vmem:[#allocation4 + $0x328] sm:$0xff]
    %v3811 = vld [vmem:[#allocation4 + $0x330] sm:$0xff]
    %v3812 = vld [vmem:[#allocation4 + $0x338] sm:$0xff]
    %v3813 = vld [vmem:[#allocation4 + $0x340] sm:$0xff]
    %v3814 = vld [vmem:[#allocation4 + $0x348] sm:$0xff]
    %v3815 = vld [vmem:[#allocation4 + $0x350] sm:$0xff]
    %v3816 = vld [vmem:[#allocation4 + $0x358] sm:$0xff]
    %v3817 = vld [vmem:[#allocation4 + $0x360] sm:$0xff]
    %v3818 = vld [vmem:[#allocation4 + $0x368] sm:$0xff]
    %v3819 = vld [vmem:[#allocation4 + $0x370] sm:$0xff]
    %v3820 = vld [vmem:[#allocation4 + $0x378] sm:$0xff]
    %v3821 = vld [vmem:[#allocation4 + $0x380] sm:$0xff]
    %v3822 = vld [vmem:[#allocation4 + $0x388] sm:$0xff]
    %v3823 = vld [vmem:[#allocation4 + $0x390] sm:$0xff]
    %v3824 = vld [vmem:[#allocation4 + $0x398] sm:$0xff]
    %v3825 = vld [vmem:[#allocation4 + $0x3a0] sm:$0xff]
    %v3826 = vld [vmem:[#allocation4 + $0x3a8] sm:$0xff]
    %v3827 = vld [vmem:[#allocation4 + $0x3b0] sm:$0xff]
    %v3828 = vld [vmem:[#allocation4 + $0x3b8] sm:$0xff]
    %v3829 = vld [vmem:[#allocation4 + $0x3c0] sm:$0xff]
    %v3830 = vld [vmem:[#allocation4 + $0x3c8] sm:$0xff]
    %v3831 = vld [vmem:[#allocation4 + $0x3d0] sm:$0xff]
    %v3832 = vld [vmem:[#allocation4 + $0x3d8] sm:$0xff]
    %v3833 = vld [vmem:[#allocation4 + $0x3e0] sm:$0xff]
    %v3834 = vld [vmem:[#allocation4 + $0x3e8] sm:$0xff]
    %v3835 = vld [vmem:[#allocation4 + $0x3f0] sm:$0xff]
    %v3836 = vld [vmem:[#allocation4 + $0x3f8] sm:$0xff]
    %v3837 = vld [vmem:[%s8] sm:$0xf]
    %v3839 = vlaneseq
    %v3840 = vshrl.u32 %v3839, 7
    %v3841 = vsub.s32 0, %v3840
    %v3842 = vrot.slane %v3837, %v3841
    %v3843 = vlaneseq
    %v3844 = vshrl.u32 %v3843, 7
    %v3845 = vsub.s32 1, %v3844
    %v3846 = vrot.slane %v3837, %v3845
    %v3847 = vlaneseq
    %v3848 = vshrl.u32 %v3847, 7
    %v3849 = vsub.s32 2, %v3848
    %v3850 = vrot.slane %v3837, %v3849
    %v3851 = vlaneseq
    %v3852 = vshrl.u32 %v3851, 7
    %v3853 = vsub.s32 3, %v3852
    %v3854 = vrot.slane %v3837, %v3853
    %v3987 = vunpack.c.l.b16 %v3709
    %v3988 = vunpack.c.h.b16 %v3709
    %v3989 = vunpack.c.l.b16 %v3710
    %v3990 = vunpack.c.h.b16 %v3710
    %v3991 = vunpack.c.l.b16 %v3711
    %v3992 = vunpack.c.h.b16 %v3711
    %v3993 = vunpack.c.l.b16 %v3712
    %v3994 = vunpack.c.h.b16 %v3712
    %v3995 = vunpack.c.l.b16 %v3713
    %v3996 = vunpack.c.h.b16 %v3713
    %v3997 = vunpack.c.l.b16 %v3714
    %v3998 = vunpack.c.h.b16 %v3714
    %v3999 = vunpack.c.l.b16 %v3715
    %v4000 = vunpack.c.h.b16 %v3715
    %v4001 = vunpack.c.l.b16 %v3716
    %v4002 = vunpack.c.h.b16 %v3716
    %v4003 = vunpack.c.l.b16 %v3717
    %v4004 = vunpack.c.h.b16 %v3717
    %v4005 = vunpack.c.l.b16 %v3718
    %v4006 = vunpack.c.h.b16 %v3718
    %v4007 = vunpack.c.l.b16 %v3719
    %v4008 = vunpack.c.h.b16 %v3719
    %v4009 = vunpack.c.l.b16 %v3720
    %v4010 = vunpack.c.h.b16 %v3720
    %v4011 = vunpack.c.l.b16 %v3721
    %v4012 = vunpack.c.h.b16 %v3721
    %v4013 = vunpack.c.l.b16 %v3722
    %v4014 = vunpack.c.h.b16 %v3722
    %v4015 = vunpack.c.l.b16 %v3723
    %v4016 = vunpack.c.h.b16 %v3723
    %v4017 = vunpack.c.l.b16 %v3724
    %v4018 = vunpack.c.h.b16 %v3724
    %v4019 = vunpack.c.l.b16 %v3725
    %v4020 = vunpack.c.h.b16 %v3725
    %v4021 = vunpack.c.l.b16 %v3726
    %v4022 = vunpack.c.h.b16 %v3726
    %v4023 = vunpack.c.l.b16 %v3727
    %v4024 = vunpack.c.h.b16 %v3727
    %v4025 = vunpack.c.l.b16 %v3728
    %v4026 = vunpack.c.h.b16 %v3728
    %v4027 = vunpack.c.l.b16 %v3729
    %v4028 = vunpack.c.h.b16 %v3729
    %v4029 = vunpack.c.l.b16 %v3730
    %v4030 = vunpack.c.h.b16 %v3730
    %v4031 = vunpack.c.l.b16 %v3731
    %v4032 = vunpack.c.h.b16 %v3731
    %v4033 = vunpack.c.l.b16 %v3732
    %v4034 = vunpack.c.h.b16 %v3732
    %v4035 = vunpack.c.l.b16 %v3733
    %v4036 = vunpack.c.h.b16 %v3733
    %v4037 = vunpack.c.l.b16 %v3734
    %v4038 = vunpack.c.h.b16 %v3734
    %v4039 = vunpack.c.l.b16 %v3735
    %v4040 = vunpack.c.h.b16 %v3735
    %v4041 = vunpack.c.l.b16 %v3736
    %v4042 = vunpack.c.h.b16 %v3736
    %v4043 = vunpack.c.l.b16 %v3737
    %v4044 = vunpack.c.h.b16 %v3737
    %v4045 = vunpack.c.l.b16 %v3738
    %v4046 = vunpack.c.h.b16 %v3738
    %v4047 = vunpack.c.l.b16 %v3739
    %v4048 = vunpack.c.h.b16 %v3739
    %v4049 = vunpack.c.l.b16 %v3740
    %v4050 = vunpack.c.h.b16 %v3740
    %v4051 = vunpack.c.l.b16 %v3741
    %v4052 = vunpack.c.h.b16 %v3741
    %v4053 = vunpack.c.l.b16 %v3742
    %v4054 = vunpack.c.h.b16 %v3742
    %v4055 = vunpack.c.l.b16 %v3743
    %v4056 = vunpack.c.h.b16 %v3743
    %v4057 = vunpack.c.l.b16 %v3744
    %v4058 = vunpack.c.h.b16 %v3744
    %v4059 = vunpack.c.l.b16 %v3745
    %v4060 = vunpack.c.h.b16 %v3745
    %v4061 = vunpack.c.l.b16 %v3746
    %v4062 = vunpack.c.h.b16 %v3746
    %v4063 = vunpack.c.l.b16 %v3747
    %v4064 = vunpack.c.h.b16 %v3747
    %v4065 = vunpack.c.l.b16 %v3748
    %v4066 = vunpack.c.h.b16 %v3748
    %v4067 = vunpack.c.l.b16 %v3749
    %v4068 = vunpack.c.h.b16 %v3749
    %v4069 = vunpack.c.l.b16 %v3750
    %v4070 = vunpack.c.h.b16 %v3750
    %v4071 = vunpack.c.l.b16 %v3751
    %v4072 = vunpack.c.h.b16 %v3751
    %v4073 = vunpack.c.l.b16 %v3752
    %v4074 = vunpack.c.h.b16 %v3752
    %v4075 = vunpack.c.l.b16 %v3753
    %v4076 = vunpack.c.h.b16 %v3753
    %v4077 = vunpack.c.l.b16 %v3754
    %v4078 = vunpack.c.h.b16 %v3754
    %v4079 = vunpack.c.l.b16 %v3755
    %v4080 = vunpack.c.h.b16 %v3755
    %v4081 = vunpack.c.l.b16 %v3756
    %v4082 = vunpack.c.h.b16 %v3756
    %v4083 = vunpack.c.l.b16 %v3757
    %v4084 = vunpack.c.h.b16 %v3757
    %v4085 = vunpack.c.l.b16 %v3758
    %v4086 = vunpack.c.h.b16 %v3758
    %v4087 = vunpack.c.l.b16 %v3759
    %v4088 = vunpack.c.h.b16 %v3759
    %v4089 = vunpack.c.l.b16 %v3760
    %v4090 = vunpack.c.h.b16 %v3760
    %v4091 = vunpack.c.l.b16 %v3761
    %v4092 = vunpack.c.h.b16 %v3761
    %v4093 = vunpack.c.l.b16 %v3762
    %v4094 = vunpack.c.h.b16 %v3762
    %v4095 = vunpack.c.l.b16 %v3763
    %v4096 = vunpack.c.h.b16 %v3763
    %v4097 = vunpack.c.l.b16 %v3764
    %v4098 = vunpack.c.h.b16 %v3764
    %v4099 = vunpack.c.l.b16 %v3765
    %v4100 = vunpack.c.h.b16 %v3765
    %v4101 = vunpack.c.l.b16 %v3766
    %v4102 = vunpack.c.h.b16 %v3766
    %v4103 = vunpack.c.l.b16 %v3767
    %v4104 = vunpack.c.h.b16 %v3767
    %v4105 = vunpack.c.l.b16 %v3768
    %v4106 = vunpack.c.h.b16 %v3768
    %v4107 = vunpack.c.l.b16 %v3769
    %v4108 = vunpack.c.h.b16 %v3769
    %v4109 = vunpack.c.l.b16 %v3770
    %v4110 = vunpack.c.h.b16 %v3770
    %v4111 = vunpack.c.l.b16 %v3771
    %v4112 = vunpack.c.h.b16 %v3771
    %v4113 = vunpack.c.l.b16 %v3772
    %v4114 = vunpack.c.h.b16 %v3772
    %v4115 = vunpack.c.l.b16 %v3773
    %v4116 = vunpack.c.h.b16 %v3773
    %v4117 = vunpack.c.l.b16 %v3774
    %v4118 = vunpack.c.h.b16 %v3774
    %v4119 = vunpack.c.l.b16 %v3775
    %v4120 = vunpack.c.h.b16 %v3775
    %v4121 = vunpack.c.l.b16 %v3776
    %v4122 = vunpack.c.h.b16 %v3776
    %v4123 = vunpack.c.l.b16 %v3777
    %v4124 = vunpack.c.h.b16 %v3777
    %v4125 = vunpack.c.l.b16 %v3778
    %v4126 = vunpack.c.h.b16 %v3778
    %v4127 = vunpack.c.l.b16 %v3779
    %v4128 = vunpack.c.h.b16 %v3779
    %v4129 = vunpack.c.l.b16 %v3780
    %v4130 = vunpack.c.h.b16 %v3780
    %v4131 = vunpack.c.l.b16 %v3781
    %v4132 = vunpack.c.h.b16 %v3781
    %v4133 = vunpack.c.l.b16 %v3782
    %v4134 = vunpack.c.h.b16 %v3782
    %v4135 = vunpack.c.l.b16 %v3783
    %v4136 = vunpack.c.h.b16 %v3783
    %v4137 = vunpack.c.l.b16 %v3784
    %v4138 = vunpack.c.h.b16 %v3784
    %v4139 = vunpack.c.l.b16 %v3785
    %v4140 = vunpack.c.h.b16 %v3785
    %v4141 = vunpack.c.l.b16 %v3786
    %v4142 = vunpack.c.h.b16 %v3786
    %v4143 = vunpack.c.l.b16 %v3787
    %v4144 = vunpack.c.h.b16 %v3787
    %v4145 = vunpack.c.l.b16 %v3788
    %v4146 = vunpack.c.h.b16 %v3788
    %v4147 = vunpack.c.l.b16 %v3789
    %v4148 = vunpack.c.h.b16 %v3789
    %v4149 = vunpack.c.l.b16 %v3790
    %v4150 = vunpack.c.h.b16 %v3790
    %v4151 = vunpack.c.l.b16 %v3791
    %v4152 = vunpack.c.h.b16 %v3791
    %v4153 = vunpack.c.l.b16 %v3792
    %v4154 = vunpack.c.h.b16 %v3792
    %v4155 = vunpack.c.l.b16 %v3793
    %v4156 = vunpack.c.h.b16 %v3793
    %v4157 = vunpack.c.l.b16 %v3794
    %v4158 = vunpack.c.h.b16 %v3794
    %v4159 = vunpack.c.l.b16 %v3795
    %v4160 = vunpack.c.h.b16 %v3795
    %v4161 = vunpack.c.l.b16 %v3796
    %v4162 = vunpack.c.h.b16 %v3796
    %v4163 = vunpack.c.l.b16 %v3797
    %v4164 = vunpack.c.h.b16 %v3797
    %v4165 = vunpack.c.l.b16 %v3798
    %v4166 = vunpack.c.h.b16 %v3798
    %v4167 = vunpack.c.l.b16 %v3799
    %v4168 = vunpack.c.h.b16 %v3799
    %v4169 = vunpack.c.l.b16 %v3800
    %v4170 = vunpack.c.h.b16 %v3800
    %v4171 = vunpack.c.l.b16 %v3801
    %v4172 = vunpack.c.h.b16 %v3801
    %v4173 = vunpack.c.l.b16 %v3802
    %v4174 = vunpack.c.h.b16 %v3802
    %v4175 = vunpack.c.l.b16 %v3803
    %v4176 = vunpack.c.h.b16 %v3803
    %v4177 = vunpack.c.l.b16 %v3804
    %v4178 = vunpack.c.h.b16 %v3804
    %v4179 = vunpack.c.l.b16 %v3805
    %v4180 = vunpack.c.h.b16 %v3805
    %v4181 = vunpack.c.l.b16 %v3806
    %v4182 = vunpack.c.h.b16 %v3806
    %v4183 = vunpack.c.l.b16 %v3807
    %v4184 = vunpack.c.h.b16 %v3807
    %v4185 = vunpack.c.l.b16 %v3808
    %v4186 = vunpack.c.h.b16 %v3808
    %v4187 = vunpack.c.l.b16 %v3809
    %v4188 = vunpack.c.h.b16 %v3809
    %v4189 = vunpack.c.l.b16 %v3810
    %v4190 = vunpack.c.h.b16 %v3810
    %v4191 = vunpack.c.l.b16 %v3811
    %v4192 = vunpack.c.h.b16 %v3811
    %v4193 = vunpack.c.l.b16 %v3812
    %v4194 = vunpack.c.h.b16 %v3812
    %v4195 = vunpack.c.l.b16 %v3813
    %v4196 = vunpack.c.h.b16 %v3813
    %v4197 = vunpack.c.l.b16 %v3814
    %v4198 = vunpack.c.h.b16 %v3814
    %v4199 = vunpack.c.l.b16 %v3815
    %v4200 = vunpack.c.h.b16 %v3815
    %v4201 = vunpack.c.l.b16 %v3816
    %v4202 = vunpack.c.h.b16 %v3816
    %v4203 = vunpack.c.l.b16 %v3817
    %v4204 = vunpack.c.h.b16 %v3817
    %v4205 = vunpack.c.l.b16 %v3818
    %v4206 = vunpack.c.h.b16 %v3818
    %v4207 = vunpack.c.l.b16 %v3819
    %v4208 = vunpack.c.h.b16 %v3819
    %v4209 = vunpack.c.l.b16 %v3820
    %v4210 = vunpack.c.h.b16 %v3820
    %v4211 = vunpack.c.l.b16 %v3821
    %v4212 = vunpack.c.h.b16 %v3821
    %v4213 = vunpack.c.l.b16 %v3822
    %v4214 = vunpack.c.h.b16 %v3822
    %v4215 = vunpack.c.l.b16 %v3823
    %v4216 = vunpack.c.h.b16 %v3823
    %v4217 = vunpack.c.l.b16 %v3824
    %v4218 = vunpack.c.h.b16 %v3824
    %v4219 = vunpack.c.l.b16 %v3825
    %v4220 = vunpack.c.h.b16 %v3825
    %v4221 = vunpack.c.l.b16 %v3826
    %v4222 = vunpack.c.h.b16 %v3826
    %v4223 = vunpack.c.l.b16 %v3827
    %v4224 = vunpack.c.h.b16 %v3827
    %v4225 = vunpack.c.l.b16 %v3828
    %v4226 = vunpack.c.h.b16 %v3828
    %v4227 = vunpack.c.l.b16 %v3829
    %v4228 = vunpack.c.h.b16 %v3829
    %v4229 = vunpack.c.l.b16 %v3830
    %v4230 = vunpack.c.h.b16 %v3830
    %v4231 = vunpack.c.l.b16 %v3831
    %v4232 = vunpack.c.h.b16 %v3831
    %v4233 = vunpack.c.l.b16 %v3832
    %v4234 = vunpack.c.h.b16 %v3832
    %v4235 = vunpack.c.l.b16 %v3833
    %v4236 = vunpack.c.h.b16 %v3833
    %v4237 = vunpack.c.l.b16 %v3834
    %v4238 = vunpack.c.h.b16 %v3834
    %v4239 = vunpack.c.l.b16 %v3835
    %v4240 = vunpack.c.h.b16 %v3835
    %v4241 = vunpack.c.l.b16 %v3836
    %v4242 = vunpack.c.h.b16 %v3836
    %v4243 = vpack.c.b16 %v3991, %v3987
    %v4244 = vpack.c.b16 %v3992, %v3988
    %v4245 = vpack.c.b16 %v3993, %v3989
    %v4246 = vpack.c.b16 %v3994, %v3990
    %v4247 = vpack.c.b16 %v3999, %v3995
    %v4248 = vpack.c.b16 %v4000, %v3996
    %v4249 = vpack.c.b16 %v4001, %v3997
    %v4250 = vpack.c.b16 %v4002, %v3998
    %v4251 = vpack.c.b16 %v4007, %v4003
    %v4252 = vpack.c.b16 %v4008, %v4004
    %v4253 = vpack.c.b16 %v4009, %v4005
    %v4254 = vpack.c.b16 %v4010, %v4006
    %v4255 = vpack.c.b16 %v4015, %v4011
    %v4256 = vpack.c.b16 %v4016, %v4012
    %v4257 = vpack.c.b16 %v4017, %v4013
    %v4258 = vpack.c.b16 %v4018, %v4014
    %v4259 = vpack.c.b16 %v4023, %v4019
    %v4260 = vpack.c.b16 %v4024, %v4020
    %v4261 = vpack.c.b16 %v4025, %v4021
    %v4262 = vpack.c.b16 %v4026, %v4022
    %v4263 = vpack.c.b16 %v4031, %v4027
    %v4264 = vpack.c.b16 %v4032, %v4028
    %v4265 = vpack.c.b16 %v4033, %v4029
    %v4266 = vpack.c.b16 %v4034, %v4030
    %v4267 = vpack.c.b16 %v4039, %v4035
    %v4268 = vpack.c.b16 %v4040, %v4036
    %v4269 = vpack.c.b16 %v4041, %v4037
    %v4270 = vpack.c.b16 %v4042, %v4038
    %v4271 = vpack.c.b16 %v4047, %v4043
    %v4272 = vpack.c.b16 %v4048, %v4044
    %v4273 = vpack.c.b16 %v4049, %v4045
    %v4274 = vpack.c.b16 %v4050, %v4046
    %v4275 = vpack.c.b16 %v4055, %v4051
    %v4276 = vpack.c.b16 %v4056, %v4052
    %v4277 = vpack.c.b16 %v4057, %v4053
    %v4278 = vpack.c.b16 %v4058, %v4054
    %v4279 = vpack.c.b16 %v4063, %v4059
    %v4280 = vpack.c.b16 %v4064, %v4060
    %v4281 = vpack.c.b16 %v4065, %v4061
    %v4282 = vpack.c.b16 %v4066, %v4062
    %v4283 = vpack.c.b16 %v4071, %v4067
    %v4284 = vpack.c.b16 %v4072, %v4068
    %v4285 = vpack.c.b16 %v4073, %v4069
    %v4286 = vpack.c.b16 %v4074, %v4070
    %v4287 = vpack.c.b16 %v4079, %v4075
    %v4288 = vpack.c.b16 %v4080, %v4076
    %v4289 = vpack.c.b16 %v4081, %v4077
    %v4290 = vpack.c.b16 %v4082, %v4078
    %v4291 = vpack.c.b16 %v4087, %v4083
    %v4292 = vpack.c.b16 %v4088, %v4084
    %v4293 = vpack.c.b16 %v4089, %v4085
    %v4294 = vpack.c.b16 %v4090, %v4086
    %v4295 = vpack.c.b16 %v4095, %v4091
    %v4296 = vpack.c.b16 %v4096, %v4092
    %v4297 = vpack.c.b16 %v4097, %v4093
    %v4298 = vpack.c.b16 %v4098, %v4094
    %v4299 = vpack.c.b16 %v4103, %v4099
    %v4300 = vpack.c.b16 %v4104, %v4100
    %v4301 = vpack.c.b16 %v4105, %v4101
    %v4302 = vpack.c.b16 %v4106, %v4102
    %v4303 = vpack.c.b16 %v4111, %v4107
    %v4304 = vpack.c.b16 %v4112, %v4108
    %v4305 = vpack.c.b16 %v4113, %v4109
    %v4306 = vpack.c.b16 %v4114, %v4110
    %v4307 = vpack.c.b16 %v4119, %v4115
    %v4308 = vpack.c.b16 %v4120, %v4116
    %v4309 = vpack.c.b16 %v4121, %v4117
    %v4310 = vpack.c.b16 %v4122, %v4118
    %v4311 = vpack.c.b16 %v4127, %v4123
    %v4312 = vpack.c.b16 %v4128, %v4124
    %v4313 = vpack.c.b16 %v4129, %v4125
    %v4314 = vpack.c.b16 %v4130, %v4126
    %v4315 = vpack.c.b16 %v4135, %v4131
    %v4316 = vpack.c.b16 %v4136, %v4132
    %v4317 = vpack.c.b16 %v4137, %v4133
    %v4318 = vpack.c.b16 %v4138, %v4134
    %v4319 = vpack.c.b16 %v4143, %v4139
    %v4320 = vpack.c.b16 %v4144, %v4140
    %v4321 = vpack.c.b16 %v4145, %v4141
    %v4322 = vpack.c.b16 %v4146, %v4142
    %v4323 = vpack.c.b16 %v4151, %v4147
    %v4324 = vpack.c.b16 %v4152, %v4148
    %v4325 = vpack.c.b16 %v4153, %v4149
    %v4326 = vpack.c.b16 %v4154, %v4150
    %v4327 = vpack.c.b16 %v4159, %v4155
    %v4328 = vpack.c.b16 %v4160, %v4156
    %v4329 = vpack.c.b16 %v4161, %v4157
    %v4330 = vpack.c.b16 %v4162, %v4158
    %v4331 = vpack.c.b16 %v4167, %v4163
    %v4332 = vpack.c.b16 %v4168, %v4164
    %v4333 = vpack.c.b16 %v4169, %v4165
    %v4334 = vpack.c.b16 %v4170, %v4166
    %v4335 = vpack.c.b16 %v4175, %v4171
    %v4336 = vpack.c.b16 %v4176, %v4172
    %v4337 = vpack.c.b16 %v4177, %v4173
    %v4338 = vpack.c.b16 %v4178, %v4174
    %v4339 = vpack.c.b16 %v4183, %v4179
    %v4340 = vpack.c.b16 %v4184, %v4180
    %v4341 = vpack.c.b16 %v4185, %v4181
    %v4342 = vpack.c.b16 %v4186, %v4182
    %v4343 = vpack.c.b16 %v4191, %v4187
    %v4344 = vpack.c.b16 %v4192, %v4188
    %v4345 = vpack.c.b16 %v4193, %v4189
    %v4346 = vpack.c.b16 %v4194, %v4190
    %v4347 = vpack.c.b16 %v4199, %v4195
    %v4348 = vpack.c.b16 %v4200, %v4196
    %v4349 = vpack.c.b16 %v4201, %v4197
    %v4350 = vpack.c.b16 %v4202, %v4198
    %v4351 = vpack.c.b16 %v4207, %v4203
    %v4352 = vpack.c.b16 %v4208, %v4204
    %v4353 = vpack.c.b16 %v4209, %v4205
    %v4354 = vpack.c.b16 %v4210, %v4206
    %v4355 = vpack.c.b16 %v4215, %v4211
    %v4356 = vpack.c.b16 %v4216, %v4212
    %v4357 = vpack.c.b16 %v4217, %v4213
    %v4358 = vpack.c.b16 %v4218, %v4214
    %v4359 = vpack.c.b16 %v4223, %v4219
    %v4360 = vpack.c.b16 %v4224, %v4220
    %v4361 = vpack.c.b16 %v4225, %v4221
    %v4362 = vpack.c.b16 %v4226, %v4222
    %v4363 = vpack.c.b16 %v4231, %v4227
    %v4364 = vpack.c.b16 %v4232, %v4228
    %v4365 = vpack.c.b16 %v4233, %v4229
    %v4366 = vpack.c.b16 %v4234, %v4230
    %v4367 = vpack.c.b16 %v4239, %v4235
    %v4368 = vpack.c.b16 %v4240, %v4236
    %v4369 = vpack.c.b16 %v4241, %v4237
    %v4370 = vpack.c.b16 %v4242, %v4238
    %4499 = vmatprep.subr.bf16.mxu0 %v4272
    %4500 = vmatpush1.bf16.msra.mxu0 %v4271
    %4501 = vmatprep.subr.bf16.mxu0 %v4268
    %4502 = vmatpush1.bf16.msra.mxu0 %v4267
    %4503 = vmatprep.subr.bf16.mxu0 %v4264
    %4504 = vmatpush1.bf16.msra.mxu0 %v4263
    %4505 = vmatprep.subr.bf16.mxu0 %v4260
    %4506 = vmatpush1.bf16.msra.mxu0 %v4259
    %4507 = vmatprep.subr.bf16.mxu0 %v4256
    %4508 = vmatpush1.bf16.msra.mxu0 %v4255
    %4509 = vmatprep.subr.bf16.mxu0 %v4252
    %4510 = vmatpush1.bf16.msra.mxu0 %v4251
    %4511 = vmatprep.subr.bf16.mxu0 %v4248
    %4512 = vmatpush1.bf16.msra.mxu0 %v4247
    %4513 = vmatprep.subr.bf16.mxu0 %v4244
    %4514 = vmatpush1.bf16.msra.mxu0 %v4243
    %4515 = vmatprep.subr.bf16.mxu0 %v4304
    %4516 = vmatpush2.bf16.msra.mxu0 %v4303
    %4517 = vmatprep.subr.bf16.mxu0 %v4300
    %4518 = vmatpush2.bf16.msra.mxu0 %v4299
    %4519 = vmatprep.subr.bf16.mxu0 %v4296
    %4520 = vmatpush2.bf16.msra.mxu0 %v4295
    %4521 = vmatprep.subr.bf16.mxu0 %v4292
    %4522 = vmatpush2.bf16.msra.mxu0 %v4291
    %4523 = vmatprep.subr.bf16.mxu0 %v4288
    %4524 = vmatpush2.bf16.msra.mxu0 %v4287
    %4525 = vmatprep.subr.bf16.mxu0 %v4284
    %4526 = vmatpush2.bf16.msra.mxu0 %v4283
    %4527 = vmatprep.subr.bf16.mxu0 %v4280
    %4528 = vmatpush2.bf16.msra.mxu0 %v4279
    %4529 = vmatprep.subr.bf16.mxu0 %v4276
    %4530 = vmatpush2.bf16.msra.mxu0 %v4275
    %4531 = vmatprep.mubr.bf16.mxu0 %v3706
    %4532 = vmatmul.mubr.bf16.gmra.mxu0 %v3705
    %v4533 = vpop.f32.mrf.mxu0
    %v4534 = vadd.f32 %v3842, %v4533
    %v4535 = vpop.f32.mrf.mxu0
    %v4536 = vadd.f32 %v3846, %v4535
    %v4537 = vpop.f32.mrf.mxu0
    %v4538 = vpop.f32.mrf.mxu0
    %4539 = vdwg.mxu0
    %4540 = vmatprep.subr.bf16.mxu0 %v4336
    %4541 = vmatpush1.bf16.msra.mxu0 %v4335
    %4542 = vmatprep.subr.bf16.mxu0 %v4332
    %4543 = vmatpush1.bf16.msra.mxu0 %v4331
    %4544 = vmatprep.subr.bf16.mxu0 %v4328
    %4545 = vmatpush1.bf16.msra.mxu0 %v4327
    %4546 = vmatprep.subr.bf16.mxu0 %v4324
    %4547 = vmatpush1.bf16.msra.mxu0 %v4323
    %4548 = vmatprep.subr.bf16.mxu0 %v4320
    %4549 = vmatpush1.bf16.msra.mxu0 %v4319
    %4550 = vmatprep.subr.bf16.mxu0 %v4316
    %4551 = vmatpush1.bf16.msra.mxu0 %v4315
    %4552 = vmatprep.subr.bf16.mxu0 %v4312
    %4553 = vmatpush1.bf16.msra.mxu0 %v4311
    %4554 = vmatprep.subr.bf16.mxu0 %v4308
    %4555 = vmatpush1.bf16.msra.mxu0 %v4307
    %4556 = vmatprep.subr.bf16.mxu0 %v4368
    %4557 = vmatpush2.bf16.msra.mxu0 %v4367
    %4558 = vmatprep.subr.bf16.mxu0 %v4364
    %4559 = vmatpush2.bf16.msra.mxu0 %v4363
    %4560 = vmatprep.subr.bf16.mxu0 %v4360
    %4561 = vmatpush2.bf16.msra.mxu0 %v4359
    %4562 = vmatprep.subr.bf16.mxu0 %v4356
    %4563 = vmatpush2.bf16.msra.mxu0 %v4355
    %4564 = vmatprep.subr.bf16.mxu0 %v4352
    %4565 = vmatpush2.bf16.msra.mxu0 %v4351
    %4566 = vmatprep.subr.bf16.mxu0 %v4348
    %4567 = vmatpush2.bf16.msra.mxu0 %v4347
    %4568 = vmatprep.subr.bf16.mxu0 %v4344
    %4569 = vmatpush2.bf16.msra.mxu0 %v4343
    %4570 = vmatprep.subr.bf16.mxu0 %v4340
    %4571 = vmatpush2.bf16.msra.mxu0 %v4339
    %4572 = vmatprep.mubr.bf16.mxu0 %v3708
    %4573 = vmatmul.mubr.bf16.gmra.mxu0 %v3707
    %v4574 = vpop.f32.mrf.mxu0
    %v4575 = vadd.f32 %v4534, %v4574
    %v4576 = vpop.f32.mrf.mxu0
    %v4577 = vadd.f32 %v4536, %v4576
    %v4578 = vpop.f32.mrf.mxu0
    %v4579 = vpop.f32.mrf.mxu0
    %4580 = vdwg.mxu0
    %4581 = vmatprep.subr.bf16.mxu0 %v4274
    %4582 = vmatpush1.bf16.msra.mxu0 %v4273
    %4583 = vmatprep.subr.bf16.mxu0 %v4270
    %4584 = vmatpush1.bf16.msra.mxu0 %v4269
    %4585 = vmatprep.subr.bf16.mxu0 %v4266
    %4586 = vmatpush1.bf16.msra.mxu0 %v4265
    %4587 = vmatprep.subr.bf16.mxu0 %v4262
    %4588 = vmatpush1.bf16.msra.mxu0 %v4261
    %4589 = vmatprep.subr.bf16.mxu0 %v4258
    %4590 = vmatpush1.bf16.msra.mxu0 %v4257
    %4591 = vmatprep.subr.bf16.mxu0 %v4254
    %4592 = vmatpush1.bf16.msra.mxu0 %v4253
    %4593 = vmatprep.subr.bf16.mxu0 %v4250
    %4594 = vmatpush1.bf16.msra.mxu0 %v4249
    %4595 = vmatprep.subr.bf16.mxu0 %v4246
    %4596 = vmatpush1.bf16.msra.mxu0 %v4245
    %4597 = vmatprep.subr.bf16.mxu0 %v4306
    %4598 = vmatpush2.bf16.msra.mxu0 %v4305
    %4599 = vmatprep.subr.bf16.mxu0 %v4302
    %4600 = vmatpush2.bf16.msra.mxu0 %v4301
    %4601 = vmatprep.subr.bf16.mxu0 %v4298
    %4602 = vmatpush2.bf16.msra.mxu0 %v4297
    %4603 = vmatprep.subr.bf16.mxu0 %v4294
    %4604 = vmatpush2.bf16.msra.mxu0 %v4293
    %4605 = vmatprep.subr.bf16.mxu0 %v4290
    %4606 = vmatpush2.bf16.msra.mxu0 %v4289
    %4607 = vmatprep.subr.bf16.mxu0 %v4286
    %4608 = vmatpush2.bf16.msra.mxu0 %v4285
    %4609 = vmatprep.subr.bf16.mxu0 %v4282
    %4610 = vmatpush2.bf16.msra.mxu0 %v4281
    %4611 = vmatprep.subr.bf16.mxu0 %v4278
    %4612 = vmatpush2.bf16.msra.mxu0 %v4277
    %4613 = vmatprep.mubr.bf16.mxu0 %v3706
    %4614 = vmatmul.mubr.bf16.gmra.mxu0 %v3705
    %v4615 = vpop.f32.mrf.mxu0
    %v4616 = vadd.f32 %v3850, %v4615
    %v4617 = vpop.f32.mrf.mxu0
    %v4618 = vadd.f32 %v3854, %v4617
    %v4619 = vpop.f32.mrf.mxu0
    %v4620 = vpop.f32.mrf.mxu0
    %4621 = vdwg.mxu0
    %4622 = vmatprep.subr.bf16.mxu0 %v4338
    %4623 = vmatpush1.bf16.msra.mxu0 %v4337
    %4624 = vmatprep.subr.bf16.mxu0 %v4334
    %4625 = vmatpush1.bf16.msra.mxu0 %v4333
    %4626 = vmatprep.subr.bf16.mxu0 %v4330
    %4627 = vmatpush1.bf16.msra.mxu0 %v4329
    %4628 = vmatprep.subr.bf16.mxu0 %v4326
    %4629 = vmatpush1.bf16.msra.mxu0 %v4325
    %4630 = vmatprep.subr.bf16.mxu0 %v4322
    %4631 = vmatpush1.bf16.msra.mxu0 %v4321
    %4632 = vmatprep.subr.bf16.mxu0 %v4318
    %4633 = vmatpush1.bf16.msra.mxu0 %v4317
    %4634 = vmatprep.subr.bf16.mxu0 %v4314
    %4635 = vmatpush1.bf16.msra.mxu0 %v4313
    %4636 = vmatprep.subr.bf16.mxu0 %v4310
    %4637 = vmatpush1.bf16.msra.mxu0 %v4309
    %4638 = vmatprep.subr.bf16.mxu0 %v4370
    %4639 = vmatpush2.bf16.msra.mxu0 %v4369
    %4640 = vmatprep.subr.bf16.mxu0 %v4366
    %4641 = vmatpush2.bf16.msra.mxu0 %v4365
    %4642 = vmatprep.subr.bf16.mxu0 %v4362
    %4643 = vmatpush2.bf16.msra.mxu0 %v4361
    %4644 = vmatprep.subr.bf16.mxu0 %v4358
    %4645 = vmatpush2.bf16.msra.mxu0 %v4357
    %4646 = vmatprep.subr.bf16.mxu0 %v4354
    %4647 = vmatpush2.bf16.msra.mxu0 %v4353
    %4648 = vmatprep.subr.bf16.mxu0 %v4350
    %4649 = vmatpush2.bf16.msra.mxu0 %v4349
    %4650 = vmatprep.subr.bf16.mxu0 %v4346
    %4651 = vmatpush2.bf16.msra.mxu0 %v4345
    %4652 = vmatprep.subr.bf16.mxu0 %v4342
    %4653 = vmatpush2.bf16.msra.mxu0 %v4341
    %4654 = vmatprep.mubr.bf16.mxu0 %v3708
    %4655 = vmatmul.mubr.bf16.gmra.mxu0 %v3707
    %v4656 = vpop.f32.mrf.mxu0
    %v4657 = vadd.f32 %v4616, %v4656
    %v4658 = vpop.f32.mrf.mxu0
    %v4659 = vadd.f32 %v4618, %v4658
    %v4660 = vpop.f32.mrf.mxu0
    %v4661 = vpop.f32.mrf.mxu0
    %4662 = vdwg.mxu0
    %v4663 = vmax.f32 %v4575, 0.0
    %v4664 = vmax.f32 %v4577, 0.0
    %v4665 = vmax.f32 %v4657, 0.0
    %v4666 = vmax.f32 %v4659, 0.0
    %v4667 = vld [vmem:[%s9] sm:$0xf]
    %v4669 = vlaneseq
    %v4670 = vshrl.u32 %v4669, 7
    %v4671 = vsub.s32 0, %v4670
    %v4672 = vrot.slane %v4667, %v4671
    %v4673 = vlaneseq
    %v4674 = vshrl.u32 %v4673, 7
    %v4675 = vsub.s32 1, %v4674
    %v4676 = vrot.slane %v4667, %v4675
    %v4677 = vlaneseq
    %v4678 = vshrl.u32 %v4677, 7
    %v4679 = vsub.s32 2, %v4678
    %v4680 = vrot.slane %v4667, %v4679
    %v4681 = vlaneseq
    %v4682 = vshrl.u32 %v4681, 7
    %v4683 = vsub.s32 3, %v4682
    %v4684 = vrot.slane %v4667, %v4683
    %v4689 = vmul.f32 %v4663, %v4672
    %v4690 = vmul.f32 %v4664, %v4676
    %v4691 = vmul.f32 %v4665, %v4680
    %v4692 = vmul.f32 %v4666, %v4684
    %v4693 = vsel %vm191, %v4689, 0.0
    %v4694 = vsel %vm191, %v4690, 0.0
    %v4695 = vadd.f32 %v4693, %v4694
    %v4696 = vsel %vm191, %v4691, 0.0
    %v4697 = vadd.f32 %v4695, %v4696
    %v4698 = vsel %vm191, %v4692, 0.0
    %v4699 = vadd.f32 %v4697, %v4698
    %4700 = vadd.xlane.f32.xlu0 %v4699
    %v4701 = vpop.xlane.xlu0 %4700
    %v4702 = vld [vmem:[#allocation3] sm:$0x1]
    %v4704 = vlaneseq
    %v4705 = vshrl.u32 %v4704, 7
    %v4706 = vsub.s32 0, %v4705
    %v4707 = vrot.slane %v4702, %v4706
    %v4709 = vadd.f32 %v4701, %v4707
    %vm4710 = vcmask 1024
    %4711 = vst.msk [vmem:[%s11] sm:$0x3] %vm4710, %v4709
    // Predicated region
    $region50: #{critic_forward.1} parent=1 // pred_check
      _
    $region51: #{critic_forward.1} parent=1 // pred_check_branch
      %4713 = sbr.rel (0) target = $region53
    $region52: #{critic_forward.1} parent=1 // pred_region
      _
    $region53: #{critic_forward.1} parent=1 // pred_fallthru
      _
    // Predicated region
    $region54: #{critic_forward.1} parent=1 // pred_check
      _
    $region55: #{critic_forward.1} parent=1 // pred_check_branch
      %4715 = sbr.rel (0) target = $region57
    $region56: #{critic_forward.1} parent=1 // pred_region
      _
    $region57: #{critic_forward.1} parent=1 // pred_fallthru
      _
    %4716 = vsyncpa [#allocation5], 1

</llo_original>
